<compile_context>
chip_gen: v7x
topology: tpu7x:2x2x1
jax: 0.10.0
libtpu: 0.0.40
codegen_flags: <defaults>
</compile_context>

<pallas_src>
import math

import jax
import jax.numpy as jnp
from jax.experimental import pallas as pl
from jax.experimental.pallas import tpu as pltpu

F0 = 1024   # base_model output 1000 -> padded to 1024
F1 = 256    # Layer1 out (already lane aligned)
F2 = 128    # Layer2 out 64 -> 128
F4 = 128    # folded Layer3@Layer4 out 2 -> 128 (lane-dense, unmasked stores)

MAX_M_TILE = 256          # matched to the 256x256 MXUs on v6e/v7x
MAX_ROWS_PER_CALL = 2048  # keeps the full-chunk f32 accumulator <= 8 MiB VMEM


def _round_up(x, m):
    return (x + m - 1) // m * m


def _pick_tk(dp):
    """Largest K tile (2048/1024/512) that divides the padded d_in."""
    for tk in (2048, 1024, 512):
        if dp % tk == 0:
            return tk
    return 512  # dp is always a multiple of 512 by construction


def _head_kernel(x_ref, wb_ref, bb_ref, w1_ref, b1_ref, w2_ref, b2_ref,
                 w34_ref, b34_ref, out_ref, acc_ref):
    # Grid = (nk, nm): K is the OUTER axis, so the wb block index only depends
    # on k and each wb tile is DMA'd from HBM exactly once per call.
    k = pl.program_id(0)
    m = pl.program_id(1)

    # Streaming base matmul: cast the f32 x tile to bf16 in-kernel (removes the
    # separate wrapper-side cast pass over x), accumulate in f32.
    prod = jnp.dot(x_ref[...].astype(jnp.bfloat16), wb_ref[...],
                   preferred_element_type=jnp.float32)

    @pl.when(k == 0)
    def _first():
        acc_ref[m] = prod

    @pl.when(k > 0)
    def _accumulate():
        acc_ref[m] += prod

    @pl.when(k == pl.num_programs(0) - 1)
    def _epilogue():
        # ReLU(base_model(x)); the small head layers stay in f32 to match the
        # PyTorch module's precision (no bf16 round-trips on activations).
        f = jnp.maximum(acc_ref[m] + bb_ref[...], 0.0)
        h1 = jnp.dot(f, w1_ref[...],
                     preferred_element_type=jnp.float32) + b1_ref[...]
        h1 = jnp.maximum(h1, 0.0)
        h2 = jnp.dot(h1, w2_ref[...],
                     preferred_element_type=jnp.float32) + b2_ref[...]
        h2 = jnp.maximum(h2, 0.0)
        # Layer3 and Layer4 pre-folded (no ReLU between them): one matmul.
        out = jnp.dot(h2, w34_ref[...],
                      preferred_element_type=jnp.float32) + b34_ref[...]
        out_ref[...] = out.astype(out_ref.dtype)


def _head_call(x, padded, tm, tk):
    rows, dp = x.shape
    nm = rows // tm
    nk = dp // tk

    wb, bb = padded["wb"], padded["bb"]
    w1, b1 = padded["w1"], padded["b1"]
    w2, b2 = padded["w2"], padded["b2"]
    w34, b34 = padded["w34"], padded["b34"]

    def const(shape):  # resident across the whole grid
        return pl.BlockSpec(shape, lambda k, m: (0, 0))

    flops = 2 * rows * (dp * F0 + F0 * F1 + F1 * F2 + F2 * F4)
    bytes_accessed = int(
        x.size * x.dtype.itemsize                        # x read once
        + sum(int(a.size) * jnp.dtype(a.dtype).itemsize  # wb read once (K outer)
              for a in (wb, bb, w1, b1, w2, b2, w34, b34))
        + rows * F4 * 4)

    # VMEM footprint: double-buffered x / wb streams, double-buffered resident
    # small weights + biases, the f32 accumulator and the output buffer.
    vmem_bytes = (2 * tm * tk * 4
                  + 2 * tk * F0 * 2
                  + 2 * 4 * (F0 * F1 + F1 * F2 + F2 * F4 + F0 + F1 + F2 + F4)
                  + nm * tm * F0 * 4
                  + 2 * tm * F4 * 4)
    vmem_limit = int(min(vmem_bytes + (4 << 20), 48 << 20))  # fits v5e/v6e/v7x

    return pl.pallas_call(
        _head_kernel,
        out_shape=jax.ShapeDtypeStruct((rows, F4), jnp.float32),
        grid=(nk, nm),  # K outer -> wb streamed from HBM exactly once per call
        in_specs=[
            pl.BlockSpec((tm, tk), lambda k, m: (m, k)),   # x tiles (f32)
            pl.BlockSpec((tk, F0), lambda k, m: (k, 0)),   # wb tiles (bf16)
            const((1, F0)),                                # bb
            const((F0, F1)), const((1, F1)),               # Layer1
            const((F1, F2)), const((1, F2)),               # Layer2
            const((F2, F4)), const((1, F4)),               # folded Layer3+4
        ],
        out_specs=pl.BlockSpec((tm, F4), lambda k, m: (m, 0)),
        scratch_shapes=[pltpu.VMEM((nm, tm, F0), jnp.float32)],
        compiler_params=pltpu.CompilerParams(
            # TODO(synk): on v7x, column-splitting wb across the two
            # TensorCores would engage megacore without duplicating the wb
            # stream; single-core "arbitrary" iteration is used here.
            dimension_semantics=("arbitrary", "arbitrary"),
            vmem_limit_bytes=vmem_limit,
        ),
        cost_estimate=pl.CostEstimate(flops=flops, transcendentals=0,
                                      bytes_accessed=bytes_accessed),
    )(x, wb, bb, w1, b1, w2, b2, w34, b34)


@jax.jit
def light_angles_head(x_nchw, padded):
    """Fused forward pass. x_nchw: (B, C, H, W) float32; padded: prepared params."""
    B = x_nchw.shape[0]
    d_in = math.prod(x_nchw.shape[1:])
    dp = padded["wb"].shape[0]
    tk = _pick_tk(dp)

    # Batch padding: >= 16 rows (clean sublane packing), M tile of 256 rows for
    # large batches (matched to the 256-wide MXUs; also fine on v5e).
    bp = _round_up(B, 16)
    if bp > MAX_M_TILE:
        bp = _round_up(B, MAX_M_TILE)
        tm = MAX_M_TILE
    else:
        tm = bp

    # x stays f32 in HBM; the kernel casts each tile to bf16. reshape is free;
    # pad only when the shapes actually need it.
    x = x_nchw.reshape(B, d_in)
    if bp != B or dp != d_in:
        x = jnp.pad(x, ((0, bp - B), (0, dp - d_in)))

    # Chunk very large batches so the per-call f32 accumulator stays small.
    outs = []
    for r0 in range(0, bp, MAX_ROWS_PER_CALL):
        rows = min(MAX_ROWS_PER_CALL, bp - r0)
        outs.append(_head_call(x[r0:r0 + rows], padded, tm, tk))
    out = outs[0] if len(outs) == 1 else jnp.concatenate(outs, axis=0)
    return out[:B, :2]


def init_params(key, d_in):
    """Deterministic synthetic parameters at true sizes, stored as (in, out)."""
    ks = jax.random.split(key, 10)

    def lin(kw, kb, fan_in, fan_out):
        s = 1.0 / jnp.sqrt(jnp.float32(fan_in))
        w = jax.random.uniform(kw, (fan_in, fan_out), jnp.float32, -s, s)
        b = jax.random.uniform(kb, (fan_out,), jnp.float32, -s, s)
        return w, b

    wb, bb = lin(ks[0], ks[1], d_in, 1000)   # synthetic base_model Linear
    w1, b1 = lin(ks[2], ks[3], 1000, 256)
    w2, b2 = lin(ks[4], ks[5], 256, 64)
    w3, b3 = lin(ks[6], ks[7], 64, 64)
    w4, b4 = lin(ks[8], ks[9], 64, 2)
    return dict(wb=wb, bb=bb, w1=w1, b1=b1, w2=w2, b2=b2,
                w3=w3, b3=b3, w4=w4, b4=b4)


def prepare_params(params, d_in):
    """One-time pad to lane/sublane-aligned shapes; wb -> bf16, head stays f32."""
    dp = _round_up(d_in, 512)

    def padw(w, rows, cols, dtype):
        return jnp.pad(w, ((0, rows - w.shape[0]),
                           (0, cols - w.shape[1]))).astype(dtype)

    def padb(b, cols):
        return jnp.pad(b, (0, cols - b.shape[0])).reshape(1, cols).astype(jnp.float32)

    # Pre-fold Layer3 + Layer4 (no ReLU between them) into one (64 -> 2) layer.
    w34 = params["w3"] @ params["w4"]
    b34 = params["b3"] @ params["w4"] + params["b4"]

    return dict(
        wb=padw(params["wb"], dp, F0, jnp.bfloat16),   # dominant HBM stream
        bb=padb(params["bb"], F0),
        w1=padw(params["w1"], F0, F1, jnp.float32),
        b1=padb(params["b1"], F1),
        w2=padw(params["w2"], F1, F2, jnp.float32),
        b2=padb(params["b2"], F2),
        w34=padw(w34, F2, F4, jnp.float32),
        b34=padb(b34, F4),
    )


def _reference(x_nchw, params):
    """f32 reference; the base matmul uses the same bf16-rounded operands."""
    relu = lambda a: jnp.maximum(a, 0.0)
    as_bf = lambda a: a.astype(jnp.bfloat16).astype(jnp.float32)
    B = x_nchw.shape[0]
    x = x_nchw.reshape(B, -1)
    h = relu(as_bf(x) @ as_bf(params["wb"]) + params["bb"])
    h = relu(h @ params["w1"] + params["b1"])
    h = relu(h @ params["w2"] + params["b2"])
    h = h @ params["w3"] + params["b3"]
    return h @ params["w4"] + params["b4"]


if __name__ == "__main__":
    B, C, H, W = 2, 4, 16, 16
    d_in = C * H * W

    key = jax.random.PRNGKey(0)
    kx, kp = jax.random.split(key)
    x = jax.random.normal(kx, (B, C, H, W), jnp.float32)

    params = init_params(kp, d_in)
    padded = prepare_params(params, d_in)

    out = jax.block_until_ready(light_angles_head(x, padded))

    ref = _reference(x, params)
    assert out.shape == (B, 2)
    err = float(jnp.max(jnp.abs(out - ref)))
    assert jnp.allclose(out, ref, atol=5e-2, rtol=5e-2), err

    print("KERNEL_OK")
</pallas_src>

<mosaic_0001>
module attributes {stable_mosaic.version = 11 : i64} {
  func.func @_head_kernel(%arg0: i32, %arg1: i32, %arg2: memref<16x1024xf32, #tpu.memory_space<vmem>>, %arg3: memref<1024x1024xbf16, #tpu.memory_space<vmem>>, %arg4: memref<1x1024xf32, #tpu.memory_space<vmem>>, %arg5: memref<1024x256xf32, #tpu.memory_space<vmem>>, %arg6: memref<1x256xf32, #tpu.memory_space<vmem>>, %arg7: memref<256x128xf32, #tpu.memory_space<vmem>>, %arg8: memref<1x128xf32, #tpu.memory_space<vmem>>, %arg9: memref<128x128xf32, #tpu.memory_space<vmem>>, %arg10: memref<1x128xf32, #tpu.memory_space<vmem>>, %arg11: memref<16x128xf32, #tpu.memory_space<vmem>>, %arg12: memref<1x16x1024xf32, #tpu.memory_space<vmem>>) attributes {dimension_semantics = [#tpu.dimension_semantics<arbitrary>, #tpu.dimension_semantics<arbitrary>], iteration_bounds = array<i64: 1, 1>, scalar_prefetch = 0 : i64, scratch_operands = 1 : i64, tpu.core_type = #tpu.core_type<tc>, window_params = [{transform_indices = @transform_0, window_bounds = array<i64: 16, 1024>}, {transform_indices = @transform_1, window_bounds = array<i64: 1024, 1024>}, {pipeline_mode = #tpu.pipeline_mode<synchronous>, transform_indices = @transform_2, window_bounds = array<i64: 1, 1024>}, {pipeline_mode = #tpu.pipeline_mode<synchronous>, transform_indices = @transform_3, window_bounds = array<i64: 1024, 256>}, {pipeline_mode = #tpu.pipeline_mode<synchronous>, transform_indices = @transform_4, window_bounds = array<i64: 1, 256>}, {pipeline_mode = #tpu.pipeline_mode<synchronous>, transform_indices = @transform_5, window_bounds = array<i64: 256, 128>}, {pipeline_mode = #tpu.pipeline_mode<synchronous>, transform_indices = @transform_6, window_bounds = array<i64: 1, 128>}, {pipeline_mode = #tpu.pipeline_mode<synchronous>, transform_indices = @transform_7, window_bounds = array<i64: 128, 128>}, {pipeline_mode = #tpu.pipeline_mode<synchronous>, transform_indices = @transform_8, window_bounds = array<i64: 1, 128>}, {transform_indices = @transform_9, window_bounds = array<i64: 16, 128>}]} {
    %c0 = arith.constant 0 : index
    %c0_0 = arith.constant 0 : index
    %0 = vector.load %arg2[%c0, %c0_0] : memref<16x1024xf32, #tpu.memory_space<vmem>>, vector<16x1024xf32>
    %1 = arith.truncf %0 : vector<16x1024xf32> to vector<16x1024xbf16>
    %c0_1 = arith.constant 0 : index
    %c0_2 = arith.constant 0 : index
    %2 = vector.load %arg3[%c0_1, %c0_2] : memref<1024x1024xbf16, #tpu.memory_space<vmem>>, vector<1024x1024xbf16>
    %cst = arith.constant dense<0.000000e+00> : vector<16x1024xf32>
    %3 = tpu.matmul %1, %2, %cst {dimension_numbers = #tpu.dot_dimension_numbers<[1], [0], [0], [1], [0, 0, 1, 1], [], []>} : vector<16x1024xbf16>, vector<1024x1024xbf16>, vector<16x1024xf32> -> vector<16x1024xf32>
    %c0_i32 = arith.constant 0 : i32
    %4 = arith.cmpi eq, %arg0, %c0_i32 : i32
    %5 = arith.extui %4 : i1 to i32
    %c0_i32_3 = arith.constant 0 : i32
    %6 = arith.cmpi ne, %5, %c0_i32_3 : i32
    scf.if %6 {
      %13 = arith.index_cast %arg1 : i32 to index
      %c0_8 = arith.constant 0 : index
      %c0_9 = arith.constant 0 : index
      %14 = vector.load %arg12[%13, %c0_8, %c0_9] : memref<1x16x1024xf32, #tpu.memory_space<vmem>>, vector<1x16x1024xf32>
      %15 = vector.shape_cast %14 : vector<1x16x1024xf32> to vector<16x1024xf32>
      %16 = vector.shape_cast %3 : vector<16x1024xf32> to vector<1x16x1024xf32>
      tpu.vector_store %arg12[%13, %c0_8, %c0_9], %16 {strides = array<i32>} : memref<1x16x1024xf32, #tpu.memory_space<vmem>>, vector<1x16x1024xf32>,
    } else {
    }
    %c0_i32_4 = arith.constant 0 : i32
    %7 = arith.cmpi sgt, %arg0, %c0_i32_4 : i32
    %8 = arith.extui %7 : i1 to i32
    %c0_i32_5 = arith.constant 0 : i32
    %9 = arith.cmpi ne, %8, %c0_i32_5 : i32
    scf.if %9 {
      %13 = arith.index_cast %arg1 : i32 to index
      %c0_8 = arith.constant 0 : index
      %c0_9 = arith.constant 0 : index
      %14 = vector.load %arg12[%13, %c0_8, %c0_9] : memref<1x16x1024xf32, #tpu.memory_space<vmem>>, vector<1x16x1024xf32>
      %15 = vector.shape_cast %14 : vector<1x16x1024xf32> to vector<16x1024xf32>
      %16 = arith.addf %15, %3 : vector<16x1024xf32>
      %17 = arith.index_cast %arg1 : i32 to index
      %c0_10 = arith.constant 0 : index
      %c0_11 = arith.constant 0 : index
      %18 = vector.load %arg12[%17, %c0_10, %c0_11] : memref<1x16x1024xf32, #tpu.memory_space<vmem>>, vector<1x16x1024xf32>
      %19 = vector.shape_cast %18 : vector<1x16x1024xf32> to vector<16x1024xf32>
      %20 = vector.shape_cast %16 : vector<16x1024xf32> to vector<1x16x1024xf32>
      tpu.vector_store %arg12[%17, %c0_10, %c0_11], %20 {strides = array<i32>} : memref<1x16x1024xf32, #tpu.memory_space<vmem>>, vector<1x16x1024xf32>,
    } else {
    }
    %c0_i32_6 = arith.constant 0 : i32
    %10 = arith.cmpi eq, %arg0, %c0_i32_6 : i32
    %11 = arith.extui %10 : i1 to i32
    %c0_i32_7 = arith.constant 0 : i32
    %12 = arith.cmpi ne, %11, %c0_i32_7 : i32
    scf.if %12 {
      %13 = arith.index_cast %arg1 : i32 to index
      %c0_8 = arith.constant 0 : index
      %c0_9 = arith.constant 0 : index
      %14 = vector.load %arg12[%13, %c0_8, %c0_9] : memref<1x16x1024xf32, #tpu.memory_space<vmem>>, vector<1x16x1024xf32>
      %15 = vector.shape_cast %14 : vector<1x16x1024xf32> to vector<16x1024xf32>
      %c0_10 = arith.constant 0 : index
      %c0_11 = arith.constant 0 : index
      %16 = vector.load %arg4[%c0_10, %c0_11] : memref<1x1024xf32, #tpu.memory_space<vmem>>, vector<1x1024xf32>
      %17 = vector.broadcast %16 : vector<1x1024xf32> to vector<16x1024xf32>
      %18 = arith.addf %15, %17 : vector<16x1024xf32>
      %cst_12 = arith.constant 0.000000e+00 : f32
      %19 = vector.broadcast %cst_12 : f32 to vector<16x1024xf32>
      %20 = arith.maximumf %18, %19 : vector<16x1024xf32>
      %c0_13 = arith.constant 0 : index
      %c0_14 = arith.constant 0 : index
      %21 = vector.load %arg5[%c0_13, %c0_14] : memref<1024x256xf32, #tpu.memory_space<vmem>>, vector<1024x256xf32>
      %cst_15 = arith.constant dense<0.000000e+00> : vector<16x256xf32>
      %22 = tpu.matmul %20, %21, %cst_15 {dimension_numbers = #tpu.dot_dimension_numbers<[1], [0], [0], [1], [0, 0, 1, 1], [], []>} : vector<16x1024xf32>, vector<1024x256xf32>, vector<16x256xf32> -> vector<16x256xf32>
      %c0_16 = arith.constant 0 : index
      %c0_17 = arith.constant 0 : index
      %23 = vector.load %arg6[%c0_16, %c0_17] : memref<1x256xf32, #tpu.memory_space<vmem>>, vector<1x256xf32>
      %24 = vector.broadcast %23 : vector<1x256xf32> to vector<16x256xf32>
      %25 = arith.addf %22, %24 : vector<16x256xf32>
      %cst_18 = arith.constant 0.000000e+00 : f32
      %26 = vector.broadcast %cst_18 : f32 to vector<16x256xf32>
      %27 = arith.maximumf %25, %26 : vector<16x256xf32>
      %c0_19 = arith.constant 0 : index
      %c0_20 = arith.constant 0 : index
      %28 = vector.load %arg7[%c0_19, %c0_20] : memref<256x128xf32, #tpu.memory_space<vmem>>, vector<256x128xf32>
      %cst_21 = arith.constant dense<0.000000e+00> : vector<16x128xf32>
      %29 = tpu.matmul %27, %28, %cst_21 {dimension_numbers = #tpu.dot_dimension_numbers<[1], [0], [0], [1], [0, 0, 1, 1], [], []>} : vector<16x256xf32>, vector<256x128xf32>, vector<16x128xf32> -> vector<16x128xf32>
      %c0_22 = arith.constant 0 : index
      %c0_23 = arith.constant 0 : index
      %30 = vector.load %arg8[%c0_22, %c0_23] : memref<1x128xf32, #tpu.memory_space<vmem>>, vector<1x128xf32>
      %31 = vector.broadcast %30 : vector<1x128xf32> to vector<16x128xf32>
      %32 = arith.addf %29, %31 : vector<16x128xf32>
      %cst_24 = arith.constant 0.000000e+00 : f32
      %33 = vector.broadcast %cst_24 : f32 to vector<16x128xf32>
      %34 = arith.maximumf %32, %33 : vector<16x128xf32>
      %c0_25 = arith.constant 0 : index
      %c0_26 = arith.constant 0 : index
      %35 = vector.load %arg9[%c0_25, %c0_26] : memref<128x128xf32, #tpu.memory_space<vmem>>, vector<128x128xf32>
      %cst_27 = arith.constant dense<0.000000e+00> : vector<16x128xf32>
      %36 = tpu.matmul %34, %35, %cst_27 {dimension_numbers = #tpu.dot_dimension_numbers<[1], [0], [0], [1], [0, 0, 1, 1], [], []>} : vector<16x128xf32>, vector<128x128xf32>, vector<16x128xf32> -> vector<16x128xf32>
      %c0_28 = arith.constant 0 : index
      %c0_29 = arith.constant 0 : index
      %37 = vector.load %arg10[%c0_28, %c0_29] : memref<1x128xf32, #tpu.memory_space<vmem>>, vector<1x128xf32>
      %38 = vector.broadcast %37 : vector<1x128xf32> to vector<16x128xf32>
      %39 = arith.addf %36, %38 : vector<16x128xf32>
      %c0_30 = arith.constant 0 : index
      %c0_31 = arith.constant 0 : index
      %40 = vector.load %arg11[%c0_30, %c0_31] : memref<16x128xf32, #tpu.memory_space<vmem>>, vector<16x128xf32>
      tpu.vector_store %arg11[%c0_30, %c0_31], %39 {strides = array<i32>} : memref<16x128xf32, #tpu.memory_space<vmem>>, vector<16x128xf32>,
    } else {
    }
    return
  }
  func.func @transform_0(%arg0: i32, %arg1: i32) -> (i32, i32) {
    %c0_i32 = arith.constant 0 : i32
    return %arg1, %arg0 : i32, i32
  }
  func.func @transform_1(%arg0: i32, %arg1: i32) -> (i32, i32) {
    %c0_i32 = arith.constant 0 : i32
    %c0_i32_0 = arith.constant 0 : i32
    return %arg0, %c0_i32 : i32, i32
  }
  func.func @transform_2(%arg0: i32, %arg1: i32) -> (i32, i32) {
    %c0_i32 = arith.constant 0 : i32
    %c0_i32_0 = arith.constant 0 : i32
    %c0_i32_1 = arith.constant 0 : i32
    return %c0_i32, %c0_i32_0 : i32, i32
  }
  func.func @transform_3(%arg0: i32, %arg1: i32) -> (i32, i32) {
    %c0_i32 = arith.constant 0 : i32
    %c0_i32_0 = arith.constant 0 : i32
    %c0_i32_1 = arith.constant 0 : i32
    return %c0_i32, %c0_i32_0 : i32, i32
  }
  func.func @transform_4(%arg0: i32, %arg1: i32) -> (i32, i32) {
    %c0_i32 = arith.constant 0 : i32
    %c0_i32_0 = arith.constant 0 : i32
    %c0_i32_1 = arith.constant 0 : i32
    return %c0_i32, %c0_i32_0 : i32, i32
  }
  func.func @transform_5(%arg0: i32, %arg1: i32) -> (i32, i32) {
    %c0_i32 = arith.constant 0 : i32
    %c0_i32_0 = arith.constant 0 : i32
    %c0_i32_1 = arith.constant 0 : i32
    return %c0_i32, %c0_i32_0 : i32, i32
  }
  func.func @transform_6(%arg0: i32, %arg1: i32) -> (i32, i32) {
    %c0_i32 = arith.constant 0 : i32
    %c0_i32_0 = arith.constant 0 : i32
    %c0_i32_1 = arith.constant 0 : i32
    return %c0_i32, %c0_i32_0 : i32, i32
  }
  func.func @transform_7(%arg0: i32, %arg1: i32) -> (i32, i32) {
    %c0_i32 = arith.constant 0 : i32
    %c0_i32_0 = arith.constant 0 : i32
    %c0_i32_1 = arith.constant 0 : i32
    return %c0_i32, %c0_i32_0 : i32, i32
  }
  func.func @transform_8(%arg0: i32, %arg1: i32) -> (i32, i32) {
    %c0_i32 = arith.constant 0 : i32
    %c0_i32_0 = arith.constant 0 : i32
    %c0_i32_1 = arith.constant 0 : i32
    return %c0_i32, %c0_i32_0 : i32, i32
  }
  func.func @transform_9(%arg0: i32, %arg1: i32) -> (i32, i32) {
    %c0_i32 = arith.constant 0 : i32
    %c0_i32_0 = arith.constant 0 : i32
    return %arg1, %c0_i32 : i32, i32
  }
}

</mosaic_0001>

<llo_original>
// kernel: light_angles_head.1
$region0: #{light_angles_head.1}
  #allocation0 [shape = 'u32[]', space=smem, size = 0x4, offset = 0x4, fixed_abs, tag = 'smem constant byte address 0x4 - core index']
  #allocation1 [shape = 'u32[144,128]{1,0:T(1,128)}', space=vmem, size = 0x12000, scoped, tag = 'internal scratch']
  #allocation2 [shape = 'f32[1,16,1024]{2,1,0:T(8,128)}', space=vmem, size = 0x10000, scoped, tag = 'scratch operand']
  %s0 = inlined_call_operand.vmem [shape: f32[16,1024], index: 0, kind: input, shape index: {}]
  %s1 = inlined_call_operand.hbm [shape: bf16[1024,1024], index: 1, kind: input, shape index: {}]
  %s2 = inlined_call_operand.hbm [shape: f32[1,1024], index: 2, kind: input, shape index: {}]
  %s3 = inlined_call_operand.hbm [shape: f32[1024,256], index: 3, kind: input, shape index: {}]
  %s4 = inlined_call_operand.hbm [shape: f32[1,256], index: 4, kind: input, shape index: {}]
  %s5 = inlined_call_operand.hbm [shape: f32[256,128], index: 5, kind: input, shape index: {}]
  %s6 = inlined_call_operand.hbm [shape: f32[1,128], index: 6, kind: input, shape index: {}]
  %s7 = inlined_call_operand.hbm [shape: f32[128,128], index: 7, kind: input, shape index: {}]
  %s8 = inlined_call_operand.hbm [shape: f32[1,128], index: 8, kind: input, shape index: {}]
  %s9 = inlined_call_operand.vmem [shape: f32[16,128], index: 9, kind: output, shape index: {}]
  %s10 = sld [smem:[#allocation0]]
  $region90: #{light_angles_head.1} parent=0
    _
  %s12 = ssub.s32 1, %s10
  %s13 = scalar_select 0, %s12, %s10
  $region1: #{light_angles_head.1} parent=0
    #allocation3 [shape = 'u8[2097152]{0}', space=vmem, size = 0x200000, scoped, tag = 'input window, operand 1, single buffered']
    #allocation4 [shape = 's32[1]{0}', space=sflag, size = 0x4, scoped, tag = 'scoped memory for light_angles_head.1']
    #allocation5 [shape = 'u8[4096]{0}', space=vmem, size = 0x1000, scoped, tag = 'input window, operand 2, single buffered']
    #allocation6 [shape = 's32[1]{0}', space=sflag, size = 0x4, scoped, tag = 'scoped memory for light_angles_head.1']
    #allocation7 [shape = 'u8[1048576]{0}', space=vmem, size = 0x100000, scoped, tag = 'input window, operand 3, single buffered']
    #allocation8 [shape = 'u8[1024]{0}', space=vmem, size = 0x400, scoped, tag = 'input window, operand 4, single buffered']
    #allocation9 [shape = 's32[1]{0}', space=sflag, size = 0x4, scoped, tag = 'scoped memory for light_angles_head.1']
    #allocation10 [shape = 'u8[131072]{0}', space=vmem, size = 0x20000, scoped, tag = 'input window, operand 5, single buffered']
    #allocation11 [shape = 'u8[512]{0}', space=vmem, size = 0x400, scoped, tag = 'input window, operand 6, single buffered']
    #allocation12 [shape = 's32[1]{0}', space=sflag, size = 0x4, scoped, tag = 'scoped memory for light_angles_head.1']
    #allocation13 [shape = 'u8[65536]{0}', space=vmem, size = 0x10000, scoped, tag = 'input window, operand 7, single buffered']
    #allocation14 [shape = 'u8[512]{0}', space=vmem, size = 0x400, scoped, tag = 'input window, operand 8, single buffered']
    #allocation15 [shape = 's32[1]{0}', space=sflag, size = 0x4, scoped, tag = 'scoped memory for light_angles_head.1']
    %14 = vsyncpa [#allocation4], 0
    %15 = vsyncpa [#allocation6], 0
    %16 = vsyncpa [#allocation9], 0
    %17 = vsyncpa [#allocation12], 0
    %18 = vsyncpa [#allocation15], 0
    // Predicated region
    $region2: #{light_angles_head.1} parent=1 // pred_check
      _
    $region3: #{light_angles_head.1} parent=1 // pred_check_branch
      %20 = sbr.rel (0) target = $region5
    $region4: #{light_angles_head.1} parent=1 // pred_region
      _
    $region5: #{light_angles_head.1} parent=1 // pred_fallthru
      _
    // Predicated region
    $region6: #{light_angles_head.1} parent=1 // pred_check
      _
    $region7: #{light_angles_head.1} parent=1 // pred_check_branch
      %22 = sbr.rel (0) target = $region9
    $region8: #{light_angles_head.1} parent=1 // pred_region
      %s24 = ssub.s32 65536, 65536
      %25 = vsyncadd [#allocation4], %s24
      %s26 = sshll.u32 [#allocation3], 4
      %s27 = int_to_ptr.vmem [resolvable:$true] %s26
      %32 = dma.hbm_to_vmem [thread:$0]  %s1, 65536, %s27, [#allocation4], 512, 512, 32
    $region9: #{light_angles_head.1} parent=1 // pred_fallthru
      _
    // Predicated region
    $region10: #{light_angles_head.1} parent=1 // pred_check
      _
    $region11: #{light_angles_head.1} parent=1 // pred_check_branch
      %34 = sbr.rel (0) target = $region13
    $region12: #{light_angles_head.1} parent=1 // pred_region
      %s36 = ssub.s32 128, 128
      %37 = vsyncadd [#allocation6], %s36
      %s39 = sshll.u32 [#allocation5], 4
      %s40 = int_to_ptr.vmem [resolvable:$true] %s39
      %42 = dma.hbm_to_vmem [thread:$0]  %s2, 128, %s40, [#allocation6]
    $region13: #{light_angles_head.1} parent=1 // pred_fallthru
      _
    // Predicated region
    $region14: #{light_angles_head.1} parent=1 // pred_check
      _
    $region15: #{light_angles_head.1} parent=1 // pred_check_branch
      %44 = sbr.rel (0) target = $region17
    $region16: #{light_angles_head.1} parent=1 // pred_region
      %s46 = ssub.s32 32768, 32768
      %47 = vsyncadd [#allocation6], %s46
      %s48 = sshll.u32 [#allocation7], 4
      %s49 = int_to_ptr.vmem [resolvable:$true] %s48
      %54 = dma.hbm_to_vmem [thread:$0]  %s3, 32768, %s49, [#allocation6], 256, 256, 16
    $region17: #{light_angles_head.1} parent=1 // pred_fallthru
      _
    // Predicated region
    $region18: #{light_angles_head.1} parent=1 // pred_check
      _
    $region19: #{light_angles_head.1} parent=1 // pred_check_branch
      %56 = sbr.rel (0) target = $region21
    $region20: #{light_angles_head.1} parent=1 // pred_region
      %s58 = ssub.s32 32, 32
      %59 = vsyncadd [#allocation9], %s58
      %s61 = sshll.u32 [#allocation8], 4
      %s62 = int_to_ptr.vmem [resolvable:$true] %s61
      %64 = dma.hbm_to_vmem [thread:$0]  %s4, 32, %s62, [#allocation9]
    $region21: #{light_angles_head.1} parent=1 // pred_fallthru
      _
    // Predicated region
    $region22: #{light_angles_head.1} parent=1 // pred_check
      _
    $region23: #{light_angles_head.1} parent=1 // pred_check_branch
      %66 = sbr.rel (0) target = $region25
    $region24: #{light_angles_head.1} parent=1 // pred_region
      %s68 = ssub.s32 4096, 4096
      %69 = vsyncadd [#allocation9], %s68
      %s70 = sshll.u32 [#allocation10], 4
      %s71 = int_to_ptr.vmem [resolvable:$true] %s70
      %76 = dma.hbm_to_vmem [thread:$0]  %s5, 4096, %s71, [#allocation9], 128, 128, 8
    $region25: #{light_angles_head.1} parent=1 // pred_fallthru
      _
    // Predicated region
    $region26: #{light_angles_head.1} parent=1 // pred_check
      _
    $region27: #{light_angles_head.1} parent=1 // pred_check_branch
      %78 = sbr.rel (0) target = $region29
    $region28: #{light_angles_head.1} parent=1 // pred_region
      %s80 = ssub.s32 16, 16
      %81 = vsyncadd [#allocation12], %s80
      %s83 = sshll.u32 [#allocation11], 4
      %s84 = int_to_ptr.vmem [resolvable:$true] %s83
      %86 = dma.hbm_to_vmem [thread:$0]  %s6, 16, %s84, [#allocation12]
    $region29: #{light_angles_head.1} parent=1 // pred_fallthru
      _
    // Predicated region
    $region30: #{light_angles_head.1} parent=1 // pred_check
      _
    $region31: #{light_angles_head.1} parent=1 // pred_check_branch
      %88 = sbr.rel (0) target = $region33
    $region32: #{light_angles_head.1} parent=1 // pred_region
      %s90 = ssub.s32 2048, 2048
      %91 = vsyncadd [#allocation12], %s90
      %s92 = sshll.u32 [#allocation13], 4
      %s93 = int_to_ptr.vmem [resolvable:$true] %s92
      %98 = dma.hbm_to_vmem [thread:$0]  %s7, 2048, %s93, [#allocation12], 128, 128, 8
    $region33: #{light_angles_head.1} parent=1 // pred_fallthru
      _
    // Predicated region
    $region34: #{light_angles_head.1} parent=1 // pred_check
      _
    $region35: #{light_angles_head.1} parent=1 // pred_check_branch
      %100 = sbr.rel (0) target = $region37
    $region36: #{light_angles_head.1} parent=1 // pred_region
      %s102 = ssub.s32 16, 16
      %103 = vsyncadd [#allocation15], %s102
      %s105 = sshll.u32 [#allocation14], 4
      %s106 = int_to_ptr.vmem [resolvable:$true] %s105
      %108 = dma.hbm_to_vmem [thread:$0]  %s8, 16, %s106, [#allocation15]
    $region37: #{light_angles_head.1} parent=1 // pred_fallthru
      _
    // Predicated region
    $region38: #{light_angles_head.1} parent=1 // pred_check
      _
    $region39: #{light_angles_head.1} parent=1 // pred_check_branch
      %110 = sbr.rel (0) target = $region41
    $region40: #{light_angles_head.1} parent=1 // pred_region
      %111 = dma.done [#allocation4], 65536
    $region41: #{light_angles_head.1} parent=1 // pred_fallthru
      _
    // Predicated region
    $region42: #{light_angles_head.1} parent=1 // pred_check
      _
    $region43: #{light_angles_head.1} parent=1 // pred_check_branch
      %113 = sbr.rel (0) target = $region45
    $region44: #{light_angles_head.1} parent=1 // pred_region
      %114 = dma.done [#allocation6], 128
    $region45: #{light_angles_head.1} parent=1 // pred_fallthru
      _
    // Predicated region
    $region46: #{light_angles_head.1} parent=1 // pred_check
      _
    $region47: #{light_angles_head.1} parent=1 // pred_check_branch
      %116 = sbr.rel (0) target = $region49
    $region48: #{light_angles_head.1} parent=1 // pred_region
      %117 = dma.done [#allocation6], 32768
    $region49: #{light_angles_head.1} parent=1 // pred_fallthru
      _
    // Predicated region
    $region50: #{light_angles_head.1} parent=1 // pred_check
      _
    $region51: #{light_angles_head.1} parent=1 // pred_check_branch
      %119 = sbr.rel (0) target = $region53
    $region52: #{light_angles_head.1} parent=1 // pred_region
      %120 = dma.done [#allocation9], 32
    $region53: #{light_angles_head.1} parent=1 // pred_fallthru
      _
    // Predicated region
    $region54: #{light_angles_head.1} parent=1 // pred_check
      _
    $region55: #{light_angles_head.1} parent=1 // pred_check_branch
      %122 = sbr.rel (0) target = $region57
    $region56: #{light_angles_head.1} parent=1 // pred_region
      %123 = dma.done [#allocation9], 4096
    $region57: #{light_angles_head.1} parent=1 // pred_fallthru
      _
    // Predicated region
    $region58: #{light_angles_head.1} parent=1 // pred_check
      _
    $region59: #{light_angles_head.1} parent=1 // pred_check_branch
      %125 = sbr.rel (0) target = $region61
    $region60: #{light_angles_head.1} parent=1 // pred_region
      %126 = dma.done [#allocation12], 16
    $region61: #{light_angles_head.1} parent=1 // pred_fallthru
      _
    // Predicated region
    $region62: #{light_angles_head.1} parent=1 // pred_check
      _
    $region63: #{light_angles_head.1} parent=1 // pred_check_branch
      %128 = sbr.rel (0) target = $region65
    $region64: #{light_angles_head.1} parent=1 // pred_region
      %129 = dma.done [#allocation12], 2048
    $region65: #{light_angles_head.1} parent=1 // pred_fallthru
      _
    // Predicated region
    $region66: #{light_angles_head.1} parent=1 // pred_check
      _
    $region67: #{light_angles_head.1} parent=1 // pred_check_branch
      %131 = sbr.rel (0) target = $region69
    $region68: #{light_angles_head.1} parent=1 // pred_region
      %132 = dma.done [#allocation15], 16
    $region69: #{light_angles_head.1} parent=1 // pred_fallthru
      _
    %v133 = vld [vmem:[%s0] sm:$0xff]
    %v134 = vld [vmem:[%s0 + $0x8] sm:$0xff]
    %v135 = vld [vmem:[%s0 + $0x10] sm:$0xff]
    %v136 = vld [vmem:[%s0 + $0x18] sm:$0xff]
    %v137 = vld [vmem:[%s0 + $0x20] sm:$0xff]
    %v138 = vld [vmem:[%s0 + $0x28] sm:$0xff]
    %v139 = vld [vmem:[%s0 + $0x30] sm:$0xff]
    %v140 = vld [vmem:[%s0 + $0x38] sm:$0xff]
    %v141 = vld [vmem:[%s0 + $0x40] sm:$0xff]
    %v142 = vld [vmem:[%s0 + $0x48] sm:$0xff]
    %v143 = vld [vmem:[%s0 + $0x50] sm:$0xff]
    %v144 = vld [vmem:[%s0 + $0x58] sm:$0xff]
    %v145 = vld [vmem:[%s0 + $0x60] sm:$0xff]
    %v146 = vld [vmem:[%s0 + $0x68] sm:$0xff]
    %v147 = vld [vmem:[%s0 + $0x70] sm:$0xff]
    %v148 = vld [vmem:[%s0 + $0x78] sm:$0xff]
    %v149 = vpack.c.bf16 %v141, %v133
    %v150 = vpack.c.bf16 %v142, %v134
    %v151 = vpack.c.bf16 %v143, %v135
    %v152 = vpack.c.bf16 %v144, %v136
    %v153 = vpack.c.bf16 %v145, %v137
    %v154 = vpack.c.bf16 %v146, %v138
    %v155 = vpack.c.bf16 %v147, %v139
    %v156 = vpack.c.bf16 %v148, %v140
    %v157 = vld [vmem:[#allocation3] sm:$0xff]
    %v158 = vld [vmem:[#allocation3 + $0x8] sm:$0xff]
    %v159 = vld [vmem:[#allocation3 + $0x10] sm:$0xff]
    %v160 = vld [vmem:[#allocation3 + $0x18] sm:$0xff]
    %v161 = vld [vmem:[#allocation3 + $0x20] sm:$0xff]
    %v162 = vld [vmem:[#allocation3 + $0x28] sm:$0xff]
    %v163 = vld [vmem:[#allocation3 + $0x30] sm:$0xff]
    %v164 = vld [vmem:[#allocation3 + $0x38] sm:$0xff]
    %v165 = vld [vmem:[#allocation3 + $0x40] sm:$0xff]
    %v166 = vld [vmem:[#allocation3 + $0x48] sm:$0xff]
    %v167 = vld [vmem:[#allocation3 + $0x50] sm:$0xff]
    %v168 = vld [vmem:[#allocation3 + $0x58] sm:$0xff]
    %v169 = vld [vmem:[#allocation3 + $0x60] sm:$0xff]
    %v170 = vld [vmem:[#allocation3 + $0x68] sm:$0xff]
    %v171 = vld [vmem:[#allocation3 + $0x70] sm:$0xff]
    %v172 = vld [vmem:[#allocation3 + $0x78] sm:$0xff]
    %v173 = vld [vmem:[#allocation3 + $0x80] sm:$0xff]
    %v174 = vld [vmem:[#allocation3 + $0x88] sm:$0xff]
    %v175 = vld [vmem:[#allocation3 + $0x90] sm:$0xff]
    %v176 = vld [vmem:[#allocation3 + $0x98] sm:$0xff]
    %v177 = vld [vmem:[#allocation3 + $0xa0] sm:$0xff]
    %v178 = vld [vmem:[#allocation3 + $0xa8] sm:$0xff]
    %v179 = vld [vmem:[#allocation3 + $0xb0] sm:$0xff]
    %v180 = vld [vmem:[#allocation3 + $0xb8] sm:$0xff]
    %v181 = vld [vmem:[#allocation3 + $0xc0] sm:$0xff]
    %v182 = vld [vmem:[#allocation3 + $0xc8] sm:$0xff]
    %v183 = vld [vmem:[#allocation3 + $0xd0] sm:$0xff]
    %v184 = vld [vmem:[#allocation3 + $0xd8] sm:$0xff]
    %v185 = vld [vmem:[#allocation3 + $0xe0] sm:$0xff]
    %v186 = vld [vmem:[#allocation3 + $0xe8] sm:$0xff]
    %v187 = vld [vmem:[#allocation3 + $0xf0] sm:$0xff]
    %v188 = vld [vmem:[#allocation3 + $0xf8] sm:$0xff]
    %v189 = vld [vmem:[#allocation3 + $0x100] sm:$0xff]
    %v190 = vld [vmem:[#allocation3 + $0x108] sm:$0xff]
    %v191 = vld [vmem:[#allocation3 + $0x110] sm:$0xff]
    %v192 = vld [vmem:[#allocation3 + $0x118] sm:$0xff]
    %v193 = vld [vmem:[#allocation3 + $0x120] sm:$0xff]
    %v194 = vld [vmem:[#allocation3 + $0x128] sm:$0xff]
    %v195 = vld [vmem:[#allocation3 + $0x130] sm:$0xff]
    %v196 = vld [vmem:[#allocation3 + $0x138] sm:$0xff]
    %v197 = vld [vmem:[#allocation3 + $0x140] sm:$0xff]
    %v198 = vld [vmem:[#allocation3 + $0x148] sm:$0xff]
    %v199 = vld [vmem:[#allocation3 + $0x150] sm:$0xff]
    %v200 = vld [vmem:[#allocation3 + $0x158] sm:$0xff]
    %v201 = vld [vmem:[#allocation3 + $0x160] sm:$0xff]
    %v202 = vld [vmem:[#allocation3 + $0x168] sm:$0xff]
    %v203 = vld [vmem:[#allocation3 + $0x170] sm:$0xff]
    %v204 = vld [vmem:[#allocation3 + $0x178] sm:$0xff]
    %v205 = vld [vmem:[#allocation3 + $0x180] sm:$0xff]
    %v206 = vld [vmem:[#allocation3 + $0x188] sm:$0xff]
    %v207 = vld [vmem:[#allocation3 + $0x190] sm:$0xff]
    %v208 = vld [vmem:[#allocation3 + $0x198] sm:$0xff]
    %v209 = vld [vmem:[#allocation3 + $0x1a0] sm:$0xff]
    %v210 = vld [vmem:[#allocation3 + $0x1a8] sm:$0xff]
    %v211 = vld [vmem:[#allocation3 + $0x1b0] sm:$0xff]
    %v212 = vld [vmem:[#allocation3 + $0x1b8] sm:$0xff]
    %v213 = vld [vmem:[#allocation3 + $0x1c0] sm:$0xff]
    %v214 = vld [vmem:[#allocation3 + $0x1c8] sm:$0xff]
    %v215 = vld [vmem:[#allocation3 + $0x1d0] sm:$0xff]
    %v216 = vld [vmem:[#allocation3 + $0x1d8] sm:$0xff]
    %v217 = vld [vmem:[#allocation3 + $0x1e0] sm:$0xff]
    %v218 = vld [vmem:[#allocation3 + $0x1e8] sm:$0xff]
    %v219 = vld [vmem:[#allocation3 + $0x1f0] sm:$0xff]
    %v220 = vld [vmem:[#allocation3 + $0x1f8] sm:$0xff]
    %v221 = vld [vmem:[#allocation3 + $0x200] sm:$0xff]
    %v222 = vld [vmem:[#allocation3 + $0x208] sm:$0xff]
    %v223 = vld [vmem:[#allocation3 + $0x210] sm:$0xff]
    %v224 = vld [vmem:[#allocation3 + $0x218] sm:$0xff]
    %v225 = vld [vmem:[#allocation3 + $0x220] sm:$0xff]
    %v226 = vld [vmem:[#allocation3 + $0x228] sm:$0xff]
    %v227 = vld [vmem:[#allocation3 + $0x230] sm:$0xff]
    %v228 = vld [vmem:[#allocation3 + $0x238] sm:$0xff]
    %v229 = vld [vmem:[#allocation3 + $0x240] sm:$0xff]
    %v230 = vld [vmem:[#allocation3 + $0x248] sm:$0xff]
    %v231 = vld [vmem:[#allocation3 + $0x250] sm:$0xff]
    %v232 = vld [vmem:[#allocation3 + $0x258] sm:$0xff]
    %v233 = vld [vmem:[#allocation3 + $0x260] sm:$0xff]
    %v234 = vld [vmem:[#allocation3 + $0x268] sm:$0xff]
    %v235 = vld [vmem:[#allocation3 + $0x270] sm:$0xff]
    %v236 = vld [vmem:[#allocation3 + $0x278] sm:$0xff]
    %v237 = vld [vmem:[#allocation3 + $0x280] sm:$0xff]
    %v238 = vld [vmem:[#allocation3 + $0x288] sm:$0xff]
    %v239 = vld [vmem:[#allocation3 + $0x290] sm:$0xff]
    %v240 = vld [vmem:[#allocation3 + $0x298] sm:$0xff]
    %v241 = vld [vmem:[#allocation3 + $0x2a0] sm:$0xff]
    %v242 = vld [vmem:[#allocation3 + $0x2a8] sm:$0xff]
    %v243 = vld [vmem:[#allocation3 + $0x2b0] sm:$0xff]
    %v244 = vld [vmem:[#allocation3 + $0x2b8] sm:$0xff]
    %v245 = vld [vmem:[#allocation3 + $0x2c0] sm:$0xff]
    %v246 = vld [vmem:[#allocation3 + $0x2c8] sm:$0xff]
    %v247 = vld [vmem:[#allocation3 + $0x2d0] sm:$0xff]
    %v248 = vld [vmem:[#allocation3 + $0x2d8] sm:$0xff]
    %v249 = vld [vmem:[#allocation3 + $0x2e0] sm:$0xff]
    %v250 = vld [vmem:[#allocation3 + $0x2e8] sm:$0xff]
    %v251 = vld [vmem:[#allocation3 + $0x2f0] sm:$0xff]
    %v252 = vld [vmem:[#allocation3 + $0x2f8] sm:$0xff]
    %v253 = vld [vmem:[#allocation3 + $0x300] sm:$0xff]
    %v254 = vld [vmem:[#allocation3 + $0x308] sm:$0xff]
    %v255 = vld [vmem:[#allocation3 + $0x310] sm:$0xff]
    %v256 = vld [vmem:[#allocation3 + $0x318] sm:$0xff]
    %v257 = vld [vmem:[#allocation3 + $0x320] sm:$0xff]
    %v258 = vld [vmem:[#allocation3 + $0x328] sm:$0xff]
    %v259 = vld [vmem:[#allocation3 + $0x330] sm:$0xff]
    %v260 = vld [vmem:[#allocation3 + $0x338] sm:$0xff]
    %v261 = vld [vmem:[#allocation3 + $0x340] sm:$0xff]
    %v262 = vld [vmem:[#allocation3 + $0x348] sm:$0xff]
    %v263 = vld [vmem:[#allocation3 + $0x350] sm:$0xff]
    %v264 = vld [vmem:[#allocation3 + $0x358] sm:$0xff]
    %v265 = vld [vmem:[#allocation3 + $0x360] sm:$0xff]
    %v266 = vld [vmem:[#allocation3 + $0x368] sm:$0xff]
    %v267 = vld [vmem:[#allocation3 + $0x370] sm:$0xff]
    %v268 = vld [vmem:[#allocation3 + $0x378] sm:$0xff]
    %v269 = vld [vmem:[#allocation3 + $0x380] sm:$0xff]
    %v270 = vld [vmem:[#allocation3 + $0x388] sm:$0xff]
    %v271 = vld [vmem:[#allocation3 + $0x390] sm:$0xff]
    %v272 = vld [vmem:[#allocation3 + $0x398] sm:$0xff]
    %v273 = vld [vmem:[#allocation3 + $0x3a0] sm:$0xff]
    %v274 = vld [vmem:[#allocation3 + $0x3a8] sm:$0xff]
    %v275 = vld [vmem:[#allocation3 + $0x3b0] sm:$0xff]
    %v276 = vld [vmem:[#allocation3 + $0x3b8] sm:$0xff]
    %v277 = vld [vmem:[#allocation3 + $0x3c0] sm:$0xff]
    %v278 = vld [vmem:[#allocation3 + $0x3c8] sm:$0xff]
    %v279 = vld [vmem:[#allocation3 + $0x3d0] sm:$0xff]
    %v280 = vld [vmem:[#allocation3 + $0x3d8] sm:$0xff]
    %v281 = vld [vmem:[#allocation3 + $0x3e0] sm:$0xff]
    %v282 = vld [vmem:[#allocation3 + $0x3e8] sm:$0xff]
    %v283 = vld [vmem:[#allocation3 + $0x3f0] sm:$0xff]
    %v284 = vld [vmem:[#allocation3 + $0x3f8] sm:$0xff]
    %v285 = vld [vmem:[#allocation3 + $0x400] sm:$0xff]
    %v286 = vld [vmem:[#allocation3 + $0x408] sm:$0xff]
    %v287 = vld [vmem:[#allocation3 + $0x410] sm:$0xff]
    %v288 = vld [vmem:[#allocation3 + $0x418] sm:$0xff]
    %v289 = vld [vmem:[#allocation3 + $0x420] sm:$0xff]
    %v290 = vld [vmem:[#allocation3 + $0x428] sm:$0xff]
    %v291 = vld [vmem:[#allocation3 + $0x430] sm:$0xff]
    %v292 = vld [vmem:[#allocation3 + $0x438] sm:$0xff]
    %v293 = vld [vmem:[#allocation3 + $0x440] sm:$0xff]
    %v294 = vld [vmem:[#allocation3 + $0x448] sm:$0xff]
    %v295 = vld [vmem:[#allocation3 + $0x450] sm:$0xff]
    %v296 = vld [vmem:[#allocation3 + $0x458] sm:$0xff]
    %v297 = vld [vmem:[#allocation3 + $0x460] sm:$0xff]
    %v298 = vld [vmem:[#allocation3 + $0x468] sm:$0xff]
    %v299 = vld [vmem:[#allocation3 + $0x470] sm:$0xff]
    %v300 = vld [vmem:[#allocation3 + $0x478] sm:$0xff]
    %v301 = vld [vmem:[#allocation3 + $0x480] sm:$0xff]
    %v302 = vld [vmem:[#allocation3 + $0x488] sm:$0xff]
    %v303 = vld [vmem:[#allocation3 + $0x490] sm:$0xff]
    %v304 = vld [vmem:[#allocation3 + $0x498] sm:$0xff]
    %v305 = vld [vmem:[#allocation3 + $0x4a0] sm:$0xff]
    %v306 = vld [vmem:[#allocation3 + $0x4a8] sm:$0xff]
    %v307 = vld [vmem:[#allocation3 + $0x4b0] sm:$0xff]
    %v308 = vld [vmem:[#allocation3 + $0x4b8] sm:$0xff]
    %v309 = vld [vmem:[#allocation3 + $0x4c0] sm:$0xff]
    %v310 = vld [vmem:[#allocation3 + $0x4c8] sm:$0xff]
    %v311 = vld [vmem:[#allocation3 + $0x4d0] sm:$0xff]
    %v312 = vld [vmem:[#allocation3 + $0x4d8] sm:$0xff]
    %v313 = vld [vmem:[#allocation3 + $0x4e0] sm:$0xff]
    %v314 = vld [vmem:[#allocation3 + $0x4e8] sm:$0xff]
    %v315 = vld [vmem:[#allocation3 + $0x4f0] sm:$0xff]
    %v316 = vld [vmem:[#allocation3 + $0x4f8] sm:$0xff]
    %v317 = vld [vmem:[#allocation3 + $0x500] sm:$0xff]
    %v318 = vld [vmem:[#allocation3 + $0x508] sm:$0xff]
    %v319 = vld [vmem:[#allocation3 + $0x510] sm:$0xff]
    %v320 = vld [vmem:[#allocation3 + $0x518] sm:$0xff]
    %v321 = vld [vmem:[#allocation3 + $0x520] sm:$0xff]
    %v322 = vld [vmem:[#allocation3 + $0x528] sm:$0xff]
    %v323 = vld [vmem:[#allocation3 + $0x530] sm:$0xff]
    %v324 = vld [vmem:[#allocation3 + $0x538] sm:$0xff]
    %v325 = vld [vmem:[#allocation3 + $0x540] sm:$0xff]
    %v326 = vld [vmem:[#allocation3 + $0x548] sm:$0xff]
    %v327 = vld [vmem:[#allocation3 + $0x550] sm:$0xff]
    %v328 = vld [vmem:[#allocation3 + $0x558] sm:$0xff]
    %v329 = vld [vmem:[#allocation3 + $0x560] sm:$0xff]
    %v330 = vld [vmem:[#allocation3 + $0x568] sm:$0xff]
    %v331 = vld [vmem:[#allocation3 + $0x570] sm:$0xff]
    %v332 = vld [vmem:[#allocation3 + $0x578] sm:$0xff]
    %v333 = vld [vmem:[#allocation3 + $0x580] sm:$0xff]
    %v334 = vld [vmem:[#allocation3 + $0x588] sm:$0xff]
    %v335 = vld [vmem:[#allocation3 + $0x590] sm:$0xff]
    %v336 = vld [vmem:[#allocation3 + $0x598] sm:$0xff]
    %v337 = vld [vmem:[#allocation3 + $0x5a0] sm:$0xff]
    %v338 = vld [vmem:[#allocation3 + $0x5a8] sm:$0xff]
    %v339 = vld [vmem:[#allocation3 + $0x5b0] sm:$0xff]
    %v340 = vld [vmem:[#allocation3 + $0x5b8] sm:$0xff]
    %v341 = vld [vmem:[#allocation3 + $0x5c0] sm:$0xff]
    %v342 = vld [vmem:[#allocation3 + $0x5c8] sm:$0xff]
    %v343 = vld [vmem:[#allocation3 + $0x5d0] sm:$0xff]
    %v344 = vld [vmem:[#allocation3 + $0x5d8] sm:$0xff]
    %v345 = vld [vmem:[#allocation3 + $0x5e0] sm:$0xff]
    %v346 = vld [vmem:[#allocation3 + $0x5e8] sm:$0xff]
    %v347 = vld [vmem:[#allocation3 + $0x5f0] sm:$0xff]
    %v348 = vld [vmem:[#allocation3 + $0x5f8] sm:$0xff]
    %v349 = vld [vmem:[#allocation3 + $0x600] sm:$0xff]
    %v350 = vld [vmem:[#allocation3 + $0x608] sm:$0xff]
    %v351 = vld [vmem:[#allocation3 + $0x610] sm:$0xff]
    %v352 = vld [vmem:[#allocation3 + $0x618] sm:$0xff]
    %v353 = vld [vmem:[#allocation3 + $0x620] sm:$0xff]
    %v354 = vld [vmem:[#allocation3 + $0x628] sm:$0xff]
    %v355 = vld [vmem:[#allocation3 + $0x630] sm:$0xff]
    %v356 = vld [vmem:[#allocation3 + $0x638] sm:$0xff]
    %v357 = vld [vmem:[#allocation3 + $0x640] sm:$0xff]
    %v358 = vld [vmem:[#allocation3 + $0x648] sm:$0xff]
    %v359 = vld [vmem:[#allocation3 + $0x650] sm:$0xff]
    %v360 = vld [vmem:[#allocation3 + $0x658] sm:$0xff]
    %v361 = vld [vmem:[#allocation3 + $0x660] sm:$0xff]
    %v362 = vld [vmem:[#allocation3 + $0x668] sm:$0xff]
    %v363 = vld [vmem:[#allocation3 + $0x670] sm:$0xff]
    %v364 = vld [vmem:[#allocation3 + $0x678] sm:$0xff]
    %v365 = vld [vmem:[#allocation3 + $0x680] sm:$0xff]
    %v366 = vld [vmem:[#allocation3 + $0x688] sm:$0xff]
    %v367 = vld [vmem:[#allocation3 + $0x690] sm:$0xff]
    %v368 = vld [vmem:[#allocation3 + $0x698] sm:$0xff]
    %v369 = vld [vmem:[#allocation3 + $0x6a0] sm:$0xff]
    %v370 = vld [vmem:[#allocation3 + $0x6a8] sm:$0xff]
    %v371 = vld [vmem:[#allocation3 + $0x6b0] sm:$0xff]
    %v372 = vld [vmem:[#allocation3 + $0x6b8] sm:$0xff]
    %v373 = vld [vmem:[#allocation3 + $0x6c0] sm:$0xff]
    %v374 = vld [vmem:[#allocation3 + $0x6c8] sm:$0xff]
    %v375 = vld [vmem:[#allocation3 + $0x6d0] sm:$0xff]
    %v376 = vld [vmem:[#allocation3 + $0x6d8] sm:$0xff]
    %v377 = vld [vmem:[#allocation3 + $0x6e0] sm:$0xff]
    %v378 = vld [vmem:[#allocation3 + $0x6e8] sm:$0xff]
    %v379 = vld [vmem:[#allocation3 + $0x6f0] sm:$0xff]
    %v380 = vld [vmem:[#allocation3 + $0x6f8] sm:$0xff]
    %v381 = vld [vmem:[#allocation3 + $0x700] sm:$0xff]
    %v382 = vld [vmem:[#allocation3 + $0x708] sm:$0xff]
    %v383 = vld [vmem:[#allocation3 + $0x710] sm:$0xff]
    %v384 = vld [vmem:[#allocation3 + $0x718] sm:$0xff]
    %v385 = vld [vmem:[#allocation3 + $0x720] sm:$0xff]
    %v386 = vld [vmem:[#allocation3 + $0x728] sm:$0xff]
    %v387 = vld [vmem:[#allocation3 + $0x730] sm:$0xff]
    %v388 = vld [vmem:[#allocation3 + $0x738] sm:$0xff]
    %v389 = vld [vmem:[#allocation3 + $0x740] sm:$0xff]
    %v390 = vld [vmem:[#allocation3 + $0x748] sm:$0xff]
    %v391 = vld [vmem:[#allocation3 + $0x750] sm:$0xff]
    %v392 = vld [vmem:[#allocation3 + $0x758] sm:$0xff]
    %v393 = vld [vmem:[#allocation3 + $0x760] sm:$0xff]
    %v394 = vld [vmem:[#allocation3 + $0x768] sm:$0xff]
    %v395 = vld [vmem:[#allocation3 + $0x770] sm:$0xff]
    %v396 = vld [vmem:[#allocation3 + $0x778] sm:$0xff]
    %v397 = vld [vmem:[#allocation3 + $0x780] sm:$0xff]
    %v398 = vld [vmem:[#allocation3 + $0x788] sm:$0xff]
    %v399 = vld [vmem:[#allocation3 + $0x790] sm:$0xff]
    %v400 = vld [vmem:[#allocation3 + $0x798] sm:$0xff]
    %v401 = vld [vmem:[#allocation3 + $0x7a0] sm:$0xff]
    %v402 = vld [vmem:[#allocation3 + $0x7a8] sm:$0xff]
    %v403 = vld [vmem:[#allocation3 + $0x7b0] sm:$0xff]
    %v404 = vld [vmem:[#allocation3 + $0x7b8] sm:$0xff]
    %v405 = vld [vmem:[#allocation3 + $0x7c0] sm:$0xff]
    %v406 = vld [vmem:[#allocation3 + $0x7c8] sm:$0xff]
    %v407 = vld [vmem:[#allocation3 + $0x7d0] sm:$0xff]
    %v408 = vld [vmem:[#allocation3 + $0x7d8] sm:$0xff]
    %v409 = vld [vmem:[#allocation3 + $0x7e0] sm:$0xff]
    %v410 = vld [vmem:[#allocation3 + $0x7e8] sm:$0xff]
    %v411 = vld [vmem:[#allocation3 + $0x7f0] sm:$0xff]
    %v412 = vld [vmem:[#allocation3 + $0x7f8] sm:$0xff]
    %v413 = vld [vmem:[#allocation3 + $0x800] sm:$0xff]
    %v414 = vld [vmem:[#allocation3 + $0x808] sm:$0xff]
    %v415 = vld [vmem:[#allocation3 + $0x810] sm:$0xff]
    %v416 = vld [vmem:[#allocation3 + $0x818] sm:$0xff]
    %v417 = vld [vmem:[#allocation3 + $0x820] sm:$0xff]
    %v418 = vld [vmem:[#allocation3 + $0x828] sm:$0xff]
    %v419 = vld [vmem:[#allocation3 + $0x830] sm:$0xff]
    %v420 = vld [vmem:[#allocation3 + $0x838] sm:$0xff]
    %v421 = vld [vmem:[#allocation3 + $0x840] sm:$0xff]
    %v422 = vld [vmem:[#allocation3 + $0x848] sm:$0xff]
    %v423 = vld [vmem:[#allocation3 + $0x850] sm:$0xff]
    %v424 = vld [vmem:[#allocation3 + $0x858] sm:$0xff]
    %v425 = vld [vmem:[#allocation3 + $0x860] sm:$0xff]
    %v426 = vld [vmem:[#allocation3 + $0x868] sm:$0xff]
    %v427 = vld [vmem:[#allocation3 + $0x870] sm:$0xff]
    %v428 = vld [vmem:[#allocation3 + $0x878] sm:$0xff]
    %v429 = vld [vmem:[#allocation3 + $0x880] sm:$0xff]
    %v430 = vld [vmem:[#allocation3 + $0x888] sm:$0xff]
    %v431 = vld [vmem:[#allocation3 + $0x890] sm:$0xff]
    %v432 = vld [vmem:[#allocation3 + $0x898] sm:$0xff]
    %v433 = vld [vmem:[#allocation3 + $0x8a0] sm:$0xff]
    %v434 = vld [vmem:[#allocation3 + $0x8a8] sm:$0xff]
    %v435 = vld [vmem:[#allocation3 + $0x8b0] sm:$0xff]
    %v436 = vld [vmem:[#allocation3 + $0x8b8] sm:$0xff]
    %v437 = vld [vmem:[#allocation3 + $0x8c0] sm:$0xff]
    %v438 = vld [vmem:[#allocation3 + $0x8c8] sm:$0xff]
    %v439 = vld [vmem:[#allocation3 + $0x8d0] sm:$0xff]
    %v440 = vld [vmem:[#allocation3 + $0x8d8] sm:$0xff]
    %v441 = vld [vmem:[#allocation3 + $0x8e0] sm:$0xff]
    %v442 = vld [vmem:[#allocation3 + $0x8e8] sm:$0xff]
    %v443 = vld [vmem:[#allocation3 + $0x8f0] sm:$0xff]
    %v444 = vld [vmem:[#allocation3 + $0x8f8] sm:$0xff]
    %v445 = vld [vmem:[#allocation3 + $0x900] sm:$0xff]
    %v446 = vld [vmem:[#allocation3 + $0x908] sm:$0xff]
    %v447 = vld [vmem:[#allocation3 + $0x910] sm:$0xff]
    %v448 = vld [vmem:[#allocation3 + $0x918] sm:$0xff]
    %v449 = vld [vmem:[#allocation3 + $0x920] sm:$0xff]
    %v450 = vld [vmem:[#allocation3 + $0x928] sm:$0xff]
    %v451 = vld [vmem:[#allocation3 + $0x930] sm:$0xff]
    %v452 = vld [vmem:[#allocation3 + $0x938] sm:$0xff]
    %v453 = vld [vmem:[#allocation3 + $0x940] sm:$0xff]
    %v454 = vld [vmem:[#allocation3 + $0x948] sm:$0xff]
    %v455 = vld [vmem:[#allocation3 + $0x950] sm:$0xff]
    %v456 = vld [vmem:[#allocation3 + $0x958] sm:$0xff]
    %v457 = vld [vmem:[#allocation3 + $0x960] sm:$0xff]
    %v458 = vld [vmem:[#allocation3 + $0x968] sm:$0xff]
    %v459 = vld [vmem:[#allocation3 + $0x970] sm:$0xff]
    %v460 = vld [vmem:[#allocation3 + $0x978] sm:$0xff]
    %v461 = vld [vmem:[#allocation3 + $0x980] sm:$0xff]
    %v462 = vld [vmem:[#allocation3 + $0x988] sm:$0xff]
    %v463 = vld [vmem:[#allocation3 + $0x990] sm:$0xff]
    %v464 = vld [vmem:[#allocation3 + $0x998] sm:$0xff]
    %v465 = vld [vmem:[#allocation3 + $0x9a0] sm:$0xff]
    %v466 = vld [vmem:[#allocation3 + $0x9a8] sm:$0xff]
    %v467 = vld [vmem:[#allocation3 + $0x9b0] sm:$0xff]
    %v468 = vld [vmem:[#allocation3 + $0x9b8] sm:$0xff]
    %v469 = vld [vmem:[#allocation3 + $0x9c0] sm:$0xff]
    %v470 = vld [vmem:[#allocation3 + $0x9c8] sm:$0xff]
    %v471 = vld [vmem:[#allocation3 + $0x9d0] sm:$0xff]
    %v472 = vld [vmem:[#allocation3 + $0x9d8] sm:$0xff]
    %v473 = vld [vmem:[#allocation3 + $0x9e0] sm:$0xff]
    %v474 = vld [vmem:[#allocation3 + $0x9e8] sm:$0xff]
    %v475 = vld [vmem:[#allocation3 + $0x9f0] sm:$0xff]
    %v476 = vld [vmem:[#allocation3 + $0x9f8] sm:$0xff]
    %v477 = vld [vmem:[#allocation3 + $0xa00] sm:$0xff]
    %v478 = vld [vmem:[#allocation3 + $0xa08] sm:$0xff]
    %v479 = vld [vmem:[#allocation3 + $0xa10] sm:$0xff]
    %v480 = vld [vmem:[#allocation3 + $0xa18] sm:$0xff]
    %v481 = vld [vmem:[#allocation3 + $0xa20] sm:$0xff]
    %v482 = vld [vmem:[#allocation3 + $0xa28] sm:$0xff]
    %v483 = vld [vmem:[#allocation3 + $0xa30] sm:$0xff]
    %v484 = vld [vmem:[#allocation3 + $0xa38] sm:$0xff]
    %v485 = vld [vmem:[#allocation3 + $0xa40] sm:$0xff]
    %v486 = vld [vmem:[#allocation3 + $0xa48] sm:$0xff]
    %v487 = vld [vmem:[#allocation3 + $0xa50] sm:$0xff]
    %v488 = vld [vmem:[#allocation3 + $0xa58] sm:$0xff]
    %v489 = vld [vmem:[#allocation3 + $0xa60] sm:$0xff]
    %v490 = vld [vmem:[#allocation3 + $0xa68] sm:$0xff]
    %v491 = vld [vmem:[#allocation3 + $0xa70] sm:$0xff]
    %v492 = vld [vmem:[#allocation3 + $0xa78] sm:$0xff]
    %v493 = vld [vmem:[#allocation3 + $0xa80] sm:$0xff]
    %v494 = vld [vmem:[#allocation3 + $0xa88] sm:$0xff]
    %v495 = vld [vmem:[#allocation3 + $0xa90] sm:$0xff]
    %v496 = vld [vmem:[#allocation3 + $0xa98] sm:$0xff]
    %v497 = vld [vmem:[#allocation3 + $0xaa0] sm:$0xff]
    %v498 = vld [vmem:[#allocation3 + $0xaa8] sm:$0xff]
    %v499 = vld [vmem:[#allocation3 + $0xab0] sm:$0xff]
    %v500 = vld [vmem:[#allocation3 + $0xab8] sm:$0xff]
    %v501 = vld [vmem:[#allocation3 + $0xac0] sm:$0xff]
    %v502 = vld [vmem:[#allocation3 + $0xac8] sm:$0xff]
    %v503 = vld [vmem:[#allocation3 + $0xad0] sm:$0xff]
    %v504 = vld [vmem:[#allocation3 + $0xad8] sm:$0xff]
    %v505 = vld [vmem:[#allocation3 + $0xae0] sm:$0xff]
    %v506 = vld [vmem:[#allocation3 + $0xae8] sm:$0xff]
    %v507 = vld [vmem:[#allocation3 + $0xaf0] sm:$0xff]
    %v508 = vld [vmem:[#allocation3 + $0xaf8] sm:$0xff]
    %v509 = vld [vmem:[#allocation3 + $0xb00] sm:$0xff]
    %v510 = vld [vmem:[#allocation3 + $0xb08] sm:$0xff]
    %v511 = vld [vmem:[#allocation3 + $0xb10] sm:$0xff]
    %v512 = vld [vmem:[#allocation3 + $0xb18] sm:$0xff]
    %v513 = vld [vmem:[#allocation3 + $0xb20] sm:$0xff]
    %v514 = vld [vmem:[#allocation3 + $0xb28] sm:$0xff]
    %v515 = vld [vmem:[#allocation3 + $0xb30] sm:$0xff]
    %v516 = vld [vmem:[#allocation3 + $0xb38] sm:$0xff]
    %v517 = vld [vmem:[#allocation3 + $0xb40] sm:$0xff]
    %v518 = vld [vmem:[#allocation3 + $0xb48] sm:$0xff]
    %v519 = vld [vmem:[#allocation3 + $0xb50] sm:$0xff]
    %v520 = vld [vmem:[#allocation3 + $0xb58] sm:$0xff]
    %v521 = vld [vmem:[#allocation3 + $0xb60] sm:$0xff]
    %v522 = vld [vmem:[#allocation3 + $0xb68] sm:$0xff]
    %v523 = vld [vmem:[#allocation3 + $0xb70] sm:$0xff]
    %v524 = vld [vmem:[#allocation3 + $0xb78] sm:$0xff]
    %v525 = vld [vmem:[#allocation3 + $0xb80] sm:$0xff]
    %v526 = vld [vmem:[#allocation3 + $0xb88] sm:$0xff]
    %v527 = vld [vmem:[#allocation3 + $0xb90] sm:$0xff]
    %v528 = vld [vmem:[#allocation3 + $0xb98] sm:$0xff]
    %v529 = vld [vmem:[#allocation3 + $0xba0] sm:$0xff]
    %v530 = vld [vmem:[#allocation3 + $0xba8] sm:$0xff]
    %v531 = vld [vmem:[#allocation3 + $0xbb0] sm:$0xff]
    %v532 = vld [vmem:[#allocation3 + $0xbb8] sm:$0xff]
    %v533 = vld [vmem:[#allocation3 + $0xbc0] sm:$0xff]
    %v534 = vld [vmem:[#allocation3 + $0xbc8] sm:$0xff]
    %v535 = vld [vmem:[#allocation3 + $0xbd0] sm:$0xff]
    %v536 = vld [vmem:[#allocation3 + $0xbd8] sm:$0xff]
    %v537 = vld [vmem:[#allocation3 + $0xbe0] sm:$0xff]
    %v538 = vld [vmem:[#allocation3 + $0xbe8] sm:$0xff]
    %v539 = vld [vmem:[#allocation3 + $0xbf0] sm:$0xff]
    %v540 = vld [vmem:[#allocation3 + $0xbf8] sm:$0xff]
    %v541 = vld [vmem:[#allocation3 + $0xc00] sm:$0xff]
    %v542 = vld [vmem:[#allocation3 + $0xc08] sm:$0xff]
    %v543 = vld [vmem:[#allocation3 + $0xc10] sm:$0xff]
    %v544 = vld [vmem:[#allocation3 + $0xc18] sm:$0xff]
    %v545 = vld [vmem:[#allocation3 + $0xc20] sm:$0xff]
    %v546 = vld [vmem:[#allocation3 + $0xc28] sm:$0xff]
    %v547 = vld [vmem:[#allocation3 + $0xc30] sm:$0xff]
    %v548 = vld [vmem:[#allocation3 + $0xc38] sm:$0xff]
    %v549 = vld [vmem:[#allocation3 + $0xc40] sm:$0xff]
    %v550 = vld [vmem:[#allocation3 + $0xc48] sm:$0xff]
    %v551 = vld [vmem:[#allocation3 + $0xc50] sm:$0xff]
    %v552 = vld [vmem:[#allocation3 + $0xc58] sm:$0xff]
    %v553 = vld [vmem:[#allocation3 + $0xc60] sm:$0xff]
    %v554 = vld [vmem:[#allocation3 + $0xc68] sm:$0xff]
    %v555 = vld [vmem:[#allocation3 + $0xc70] sm:$0xff]
    %v556 = vld [vmem:[#allocation3 + $0xc78] sm:$0xff]
    %v557 = vld [vmem:[#allocation3 + $0xc80] sm:$0xff]
    %v558 = vld [vmem:[#allocation3 + $0xc88] sm:$0xff]
    %v559 = vld [vmem:[#allocation3 + $0xc90] sm:$0xff]
    %v560 = vld [vmem:[#allocation3 + $0xc98] sm:$0xff]
    %v561 = vld [vmem:[#allocation3 + $0xca0] sm:$0xff]
    %v562 = vld [vmem:[#allocation3 + $0xca8] sm:$0xff]
    %v563 = vld [vmem:[#allocation3 + $0xcb0] sm:$0xff]
    %v564 = vld [vmem:[#allocation3 + $0xcb8] sm:$0xff]
    %v565 = vld [vmem:[#allocation3 + $0xcc0] sm:$0xff]
    %v566 = vld [vmem:[#allocation3 + $0xcc8] sm:$0xff]
    %v567 = vld [vmem:[#allocation3 + $0xcd0] sm:$0xff]
    %v568 = vld [vmem:[#allocation3 + $0xcd8] sm:$0xff]
    %v569 = vld [vmem:[#allocation3 + $0xce0] sm:$0xff]
    %v570 = vld [vmem:[#allocation3 + $0xce8] sm:$0xff]
    %v571 = vld [vmem:[#allocation3 + $0xcf0] sm:$0xff]
    %v572 = vld [vmem:[#allocation3 + $0xcf8] sm:$0xff]
    %v573 = vld [vmem:[#allocation3 + $0xd00] sm:$0xff]
    %v574 = vld [vmem:[#allocation3 + $0xd08] sm:$0xff]
    %v575 = vld [vmem:[#allocation3 + $0xd10] sm:$0xff]
    %v576 = vld [vmem:[#allocation3 + $0xd18] sm:$0xff]
    %v577 = vld [vmem:[#allocation3 + $0xd20] sm:$0xff]
    %v578 = vld [vmem:[#allocation3 + $0xd28] sm:$0xff]
    %v579 = vld [vmem:[#allocation3 + $0xd30] sm:$0xff]
    %v580 = vld [vmem:[#allocation3 + $0xd38] sm:$0xff]
    %v581 = vld [vmem:[#allocation3 + $0xd40] sm:$0xff]
    %v582 = vld [vmem:[#allocation3 + $0xd48] sm:$0xff]
    %v583 = vld [vmem:[#allocation3 + $0xd50] sm:$0xff]
    %v584 = vld [vmem:[#allocation3 + $0xd58] sm:$0xff]
    %v585 = vld [vmem:[#allocation3 + $0xd60] sm:$0xff]
    %v586 = vld [vmem:[#allocation3 + $0xd68] sm:$0xff]
    %v587 = vld [vmem:[#allocation3 + $0xd70] sm:$0xff]
    %v588 = vld [vmem:[#allocation3 + $0xd78] sm:$0xff]
    %v589 = vld [vmem:[#allocation3 + $0xd80] sm:$0xff]
    %v590 = vld [vmem:[#allocation3 + $0xd88] sm:$0xff]
    %v591 = vld [vmem:[#allocation3 + $0xd90] sm:$0xff]
    %v592 = vld [vmem:[#allocation3 + $0xd98] sm:$0xff]
    %v593 = vld [vmem:[#allocation3 + $0xda0] sm:$0xff]
    %v594 = vld [vmem:[#allocation3 + $0xda8] sm:$0xff]
    %v595 = vld [vmem:[#allocation3 + $0xdb0] sm:$0xff]
    %v596 = vld [vmem:[#allocation3 + $0xdb8] sm:$0xff]
    %v597 = vld [vmem:[#allocation3 + $0xdc0] sm:$0xff]
    %v598 = vld [vmem:[#allocation3 + $0xdc8] sm:$0xff]
    %v599 = vld [vmem:[#allocation3 + $0xdd0] sm:$0xff]
    %v600 = vld [vmem:[#allocation3 + $0xdd8] sm:$0xff]
    %v601 = vld [vmem:[#allocation3 + $0xde0] sm:$0xff]
    %v602 = vld [vmem:[#allocation3 + $0xde8] sm:$0xff]
    %v603 = vld [vmem:[#allocation3 + $0xdf0] sm:$0xff]
    %v604 = vld [vmem:[#allocation3 + $0xdf8] sm:$0xff]
    %v605 = vld [vmem:[#allocation3 + $0xe00] sm:$0xff]
    %v606 = vld [vmem:[#allocation3 + $0xe08] sm:$0xff]
    %v607 = vld [vmem:[#allocation3 + $0xe10] sm:$0xff]
    %v608 = vld [vmem:[#allocation3 + $0xe18] sm:$0xff]
    %v609 = vld [vmem:[#allocation3 + $0xe20] sm:$0xff]
    %v610 = vld [vmem:[#allocation3 + $0xe28] sm:$0xff]
    %v611 = vld [vmem:[#allocation3 + $0xe30] sm:$0xff]
    %v612 = vld [vmem:[#allocation3 + $0xe38] sm:$0xff]
    %v613 = vld [vmem:[#allocation3 + $0xe40] sm:$0xff]
    %v614 = vld [vmem:[#allocation3 + $0xe48] sm:$0xff]
    %v615 = vld [vmem:[#allocation3 + $0xe50] sm:$0xff]
    %v616 = vld [vmem:[#allocation3 + $0xe58] sm:$0xff]
    %v617 = vld [vmem:[#allocation3 + $0xe60] sm:$0xff]
    %v618 = vld [vmem:[#allocation3 + $0xe68] sm:$0xff]
    %v619 = vld [vmem:[#allocation3 + $0xe70] sm:$0xff]
    %v620 = vld [vmem:[#allocation3 + $0xe78] sm:$0xff]
    %v621 = vld [vmem:[#allocation3 + $0xe80] sm:$0xff]
    %v622 = vld [vmem:[#allocation3 + $0xe88] sm:$0xff]
    %v623 = vld [vmem:[#allocation3 + $0xe90] sm:$0xff]
    %v624 = vld [vmem:[#allocation3 + $0xe98] sm:$0xff]
    %v625 = vld [vmem:[#allocation3 + $0xea0] sm:$0xff]
    %v626 = vld [vmem:[#allocation3 + $0xea8] sm:$0xff]
    %v627 = vld [vmem:[#allocation3 + $0xeb0] sm:$0xff]
    %v628 = vld [vmem:[#allocation3 + $0xeb8] sm:$0xff]
    %v629 = vld [vmem:[#allocation3 + $0xec0] sm:$0xff]
    %v630 = vld [vmem:[#allocation3 + $0xec8] sm:$0xff]
    %v631 = vld [vmem:[#allocation3 + $0xed0] sm:$0xff]
    %v632 = vld [vmem:[#allocation3 + $0xed8] sm:$0xff]
    %v633 = vld [vmem:[#allocation3 + $0xee0] sm:$0xff]
    %v634 = vld [vmem:[#allocation3 + $0xee8] sm:$0xff]
    %v635 = vld [vmem:[#allocation3 + $0xef0] sm:$0xff]
    %v636 = vld [vmem:[#allocation3 + $0xef8] sm:$0xff]
    %v637 = vld [vmem:[#allocation3 + $0xf00] sm:$0xff]
    %v638 = vld [vmem:[#allocation3 + $0xf08] sm:$0xff]
    %v639 = vld [vmem:[#allocation3 + $0xf10] sm:$0xff]
    %v640 = vld [vmem:[#allocation3 + $0xf18] sm:$0xff]
    %v641 = vld [vmem:[#allocation3 + $0xf20] sm:$0xff]
    %v642 = vld [vmem:[#allocation3 + $0xf28] sm:$0xff]
    %v643 = vld [vmem:[#allocation3 + $0xf30] sm:$0xff]
    %v644 = vld [vmem:[#allocation3 + $0xf38] sm:$0xff]
    %v645 = vld [vmem:[#allocation3 + $0xf40] sm:$0xff]
    %v646 = vld [vmem:[#allocation3 + $0xf48] sm:$0xff]
    %v647 = vld [vmem:[#allocation3 + $0xf50] sm:$0xff]
    %v648 = vld [vmem:[#allocation3 + $0xf58] sm:$0xff]
    %v649 = vld [vmem:[#allocation3 + $0xf60] sm:$0xff]
    %v650 = vld [vmem:[#allocation3 + $0xf68] sm:$0xff]
    %v651 = vld [vmem:[#allocation3 + $0xf70] sm:$0xff]
    %v652 = vld [vmem:[#allocation3 + $0xf78] sm:$0xff]
    %v653 = vld [vmem:[#allocation3 + $0xf80] sm:$0xff]
    %v654 = vld [vmem:[#allocation3 + $0xf88] sm:$0xff]
    %v655 = vld [vmem:[#allocation3 + $0xf90] sm:$0xff]
    %v656 = vld [vmem:[#allocation3 + $0xf98] sm:$0xff]
    %v657 = vld [vmem:[#allocation3 + $0xfa0] sm:$0xff]
    %v658 = vld [vmem:[#allocation3 + $0xfa8] sm:$0xff]
    %v659 = vld [vmem:[#allocation3 + $0xfb0] sm:$0xff]
    %v660 = vld [vmem:[#allocation3 + $0xfb8] sm:$0xff]
    %v661 = vld [vmem:[#allocation3 + $0xfc0] sm:$0xff]
    %v662 = vld [vmem:[#allocation3 + $0xfc8] sm:$0xff]
    %v663 = vld [vmem:[#allocation3 + $0xfd0] sm:$0xff]
    %v664 = vld [vmem:[#allocation3 + $0xfd8] sm:$0xff]
    %v665 = vld [vmem:[#allocation3 + $0xfe0] sm:$0xff]
    %v666 = vld [vmem:[#allocation3 + $0xfe8] sm:$0xff]
    %v667 = vld [vmem:[#allocation3 + $0xff0] sm:$0xff]
    %v668 = vld [vmem:[#allocation3 + $0xff8] sm:$0xff]
    %v1181 = vunpack.c.l.b16 %v157
    %v1182 = vunpack.c.h.b16 %v157
    %v1183 = vunpack.c.l.b16 %v158
    %v1184 = vunpack.c.h.b16 %v158
    %v1185 = vunpack.c.l.b16 %v159
    %v1186 = vunpack.c.h.b16 %v159
    %v1187 = vunpack.c.l.b16 %v160
    %v1188 = vunpack.c.h.b16 %v160
    %v1189 = vunpack.c.l.b16 %v161
    %v1190 = vunpack.c.h.b16 %v161
    %v1191 = vunpack.c.l.b16 %v162
    %v1192 = vunpack.c.h.b16 %v162
    %v1193 = vunpack.c.l.b16 %v163
    %v1194 = vunpack.c.h.b16 %v163
    %v1195 = vunpack.c.l.b16 %v164
    %v1196 = vunpack.c.h.b16 %v164
    %v1197 = vunpack.c.l.b16 %v165
    %v1198 = vunpack.c.h.b16 %v165
    %v1199 = vunpack.c.l.b16 %v166
    %v1200 = vunpack.c.h.b16 %v166
    %v1201 = vunpack.c.l.b16 %v167
    %v1202 = vunpack.c.h.b16 %v167
    %v1203 = vunpack.c.l.b16 %v168
    %v1204 = vunpack.c.h.b16 %v168
    %v1205 = vunpack.c.l.b16 %v169
    %v1206 = vunpack.c.h.b16 %v169
    %v1207 = vunpack.c.l.b16 %v170
    %v1208 = vunpack.c.h.b16 %v170
    %v1209 = vunpack.c.l.b16 %v171
    %v1210 = vunpack.c.h.b16 %v171
    %v1211 = vunpack.c.l.b16 %v172
    %v1212 = vunpack.c.h.b16 %v172
    %v1213 = vunpack.c.l.b16 %v173
    %v1214 = vunpack.c.h.b16 %v173
    %v1215 = vunpack.c.l.b16 %v174
    %v1216 = vunpack.c.h.b16 %v174
    %v1217 = vunpack.c.l.b16 %v175
    %v1218 = vunpack.c.h.b16 %v175
    %v1219 = vunpack.c.l.b16 %v176
    %v1220 = vunpack.c.h.b16 %v176
    %v1221 = vunpack.c.l.b16 %v177
    %v1222 = vunpack.c.h.b16 %v177
    %v1223 = vunpack.c.l.b16 %v178
    %v1224 = vunpack.c.h.b16 %v178
    %v1225 = vunpack.c.l.b16 %v179
    %v1226 = vunpack.c.h.b16 %v179
    %v1227 = vunpack.c.l.b16 %v180
    %v1228 = vunpack.c.h.b16 %v180
    %v1229 = vunpack.c.l.b16 %v181
    %v1230 = vunpack.c.h.b16 %v181
    %v1231 = vunpack.c.l.b16 %v182
    %v1232 = vunpack.c.h.b16 %v182
    %v1233 = vunpack.c.l.b16 %v183
    %v1234 = vunpack.c.h.b16 %v183
    %v1235 = vunpack.c.l.b16 %v184
    %v1236 = vunpack.c.h.b16 %v184
    %v1237 = vunpack.c.l.b16 %v185
    %v1238 = vunpack.c.h.b16 %v185
    %v1239 = vunpack.c.l.b16 %v186
    %v1240 = vunpack.c.h.b16 %v186
    %v1241 = vunpack.c.l.b16 %v187
    %v1242 = vunpack.c.h.b16 %v187
    %v1243 = vunpack.c.l.b16 %v188
    %v1244 = vunpack.c.h.b16 %v188
    %v1245 = vunpack.c.l.b16 %v189
    %v1246 = vunpack.c.h.b16 %v189
    %v1247 = vunpack.c.l.b16 %v190
    %v1248 = vunpack.c.h.b16 %v190
    %v1249 = vunpack.c.l.b16 %v191
    %v1250 = vunpack.c.h.b16 %v191
    %v1251 = vunpack.c.l.b16 %v192
    %v1252 = vunpack.c.h.b16 %v192
    %v1253 = vunpack.c.l.b16 %v193
    %v1254 = vunpack.c.h.b16 %v193
    %v1255 = vunpack.c.l.b16 %v194
    %v1256 = vunpack.c.h.b16 %v194
    %v1257 = vunpack.c.l.b16 %v195
    %v1258 = vunpack.c.h.b16 %v195
    %v1259 = vunpack.c.l.b16 %v196
    %v1260 = vunpack.c.h.b16 %v196
    %v1261 = vunpack.c.l.b16 %v197
    %v1262 = vunpack.c.h.b16 %v197
    %v1263 = vunpack.c.l.b16 %v198
    %v1264 = vunpack.c.h.b16 %v198
    %v1265 = vunpack.c.l.b16 %v199
    %v1266 = vunpack.c.h.b16 %v199
    %v1267 = vunpack.c.l.b16 %v200
    %v1268 = vunpack.c.h.b16 %v200
    %v1269 = vunpack.c.l.b16 %v201
    %v1270 = vunpack.c.h.b16 %v201
    %v1271 = vunpack.c.l.b16 %v202
    %v1272 = vunpack.c.h.b16 %v202
    %v1273 = vunpack.c.l.b16 %v203
    %v1274 = vunpack.c.h.b16 %v203
    %v1275 = vunpack.c.l.b16 %v204
    %v1276 = vunpack.c.h.b16 %v204
    %v1277 = vunpack.c.l.b16 %v205
    %v1278 = vunpack.c.h.b16 %v205
    %v1279 = vunpack.c.l.b16 %v206
    %v1280 = vunpack.c.h.b16 %v206
    %v1281 = vunpack.c.l.b16 %v207
    %v1282 = vunpack.c.h.b16 %v207
    %v1283 = vunpack.c.l.b16 %v208
    %v1284 = vunpack.c.h.b16 %v208
    %v1285 = vunpack.c.l.b16 %v209
    %v1286 = vunpack.c.h.b16 %v209
    %v1287 = vunpack.c.l.b16 %v210
    %v1288 = vunpack.c.h.b16 %v210
    %v1289 = vunpack.c.l.b16 %v211
    %v1290 = vunpack.c.h.b16 %v211
    %v1291 = vunpack.c.l.b16 %v212
    %v1292 = vunpack.c.h.b16 %v212
    %v1293 = vunpack.c.l.b16 %v213
    %v1294 = vunpack.c.h.b16 %v213
    %v1295 = vunpack.c.l.b16 %v214
    %v1296 = vunpack.c.h.b16 %v214
    %v1297 = vunpack.c.l.b16 %v215
    %v1298 = vunpack.c.h.b16 %v215
    %v1299 = vunpack.c.l.b16 %v216
    %v1300 = vunpack.c.h.b16 %v216
    %v1301 = vunpack.c.l.b16 %v217
    %v1302 = vunpack.c.h.b16 %v217
    %v1303 = vunpack.c.l.b16 %v218
    %v1304 = vunpack.c.h.b16 %v218
    %v1305 = vunpack.c.l.b16 %v219
    %v1306 = vunpack.c.h.b16 %v219
    %v1307 = vunpack.c.l.b16 %v220
    %v1308 = vunpack.c.h.b16 %v220
    %v1309 = vunpack.c.l.b16 %v221
    %v1310 = vunpack.c.h.b16 %v221
    %v1311 = vunpack.c.l.b16 %v222
    %v1312 = vunpack.c.h.b16 %v222
    %v1313 = vunpack.c.l.b16 %v223
    %v1314 = vunpack.c.h.b16 %v223
    %v1315 = vunpack.c.l.b16 %v224
    %v1316 = vunpack.c.h.b16 %v224
    %v1317 = vunpack.c.l.b16 %v225
    %v1318 = vunpack.c.h.b16 %v225
    %v1319 = vunpack.c.l.b16 %v226
    %v1320 = vunpack.c.h.b16 %v226
    %v1321 = vunpack.c.l.b16 %v227
    %v1322 = vunpack.c.h.b16 %v227
    %v1323 = vunpack.c.l.b16 %v228
    %v1324 = vunpack.c.h.b16 %v228
    %v1325 = vunpack.c.l.b16 %v229
    %v1326 = vunpack.c.h.b16 %v229
    %v1327 = vunpack.c.l.b16 %v230
    %v1328 = vunpack.c.h.b16 %v230
    %v1329 = vunpack.c.l.b16 %v231
    %v1330 = vunpack.c.h.b16 %v231
    %v1331 = vunpack.c.l.b16 %v232
    %v1332 = vunpack.c.h.b16 %v232
    %v1333 = vunpack.c.l.b16 %v233
    %v1334 = vunpack.c.h.b16 %v233
    %v1335 = vunpack.c.l.b16 %v234
    %v1336 = vunpack.c.h.b16 %v234
    %v1337 = vunpack.c.l.b16 %v235
    %v1338 = vunpack.c.h.b16 %v235
    %v1339 = vunpack.c.l.b16 %v236
    %v1340 = vunpack.c.h.b16 %v236
    %v1341 = vunpack.c.l.b16 %v237
    %v1342 = vunpack.c.h.b16 %v237
    %v1343 = vunpack.c.l.b16 %v238
    %v1344 = vunpack.c.h.b16 %v238
    %v1345 = vunpack.c.l.b16 %v239
    %v1346 = vunpack.c.h.b16 %v239
    %v1347 = vunpack.c.l.b16 %v240
    %v1348 = vunpack.c.h.b16 %v240
    %v1349 = vunpack.c.l.b16 %v241
    %v1350 = vunpack.c.h.b16 %v241
    %v1351 = vunpack.c.l.b16 %v242
    %v1352 = vunpack.c.h.b16 %v242
    %v1353 = vunpack.c.l.b16 %v243
    %v1354 = vunpack.c.h.b16 %v243
    %v1355 = vunpack.c.l.b16 %v244
    %v1356 = vunpack.c.h.b16 %v244
    %v1357 = vunpack.c.l.b16 %v245
    %v1358 = vunpack.c.h.b16 %v245
    %v1359 = vunpack.c.l.b16 %v246
    %v1360 = vunpack.c.h.b16 %v246
    %v1361 = vunpack.c.l.b16 %v247
    %v1362 = vunpack.c.h.b16 %v247
    %v1363 = vunpack.c.l.b16 %v248
    %v1364 = vunpack.c.h.b16 %v248
    %v1365 = vunpack.c.l.b16 %v249
    %v1366 = vunpack.c.h.b16 %v249
    %v1367 = vunpack.c.l.b16 %v250
    %v1368 = vunpack.c.h.b16 %v250
    %v1369 = vunpack.c.l.b16 %v251
    %v1370 = vunpack.c.h.b16 %v251
    %v1371 = vunpack.c.l.b16 %v252
    %v1372 = vunpack.c.h.b16 %v252
    %v1373 = vunpack.c.l.b16 %v253
    %v1374 = vunpack.c.h.b16 %v253
    %v1375 = vunpack.c.l.b16 %v254
    %v1376 = vunpack.c.h.b16 %v254
    %v1377 = vunpack.c.l.b16 %v255
    %v1378 = vunpack.c.h.b16 %v255
    %v1379 = vunpack.c.l.b16 %v256
    %v1380 = vunpack.c.h.b16 %v256
    %v1381 = vunpack.c.l.b16 %v257
    %v1382 = vunpack.c.h.b16 %v257
    %v1383 = vunpack.c.l.b16 %v258
    %v1384 = vunpack.c.h.b16 %v258
    %v1385 = vunpack.c.l.b16 %v259
    %v1386 = vunpack.c.h.b16 %v259
    %v1387 = vunpack.c.l.b16 %v260
    %v1388 = vunpack.c.h.b16 %v260
    %v1389 = vunpack.c.l.b16 %v261
    %v1390 = vunpack.c.h.b16 %v261
    %v1391 = vunpack.c.l.b16 %v262
    %v1392 = vunpack.c.h.b16 %v262
    %v1393 = vunpack.c.l.b16 %v263
    %v1394 = vunpack.c.h.b16 %v263
    %v1395 = vunpack.c.l.b16 %v264
    %v1396 = vunpack.c.h.b16 %v264
    %v1397 = vunpack.c.l.b16 %v265
    %v1398 = vunpack.c.h.b16 %v265
    %v1399 = vunpack.c.l.b16 %v266
    %v1400 = vunpack.c.h.b16 %v266
    %v1401 = vunpack.c.l.b16 %v267
    %v1402 = vunpack.c.h.b16 %v267
    %v1403 = vunpack.c.l.b16 %v268
    %v1404 = vunpack.c.h.b16 %v268
    %v1405 = vunpack.c.l.b16 %v269
    %v1406 = vunpack.c.h.b16 %v269
    %v1407 = vunpack.c.l.b16 %v270
    %v1408 = vunpack.c.h.b16 %v270
    %v1409 = vunpack.c.l.b16 %v271
    %v1410 = vunpack.c.h.b16 %v271
    %v1411 = vunpack.c.l.b16 %v272
    %v1412 = vunpack.c.h.b16 %v272
    %v1413 = vunpack.c.l.b16 %v273
    %v1414 = vunpack.c.h.b16 %v273
    %v1415 = vunpack.c.l.b16 %v274
    %v1416 = vunpack.c.h.b16 %v274
    %v1417 = vunpack.c.l.b16 %v275
    %v1418 = vunpack.c.h.b16 %v275
    %v1419 = vunpack.c.l.b16 %v276
    %v1420 = vunpack.c.h.b16 %v276
    %v1421 = vunpack.c.l.b16 %v277
    %v1422 = vunpack.c.h.b16 %v277
    %v1423 = vunpack.c.l.b16 %v278
    %v1424 = vunpack.c.h.b16 %v278
    %v1425 = vunpack.c.l.b16 %v279
    %v1426 = vunpack.c.h.b16 %v279
    %v1427 = vunpack.c.l.b16 %v280
    %v1428 = vunpack.c.h.b16 %v280
    %v1429 = vunpack.c.l.b16 %v281
    %v1430 = vunpack.c.h.b16 %v281
    %v1431 = vunpack.c.l.b16 %v282
    %v1432 = vunpack.c.h.b16 %v282
    %v1433 = vunpack.c.l.b16 %v283
    %v1434 = vunpack.c.h.b16 %v283
    %v1435 = vunpack.c.l.b16 %v284
    %v1436 = vunpack.c.h.b16 %v284
    %v1437 = vunpack.c.l.b16 %v285
    %v1438 = vunpack.c.h.b16 %v285
    %v1439 = vunpack.c.l.b16 %v286
    %v1440 = vunpack.c.h.b16 %v286
    %v1441 = vunpack.c.l.b16 %v287
    %v1442 = vunpack.c.h.b16 %v287
    %v1443 = vunpack.c.l.b16 %v288
    %v1444 = vunpack.c.h.b16 %v288
    %v1445 = vunpack.c.l.b16 %v289
    %v1446 = vunpack.c.h.b16 %v289
    %v1447 = vunpack.c.l.b16 %v290
    %v1448 = vunpack.c.h.b16 %v290
    %v1449 = vunpack.c.l.b16 %v291
    %v1450 = vunpack.c.h.b16 %v291
    %v1451 = vunpack.c.l.b16 %v292
    %v1452 = vunpack.c.h.b16 %v292
    %v1453 = vunpack.c.l.b16 %v293
    %v1454 = vunpack.c.h.b16 %v293
    %v1455 = vunpack.c.l.b16 %v294
    %v1456 = vunpack.c.h.b16 %v294
    %v1457 = vunpack.c.l.b16 %v295
    %v1458 = vunpack.c.h.b16 %v295
    %v1459 = vunpack.c.l.b16 %v296
    %v1460 = vunpack.c.h.b16 %v296
    %v1461 = vunpack.c.l.b16 %v297
    %v1462 = vunpack.c.h.b16 %v297
    %v1463 = vunpack.c.l.b16 %v298
    %v1464 = vunpack.c.h.b16 %v298
    %v1465 = vunpack.c.l.b16 %v299
    %v1466 = vunpack.c.h.b16 %v299
    %v1467 = vunpack.c.l.b16 %v300
    %v1468 = vunpack.c.h.b16 %v300
    %v1469 = vunpack.c.l.b16 %v301
    %v1470 = vunpack.c.h.b16 %v301
    %v1471 = vunpack.c.l.b16 %v302
    %v1472 = vunpack.c.h.b16 %v302
    %v1473 = vunpack.c.l.b16 %v303
    %v1474 = vunpack.c.h.b16 %v303
    %v1475 = vunpack.c.l.b16 %v304
    %v1476 = vunpack.c.h.b16 %v304
    %v1477 = vunpack.c.l.b16 %v305
    %v1478 = vunpack.c.h.b16 %v305
    %v1479 = vunpack.c.l.b16 %v306
    %v1480 = vunpack.c.h.b16 %v306
    %v1481 = vunpack.c.l.b16 %v307
    %v1482 = vunpack.c.h.b16 %v307
    %v1483 = vunpack.c.l.b16 %v308
    %v1484 = vunpack.c.h.b16 %v308
    %v1485 = vunpack.c.l.b16 %v309
    %v1486 = vunpack.c.h.b16 %v309
    %v1487 = vunpack.c.l.b16 %v310
    %v1488 = vunpack.c.h.b16 %v310
    %v1489 = vunpack.c.l.b16 %v311
    %v1490 = vunpack.c.h.b16 %v311
    %v1491 = vunpack.c.l.b16 %v312
    %v1492 = vunpack.c.h.b16 %v312
    %v1493 = vunpack.c.l.b16 %v313
    %v1494 = vunpack.c.h.b16 %v313
    %v1495 = vunpack.c.l.b16 %v314
    %v1496 = vunpack.c.h.b16 %v314
    %v1497 = vunpack.c.l.b16 %v315
    %v1498 = vunpack.c.h.b16 %v315
    %v1499 = vunpack.c.l.b16 %v316
    %v1500 = vunpack.c.h.b16 %v316
    %v1501 = vunpack.c.l.b16 %v317
    %v1502 = vunpack.c.h.b16 %v317
    %v1503 = vunpack.c.l.b16 %v318
    %v1504 = vunpack.c.h.b16 %v318
    %v1505 = vunpack.c.l.b16 %v319
    %v1506 = vunpack.c.h.b16 %v319
    %v1507 = vunpack.c.l.b16 %v320
    %v1508 = vunpack.c.h.b16 %v320
    %v1509 = vunpack.c.l.b16 %v321
    %v1510 = vunpack.c.h.b16 %v321
    %v1511 = vunpack.c.l.b16 %v322
    %v1512 = vunpack.c.h.b16 %v322
    %v1513 = vunpack.c.l.b16 %v323
    %v1514 = vunpack.c.h.b16 %v323
    %v1515 = vunpack.c.l.b16 %v324
    %v1516 = vunpack.c.h.b16 %v324
    %v1517 = vunpack.c.l.b16 %v325
    %v1518 = vunpack.c.h.b16 %v325
    %v1519 = vunpack.c.l.b16 %v326
    %v1520 = vunpack.c.h.b16 %v326
    %v1521 = vunpack.c.l.b16 %v327
    %v1522 = vunpack.c.h.b16 %v327
    %v1523 = vunpack.c.l.b16 %v328
    %v1524 = vunpack.c.h.b16 %v328
    %v1525 = vunpack.c.l.b16 %v329
    %v1526 = vunpack.c.h.b16 %v329
    %v1527 = vunpack.c.l.b16 %v330
    %v1528 = vunpack.c.h.b16 %v330
    %v1529 = vunpack.c.l.b16 %v331
    %v1530 = vunpack.c.h.b16 %v331
    %v1531 = vunpack.c.l.b16 %v332
    %v1532 = vunpack.c.h.b16 %v332
    %v1533 = vunpack.c.l.b16 %v333
    %v1534 = vunpack.c.h.b16 %v333
    %v1535 = vunpack.c.l.b16 %v334
    %v1536 = vunpack.c.h.b16 %v334
    %v1537 = vunpack.c.l.b16 %v335
    %v1538 = vunpack.c.h.b16 %v335
    %v1539 = vunpack.c.l.b16 %v336
    %v1540 = vunpack.c.h.b16 %v336
    %v1541 = vunpack.c.l.b16 %v337
    %v1542 = vunpack.c.h.b16 %v337
    %v1543 = vunpack.c.l.b16 %v338
    %v1544 = vunpack.c.h.b16 %v338
    %v1545 = vunpack.c.l.b16 %v339
    %v1546 = vunpack.c.h.b16 %v339
    %v1547 = vunpack.c.l.b16 %v340
    %v1548 = vunpack.c.h.b16 %v340
    %v1549 = vunpack.c.l.b16 %v341
    %v1550 = vunpack.c.h.b16 %v341
    %v1551 = vunpack.c.l.b16 %v342
    %v1552 = vunpack.c.h.b16 %v342
    %v1553 = vunpack.c.l.b16 %v343
    %v1554 = vunpack.c.h.b16 %v343
    %v1555 = vunpack.c.l.b16 %v344
    %v1556 = vunpack.c.h.b16 %v344
    %v1557 = vunpack.c.l.b16 %v345
    %v1558 = vunpack.c.h.b16 %v345
    %v1559 = vunpack.c.l.b16 %v346
    %v1560 = vunpack.c.h.b16 %v346
    %v1561 = vunpack.c.l.b16 %v347
    %v1562 = vunpack.c.h.b16 %v347
    %v1563 = vunpack.c.l.b16 %v348
    %v1564 = vunpack.c.h.b16 %v348
    %v1565 = vunpack.c.l.b16 %v349
    %v1566 = vunpack.c.h.b16 %v349
    %v1567 = vunpack.c.l.b16 %v350
    %v1568 = vunpack.c.h.b16 %v350
    %v1569 = vunpack.c.l.b16 %v351
    %v1570 = vunpack.c.h.b16 %v351
    %v1571 = vunpack.c.l.b16 %v352
    %v1572 = vunpack.c.h.b16 %v352
    %v1573 = vunpack.c.l.b16 %v353
    %v1574 = vunpack.c.h.b16 %v353
    %v1575 = vunpack.c.l.b16 %v354
    %v1576 = vunpack.c.h.b16 %v354
    %v1577 = vunpack.c.l.b16 %v355
    %v1578 = vunpack.c.h.b16 %v355
    %v1579 = vunpack.c.l.b16 %v356
    %v1580 = vunpack.c.h.b16 %v356
    %v1581 = vunpack.c.l.b16 %v357
    %v1582 = vunpack.c.h.b16 %v357
    %v1583 = vunpack.c.l.b16 %v358
    %v1584 = vunpack.c.h.b16 %v358
    %v1585 = vunpack.c.l.b16 %v359
    %v1586 = vunpack.c.h.b16 %v359
    %v1587 = vunpack.c.l.b16 %v360
    %v1588 = vunpack.c.h.b16 %v360
    %v1589 = vunpack.c.l.b16 %v361
    %v1590 = vunpack.c.h.b16 %v361
    %v1591 = vunpack.c.l.b16 %v362
    %v1592 = vunpack.c.h.b16 %v362
    %v1593 = vunpack.c.l.b16 %v363
    %v1594 = vunpack.c.h.b16 %v363
    %v1595 = vunpack.c.l.b16 %v364
    %v1596 = vunpack.c.h.b16 %v364
    %v1597 = vunpack.c.l.b16 %v365
    %v1598 = vunpack.c.h.b16 %v365
    %v1599 = vunpack.c.l.b16 %v366
    %v1600 = vunpack.c.h.b16 %v366
    %v1601 = vunpack.c.l.b16 %v367
    %v1602 = vunpack.c.h.b16 %v367
    %v1603 = vunpack.c.l.b16 %v368
    %v1604 = vunpack.c.h.b16 %v368
    %v1605 = vunpack.c.l.b16 %v369
    %v1606 = vunpack.c.h.b16 %v369
    %v1607 = vunpack.c.l.b16 %v370
    %v1608 = vunpack.c.h.b16 %v370
    %v1609 = vunpack.c.l.b16 %v371
    %v1610 = vunpack.c.h.b16 %v371
    %v1611 = vunpack.c.l.b16 %v372
    %v1612 = vunpack.c.h.b16 %v372
    %v1613 = vunpack.c.l.b16 %v373
    %v1614 = vunpack.c.h.b16 %v373
    %v1615 = vunpack.c.l.b16 %v374
    %v1616 = vunpack.c.h.b16 %v374
    %v1617 = vunpack.c.l.b16 %v375
    %v1618 = vunpack.c.h.b16 %v375
    %v1619 = vunpack.c.l.b16 %v376
    %v1620 = vunpack.c.h.b16 %v376
    %v1621 = vunpack.c.l.b16 %v377
    %v1622 = vunpack.c.h.b16 %v377
    %v1623 = vunpack.c.l.b16 %v378
    %v1624 = vunpack.c.h.b16 %v378
    %v1625 = vunpack.c.l.b16 %v379
    %v1626 = vunpack.c.h.b16 %v379
    %v1627 = vunpack.c.l.b16 %v380
    %v1628 = vunpack.c.h.b16 %v380
    %v1629 = vunpack.c.l.b16 %v381
    %v1630 = vunpack.c.h.b16 %v381
    %v1631 = vunpack.c.l.b16 %v382
    %v1632 = vunpack.c.h.b16 %v382
    %v1633 = vunpack.c.l.b16 %v383
    %v1634 = vunpack.c.h.b16 %v383
    %v1635 = vunpack.c.l.b16 %v384
    %v1636 = vunpack.c.h.b16 %v384
    %v1637 = vunpack.c.l.b16 %v385
    %v1638 = vunpack.c.h.b16 %v385
    %v1639 = vunpack.c.l.b16 %v386
    %v1640 = vunpack.c.h.b16 %v386
    %v1641 = vunpack.c.l.b16 %v387
    %v1642 = vunpack.c.h.b16 %v387
    %v1643 = vunpack.c.l.b16 %v388
    %v1644 = vunpack.c.h.b16 %v388
    %v1645 = vunpack.c.l.b16 %v389
    %v1646 = vunpack.c.h.b16 %v389
    %v1647 = vunpack.c.l.b16 %v390
    %v1648 = vunpack.c.h.b16 %v390
    %v1649 = vunpack.c.l.b16 %v391
    %v1650 = vunpack.c.h.b16 %v391
    %v1651 = vunpack.c.l.b16 %v392
    %v1652 = vunpack.c.h.b16 %v392
    %v1653 = vunpack.c.l.b16 %v393
    %v1654 = vunpack.c.h.b16 %v393
    %v1655 = vunpack.c.l.b16 %v394
    %v1656 = vunpack.c.h.b16 %v394
    %v1657 = vunpack.c.l.b16 %v395
    %v1658 = vunpack.c.h.b16 %v395
    %v1659 = vunpack.c.l.b16 %v396
    %v1660 = vunpack.c.h.b16 %v396
    %v1661 = vunpack.c.l.b16 %v397
    %v1662 = vunpack.c.h.b16 %v397
    %v1663 = vunpack.c.l.b16 %v398
    %v1664 = vunpack.c.h.b16 %v398
    %v1665 = vunpack.c.l.b16 %v399
    %v1666 = vunpack.c.h.b16 %v399
    %v1667 = vunpack.c.l.b16 %v400
    %v1668 = vunpack.c.h.b16 %v400
    %v1669 = vunpack.c.l.b16 %v401
    %v1670 = vunpack.c.h.b16 %v401
    %v1671 = vunpack.c.l.b16 %v402
    %v1672 = vunpack.c.h.b16 %v402
    %v1673 = vunpack.c.l.b16 %v403
    %v1674 = vunpack.c.h.b16 %v403
    %v1675 = vunpack.c.l.b16 %v404
    %v1676 = vunpack.c.h.b16 %v404
    %v1677 = vunpack.c.l.b16 %v405
    %v1678 = vunpack.c.h.b16 %v405
    %v1679 = vunpack.c.l.b16 %v406
    %v1680 = vunpack.c.h.b16 %v406
    %v1681 = vunpack.c.l.b16 %v407
    %v1682 = vunpack.c.h.b16 %v407
    %v1683 = vunpack.c.l.b16 %v408
    %v1684 = vunpack.c.h.b16 %v408
    %v1685 = vunpack.c.l.b16 %v409
    %v1686 = vunpack.c.h.b16 %v409
    %v1687 = vunpack.c.l.b16 %v410
    %v1688 = vunpack.c.h.b16 %v410
    %v1689 = vunpack.c.l.b16 %v411
    %v1690 = vunpack.c.h.b16 %v411
    %v1691 = vunpack.c.l.b16 %v412
    %v1692 = vunpack.c.h.b16 %v412
    %v1693 = vunpack.c.l.b16 %v413
    %v1694 = vunpack.c.h.b16 %v413
    %v1695 = vunpack.c.l.b16 %v414
    %v1696 = vunpack.c.h.b16 %v414
    %v1697 = vunpack.c.l.b16 %v415
    %v1698 = vunpack.c.h.b16 %v415
    %v1699 = vunpack.c.l.b16 %v416
    %v1700 = vunpack.c.h.b16 %v416
    %v1701 = vunpack.c.l.b16 %v417
    %v1702 = vunpack.c.h.b16 %v417
    %v1703 = vunpack.c.l.b16 %v418
    %v1704 = vunpack.c.h.b16 %v418
    %v1705 = vunpack.c.l.b16 %v419
    %v1706 = vunpack.c.h.b16 %v419
    %v1707 = vunpack.c.l.b16 %v420
    %v1708 = vunpack.c.h.b16 %v420
    %v1709 = vunpack.c.l.b16 %v421
    %v1710 = vunpack.c.h.b16 %v421
    %v1711 = vunpack.c.l.b16 %v422
    %v1712 = vunpack.c.h.b16 %v422
    %v1713 = vunpack.c.l.b16 %v423
    %v1714 = vunpack.c.h.b16 %v423
    %v1715 = vunpack.c.l.b16 %v424
    %v1716 = vunpack.c.h.b16 %v424
    %v1717 = vunpack.c.l.b16 %v425
    %v1718 = vunpack.c.h.b16 %v425
    %v1719 = vunpack.c.l.b16 %v426
    %v1720 = vunpack.c.h.b16 %v426
    %v1721 = vunpack.c.l.b16 %v427
    %v1722 = vunpack.c.h.b16 %v427
    %v1723 = vunpack.c.l.b16 %v428
    %v1724 = vunpack.c.h.b16 %v428
    %v1725 = vunpack.c.l.b16 %v429
    %v1726 = vunpack.c.h.b16 %v429
    %v1727 = vunpack.c.l.b16 %v430
    %v1728 = vunpack.c.h.b16 %v430
    %v1729 = vunpack.c.l.b16 %v431
    %v1730 = vunpack.c.h.b16 %v431
    %v1731 = vunpack.c.l.b16 %v432
    %v1732 = vunpack.c.h.b16 %v432
    %v1733 = vunpack.c.l.b16 %v433
    %v1734 = vunpack.c.h.b16 %v433
    %v1735 = vunpack.c.l.b16 %v434
    %v1736 = vunpack.c.h.b16 %v434
    %v1737 = vunpack.c.l.b16 %v435
    %v1738 = vunpack.c.h.b16 %v435
    %v1739 = vunpack.c.l.b16 %v436
    %v1740 = vunpack.c.h.b16 %v436
    %v1741 = vunpack.c.l.b16 %v437
    %v1742 = vunpack.c.h.b16 %v437
    %v1743 = vunpack.c.l.b16 %v438
    %v1744 = vunpack.c.h.b16 %v438
    %v1745 = vunpack.c.l.b16 %v439
    %v1746 = vunpack.c.h.b16 %v439
    %v1747 = vunpack.c.l.b16 %v440
    %v1748 = vunpack.c.h.b16 %v440
    %v1749 = vunpack.c.l.b16 %v441
    %v1750 = vunpack.c.h.b16 %v441
    %v1751 = vunpack.c.l.b16 %v442
    %v1752 = vunpack.c.h.b16 %v442
    %v1753 = vunpack.c.l.b16 %v443
    %v1754 = vunpack.c.h.b16 %v443
    %v1755 = vunpack.c.l.b16 %v444
    %v1756 = vunpack.c.h.b16 %v444
    %v1757 = vunpack.c.l.b16 %v445
    %v1758 = vunpack.c.h.b16 %v445
    %v1759 = vunpack.c.l.b16 %v446
    %v1760 = vunpack.c.h.b16 %v446
    %v1761 = vunpack.c.l.b16 %v447
    %v1762 = vunpack.c.h.b16 %v447
    %v1763 = vunpack.c.l.b16 %v448
    %v1764 = vunpack.c.h.b16 %v448
    %v1765 = vunpack.c.l.b16 %v449
    %v1766 = vunpack.c.h.b16 %v449
    %v1767 = vunpack.c.l.b16 %v450
    %v1768 = vunpack.c.h.b16 %v450
    %v1769 = vunpack.c.l.b16 %v451
    %v1770 = vunpack.c.h.b16 %v451
    %v1771 = vunpack.c.l.b16 %v452
    %v1772 = vunpack.c.h.b16 %v452
    %v1773 = vunpack.c.l.b16 %v453
    %v1774 = vunpack.c.h.b16 %v453
    %v1775 = vunpack.c.l.b16 %v454
    %v1776 = vunpack.c.h.b16 %v454
    %v1777 = vunpack.c.l.b16 %v455
    %v1778 = vunpack.c.h.b16 %v455
    %v1779 = vunpack.c.l.b16 %v456
    %v1780 = vunpack.c.h.b16 %v456
    %v1781 = vunpack.c.l.b16 %v457
    %v1782 = vunpack.c.h.b16 %v457
    %v1783 = vunpack.c.l.b16 %v458
    %v1784 = vunpack.c.h.b16 %v458
    %v1785 = vunpack.c.l.b16 %v459
    %v1786 = vunpack.c.h.b16 %v459
    %v1787 = vunpack.c.l.b16 %v460
    %v1788 = vunpack.c.h.b16 %v460
    %v1789 = vunpack.c.l.b16 %v461
    %v1790 = vunpack.c.h.b16 %v461
    %v1791 = vunpack.c.l.b16 %v462
    %v1792 = vunpack.c.h.b16 %v462
    %v1793 = vunpack.c.l.b16 %v463
    %v1794 = vunpack.c.h.b16 %v463
    %v1795 = vunpack.c.l.b16 %v464
    %v1796 = vunpack.c.h.b16 %v464
    %v1797 = vunpack.c.l.b16 %v465
    %v1798 = vunpack.c.h.b16 %v465
    %v1799 = vunpack.c.l.b16 %v466
    %v1800 = vunpack.c.h.b16 %v466
    %v1801 = vunpack.c.l.b16 %v467
    %v1802 = vunpack.c.h.b16 %v467
    %v1803 = vunpack.c.l.b16 %v468
    %v1804 = vunpack.c.h.b16 %v468
    %v1805 = vunpack.c.l.b16 %v469
    %v1806 = vunpack.c.h.b16 %v469
    %v1807 = vunpack.c.l.b16 %v470
    %v1808 = vunpack.c.h.b16 %v470
    %v1809 = vunpack.c.l.b16 %v471
    %v1810 = vunpack.c.h.b16 %v471
    %v1811 = vunpack.c.l.b16 %v472
    %v1812 = vunpack.c.h.b16 %v472
    %v1813 = vunpack.c.l.b16 %v473
    %v1814 = vunpack.c.h.b16 %v473
    %v1815 = vunpack.c.l.b16 %v474
    %v1816 = vunpack.c.h.b16 %v474
    %v1817 = vunpack.c.l.b16 %v475
    %v1818 = vunpack.c.h.b16 %v475
    %v1819 = vunpack.c.l.b16 %v476
    %v1820 = vunpack.c.h.b16 %v476
    %v1821 = vunpack.c.l.b16 %v477
    %v1822 = vunpack.c.h.b16 %v477
    %v1823 = vunpack.c.l.b16 %v478
    %v1824 = vunpack.c.h.b16 %v478
    %v1825 = vunpack.c.l.b16 %v479
    %v1826 = vunpack.c.h.b16 %v479
    %v1827 = vunpack.c.l.b16 %v480
    %v1828 = vunpack.c.h.b16 %v480
    %v1829 = vunpack.c.l.b16 %v481
    %v1830 = vunpack.c.h.b16 %v481
    %v1831 = vunpack.c.l.b16 %v482
    %v1832 = vunpack.c.h.b16 %v482
    %v1833 = vunpack.c.l.b16 %v483
    %v1834 = vunpack.c.h.b16 %v483
    %v1835 = vunpack.c.l.b16 %v484
    %v1836 = vunpack.c.h.b16 %v484
    %v1837 = vunpack.c.l.b16 %v485
    %v1838 = vunpack.c.h.b16 %v485
    %v1839 = vunpack.c.l.b16 %v486
    %v1840 = vunpack.c.h.b16 %v486
    %v1841 = vunpack.c.l.b16 %v487
    %v1842 = vunpack.c.h.b16 %v487
    %v1843 = vunpack.c.l.b16 %v488
    %v1844 = vunpack.c.h.b16 %v488
    %v1845 = vunpack.c.l.b16 %v489
    %v1846 = vunpack.c.h.b16 %v489
    %v1847 = vunpack.c.l.b16 %v490
    %v1848 = vunpack.c.h.b16 %v490
    %v1849 = vunpack.c.l.b16 %v491
    %v1850 = vunpack.c.h.b16 %v491
    %v1851 = vunpack.c.l.b16 %v492
    %v1852 = vunpack.c.h.b16 %v492
    %v1853 = vunpack.c.l.b16 %v493
    %v1854 = vunpack.c.h.b16 %v493
    %v1855 = vunpack.c.l.b16 %v494
    %v1856 = vunpack.c.h.b16 %v494
    %v1857 = vunpack.c.l.b16 %v495
    %v1858 = vunpack.c.h.b16 %v495
    %v1859 = vunpack.c.l.b16 %v496
    %v1860 = vunpack.c.h.b16 %v496
    %v1861 = vunpack.c.l.b16 %v497
    %v1862 = vunpack.c.h.b16 %v497
    %v1863 = vunpack.c.l.b16 %v498
    %v1864 = vunpack.c.h.b16 %v498
    %v1865 = vunpack.c.l.b16 %v499
    %v1866 = vunpack.c.h.b16 %v499
    %v1867 = vunpack.c.l.b16 %v500
    %v1868 = vunpack.c.h.b16 %v500
    %v1869 = vunpack.c.l.b16 %v501
    %v1870 = vunpack.c.h.b16 %v501
    %v1871 = vunpack.c.l.b16 %v502
    %v1872 = vunpack.c.h.b16 %v502
    %v1873 = vunpack.c.l.b16 %v503
    %v1874 = vunpack.c.h.b16 %v503
    %v1875 = vunpack.c.l.b16 %v504
    %v1876 = vunpack.c.h.b16 %v504
    %v1877 = vunpack.c.l.b16 %v505
    %v1878 = vunpack.c.h.b16 %v505
    %v1879 = vunpack.c.l.b16 %v506
    %v1880 = vunpack.c.h.b16 %v506
    %v1881 = vunpack.c.l.b16 %v507
    %v1882 = vunpack.c.h.b16 %v507
    %v1883 = vunpack.c.l.b16 %v508
    %v1884 = vunpack.c.h.b16 %v508
    %v1885 = vunpack.c.l.b16 %v509
    %v1886 = vunpack.c.h.b16 %v509
    %v1887 = vunpack.c.l.b16 %v510
    %v1888 = vunpack.c.h.b16 %v510
    %v1889 = vunpack.c.l.b16 %v511
    %v1890 = vunpack.c.h.b16 %v511
    %v1891 = vunpack.c.l.b16 %v512
    %v1892 = vunpack.c.h.b16 %v512
    %v1893 = vunpack.c.l.b16 %v513
    %v1894 = vunpack.c.h.b16 %v513
    %v1895 = vunpack.c.l.b16 %v514
    %v1896 = vunpack.c.h.b16 %v514
    %v1897 = vunpack.c.l.b16 %v515
    %v1898 = vunpack.c.h.b16 %v515
    %v1899 = vunpack.c.l.b16 %v516
    %v1900 = vunpack.c.h.b16 %v516
    %v1901 = vunpack.c.l.b16 %v517
    %v1902 = vunpack.c.h.b16 %v517
    %v1903 = vunpack.c.l.b16 %v518
    %v1904 = vunpack.c.h.b16 %v518
    %v1905 = vunpack.c.l.b16 %v519
    %v1906 = vunpack.c.h.b16 %v519
    %v1907 = vunpack.c.l.b16 %v520
    %v1908 = vunpack.c.h.b16 %v520
    %v1909 = vunpack.c.l.b16 %v521
    %v1910 = vunpack.c.h.b16 %v521
    %v1911 = vunpack.c.l.b16 %v522
    %v1912 = vunpack.c.h.b16 %v522
    %v1913 = vunpack.c.l.b16 %v523
    %v1914 = vunpack.c.h.b16 %v523
    %v1915 = vunpack.c.l.b16 %v524
    %v1916 = vunpack.c.h.b16 %v524
    %v1917 = vunpack.c.l.b16 %v525
    %v1918 = vunpack.c.h.b16 %v525
    %v1919 = vunpack.c.l.b16 %v526
    %v1920 = vunpack.c.h.b16 %v526
    %v1921 = vunpack.c.l.b16 %v527
    %v1922 = vunpack.c.h.b16 %v527
    %v1923 = vunpack.c.l.b16 %v528
    %v1924 = vunpack.c.h.b16 %v528
    %v1925 = vunpack.c.l.b16 %v529
    %v1926 = vunpack.c.h.b16 %v529
    %v1927 = vunpack.c.l.b16 %v530
    %v1928 = vunpack.c.h.b16 %v530
    %v1929 = vunpack.c.l.b16 %v531
    %v1930 = vunpack.c.h.b16 %v531
    %v1931 = vunpack.c.l.b16 %v532
    %v1932 = vunpack.c.h.b16 %v532
    %v1933 = vunpack.c.l.b16 %v533
    %v1934 = vunpack.c.h.b16 %v533
    %v1935 = vunpack.c.l.b16 %v534
    %v1936 = vunpack.c.h.b16 %v534
    %v1937 = vunpack.c.l.b16 %v535
    %v1938 = vunpack.c.h.b16 %v535
    %v1939 = vunpack.c.l.b16 %v536
    %v1940 = vunpack.c.h.b16 %v536
    %v1941 = vunpack.c.l.b16 %v537
    %v1942 = vunpack.c.h.b16 %v537
    %v1943 = vunpack.c.l.b16 %v538
    %v1944 = vunpack.c.h.b16 %v538
    %v1945 = vunpack.c.l.b16 %v539
    %v1946 = vunpack.c.h.b16 %v539
    %v1947 = vunpack.c.l.b16 %v540
    %v1948 = vunpack.c.h.b16 %v540
    %v1949 = vunpack.c.l.b16 %v541
    %v1950 = vunpack.c.h.b16 %v541
    %v1951 = vunpack.c.l.b16 %v542
    %v1952 = vunpack.c.h.b16 %v542
    %v1953 = vunpack.c.l.b16 %v543
    %v1954 = vunpack.c.h.b16 %v543
    %v1955 = vunpack.c.l.b16 %v544
    %v1956 = vunpack.c.h.b16 %v544
    %v1957 = vunpack.c.l.b16 %v545
    %v1958 = vunpack.c.h.b16 %v545
    %v1959 = vunpack.c.l.b16 %v546
    %v1960 = vunpack.c.h.b16 %v546
    %v1961 = vunpack.c.l.b16 %v547
    %v1962 = vunpack.c.h.b16 %v547
    %v1963 = vunpack.c.l.b16 %v548
    %v1964 = vunpack.c.h.b16 %v548
    %v1965 = vunpack.c.l.b16 %v549
    %v1966 = vunpack.c.h.b16 %v549
    %v1967 = vunpack.c.l.b16 %v550
    %v1968 = vunpack.c.h.b16 %v550
    %v1969 = vunpack.c.l.b16 %v551
    %v1970 = vunpack.c.h.b16 %v551
    %v1971 = vunpack.c.l.b16 %v552
    %v1972 = vunpack.c.h.b16 %v552
    %v1973 = vunpack.c.l.b16 %v553
    %v1974 = vunpack.c.h.b16 %v553
    %v1975 = vunpack.c.l.b16 %v554
    %v1976 = vunpack.c.h.b16 %v554
    %v1977 = vunpack.c.l.b16 %v555
    %v1978 = vunpack.c.h.b16 %v555
    %v1979 = vunpack.c.l.b16 %v556
    %v1980 = vunpack.c.h.b16 %v556
    %v1981 = vunpack.c.l.b16 %v557
    %v1982 = vunpack.c.h.b16 %v557
    %v1983 = vunpack.c.l.b16 %v558
    %v1984 = vunpack.c.h.b16 %v558
    %v1985 = vunpack.c.l.b16 %v559
    %v1986 = vunpack.c.h.b16 %v559
    %v1987 = vunpack.c.l.b16 %v560
    %v1988 = vunpack.c.h.b16 %v560
    %v1989 = vunpack.c.l.b16 %v561
    %v1990 = vunpack.c.h.b16 %v561
    %v1991 = vunpack.c.l.b16 %v562
    %v1992 = vunpack.c.h.b16 %v562
    %v1993 = vunpack.c.l.b16 %v563
    %v1994 = vunpack.c.h.b16 %v563
    %v1995 = vunpack.c.l.b16 %v564
    %v1996 = vunpack.c.h.b16 %v564
    %v1997 = vunpack.c.l.b16 %v565
    %v1998 = vunpack.c.h.b16 %v565
    %v1999 = vunpack.c.l.b16 %v566
    %v2000 = vunpack.c.h.b16 %v566
    %v2001 = vunpack.c.l.b16 %v567
    %v2002 = vunpack.c.h.b16 %v567
    %v2003 = vunpack.c.l.b16 %v568
    %v2004 = vunpack.c.h.b16 %v568
    %v2005 = vunpack.c.l.b16 %v569
    %v2006 = vunpack.c.h.b16 %v569
    %v2007 = vunpack.c.l.b16 %v570
    %v2008 = vunpack.c.h.b16 %v570
    %v2009 = vunpack.c.l.b16 %v571
    %v2010 = vunpack.c.h.b16 %v571
    %v2011 = vunpack.c.l.b16 %v572
    %v2012 = vunpack.c.h.b16 %v572
    %v2013 = vunpack.c.l.b16 %v573
    %v2014 = vunpack.c.h.b16 %v573
    %v2015 = vunpack.c.l.b16 %v574
    %v2016 = vunpack.c.h.b16 %v574
    %v2017 = vunpack.c.l.b16 %v575
    %v2018 = vunpack.c.h.b16 %v575
    %v2019 = vunpack.c.l.b16 %v576
    %v2020 = vunpack.c.h.b16 %v576
    %v2021 = vunpack.c.l.b16 %v577
    %v2022 = vunpack.c.h.b16 %v577
    %v2023 = vunpack.c.l.b16 %v578
    %v2024 = vunpack.c.h.b16 %v578
    %v2025 = vunpack.c.l.b16 %v579
    %v2026 = vunpack.c.h.b16 %v579
    %v2027 = vunpack.c.l.b16 %v580
    %v2028 = vunpack.c.h.b16 %v580
    %v2029 = vunpack.c.l.b16 %v581
    %v2030 = vunpack.c.h.b16 %v581
    %v2031 = vunpack.c.l.b16 %v582
    %v2032 = vunpack.c.h.b16 %v582
    %v2033 = vunpack.c.l.b16 %v583
    %v2034 = vunpack.c.h.b16 %v583
    %v2035 = vunpack.c.l.b16 %v584
    %v2036 = vunpack.c.h.b16 %v584
    %v2037 = vunpack.c.l.b16 %v585
    %v2038 = vunpack.c.h.b16 %v585
    %v2039 = vunpack.c.l.b16 %v586
    %v2040 = vunpack.c.h.b16 %v586
    %v2041 = vunpack.c.l.b16 %v587
    %v2042 = vunpack.c.h.b16 %v587
    %v2043 = vunpack.c.l.b16 %v588
    %v2044 = vunpack.c.h.b16 %v588
    %v2045 = vunpack.c.l.b16 %v589
    %v2046 = vunpack.c.h.b16 %v589
    %v2047 = vunpack.c.l.b16 %v590
    %v2048 = vunpack.c.h.b16 %v590
    %v2049 = vunpack.c.l.b16 %v591
    %v2050 = vunpack.c.h.b16 %v591
    %v2051 = vunpack.c.l.b16 %v592
    %v2052 = vunpack.c.h.b16 %v592
    %v2053 = vunpack.c.l.b16 %v593
    %v2054 = vunpack.c.h.b16 %v593
    %v2055 = vunpack.c.l.b16 %v594
    %v2056 = vunpack.c.h.b16 %v594
    %v2057 = vunpack.c.l.b16 %v595
    %v2058 = vunpack.c.h.b16 %v595
    %v2059 = vunpack.c.l.b16 %v596
    %v2060 = vunpack.c.h.b16 %v596
    %v2061 = vunpack.c.l.b16 %v597
    %v2062 = vunpack.c.h.b16 %v597
    %v2063 = vunpack.c.l.b16 %v598
    %v2064 = vunpack.c.h.b16 %v598
    %v2065 = vunpack.c.l.b16 %v599
    %v2066 = vunpack.c.h.b16 %v599
    %v2067 = vunpack.c.l.b16 %v600
    %v2068 = vunpack.c.h.b16 %v600
    %v2069 = vunpack.c.l.b16 %v601
    %v2070 = vunpack.c.h.b16 %v601
    %v2071 = vunpack.c.l.b16 %v602
    %v2072 = vunpack.c.h.b16 %v602
    %v2073 = vunpack.c.l.b16 %v603
    %v2074 = vunpack.c.h.b16 %v603
    %v2075 = vunpack.c.l.b16 %v604
    %v2076 = vunpack.c.h.b16 %v604
    %v2077 = vunpack.c.l.b16 %v605
    %v2078 = vunpack.c.h.b16 %v605
    %v2079 = vunpack.c.l.b16 %v606
    %v2080 = vunpack.c.h.b16 %v606
    %v2081 = vunpack.c.l.b16 %v607
    %v2082 = vunpack.c.h.b16 %v607
    %v2083 = vunpack.c.l.b16 %v608
    %v2084 = vunpack.c.h.b16 %v608
    %v2085 = vunpack.c.l.b16 %v609
    %v2086 = vunpack.c.h.b16 %v609
    %v2087 = vunpack.c.l.b16 %v610
    %v2088 = vunpack.c.h.b16 %v610
    %v2089 = vunpack.c.l.b16 %v611
    %v2090 = vunpack.c.h.b16 %v611
    %v2091 = vunpack.c.l.b16 %v612
    %v2092 = vunpack.c.h.b16 %v612
    %v2093 = vunpack.c.l.b16 %v613
    %v2094 = vunpack.c.h.b16 %v613
    %v2095 = vunpack.c.l.b16 %v614
    %v2096 = vunpack.c.h.b16 %v614
    %v2097 = vunpack.c.l.b16 %v615
    %v2098 = vunpack.c.h.b16 %v615
    %v2099 = vunpack.c.l.b16 %v616
    %v2100 = vunpack.c.h.b16 %v616
    %v2101 = vunpack.c.l.b16 %v617
    %v2102 = vunpack.c.h.b16 %v617
    %v2103 = vunpack.c.l.b16 %v618
    %v2104 = vunpack.c.h.b16 %v618
    %v2105 = vunpack.c.l.b16 %v619
    %v2106 = vunpack.c.h.b16 %v619
    %v2107 = vunpack.c.l.b16 %v620
    %v2108 = vunpack.c.h.b16 %v620
    %v2109 = vunpack.c.l.b16 %v621
    %v2110 = vunpack.c.h.b16 %v621
    %v2111 = vunpack.c.l.b16 %v622
    %v2112 = vunpack.c.h.b16 %v622
    %v2113 = vunpack.c.l.b16 %v623
    %v2114 = vunpack.c.h.b16 %v623
    %v2115 = vunpack.c.l.b16 %v624
    %v2116 = vunpack.c.h.b16 %v624
    %v2117 = vunpack.c.l.b16 %v625
    %v2118 = vunpack.c.h.b16 %v625
    %v2119 = vunpack.c.l.b16 %v626
    %v2120 = vunpack.c.h.b16 %v626
    %v2121 = vunpack.c.l.b16 %v627
    %v2122 = vunpack.c.h.b16 %v627
    %v2123 = vunpack.c.l.b16 %v628
    %v2124 = vunpack.c.h.b16 %v628
    %v2125 = vunpack.c.l.b16 %v629
    %v2126 = vunpack.c.h.b16 %v629
    %v2127 = vunpack.c.l.b16 %v630
    %v2128 = vunpack.c.h.b16 %v630
    %v2129 = vunpack.c.l.b16 %v631
    %v2130 = vunpack.c.h.b16 %v631
    %v2131 = vunpack.c.l.b16 %v632
    %v2132 = vunpack.c.h.b16 %v632
    %v2133 = vunpack.c.l.b16 %v633
    %v2134 = vunpack.c.h.b16 %v633
    %v2135 = vunpack.c.l.b16 %v634
    %v2136 = vunpack.c.h.b16 %v634
    %v2137 = vunpack.c.l.b16 %v635
    %v2138 = vunpack.c.h.b16 %v635
    %v2139 = vunpack.c.l.b16 %v636
    %v2140 = vunpack.c.h.b16 %v636
    %v2141 = vunpack.c.l.b16 %v637
    %v2142 = vunpack.c.h.b16 %v637
    %v2143 = vunpack.c.l.b16 %v638
    %v2144 = vunpack.c.h.b16 %v638
    %v2145 = vunpack.c.l.b16 %v639
    %v2146 = vunpack.c.h.b16 %v639
    %v2147 = vunpack.c.l.b16 %v640
    %v2148 = vunpack.c.h.b16 %v640
    %v2149 = vunpack.c.l.b16 %v641
    %v2150 = vunpack.c.h.b16 %v641
    %v2151 = vunpack.c.l.b16 %v642
    %v2152 = vunpack.c.h.b16 %v642
    %v2153 = vunpack.c.l.b16 %v643
    %v2154 = vunpack.c.h.b16 %v643
    %v2155 = vunpack.c.l.b16 %v644
    %v2156 = vunpack.c.h.b16 %v644
    %v2157 = vunpack.c.l.b16 %v645
    %v2158 = vunpack.c.h.b16 %v645
    %v2159 = vunpack.c.l.b16 %v646
    %v2160 = vunpack.c.h.b16 %v646
    %v2161 = vunpack.c.l.b16 %v647
    %v2162 = vunpack.c.h.b16 %v647
    %v2163 = vunpack.c.l.b16 %v648
    %v2164 = vunpack.c.h.b16 %v648
    %v2165 = vunpack.c.l.b16 %v649
    %v2166 = vunpack.c.h.b16 %v649
    %v2167 = vunpack.c.l.b16 %v650
    %v2168 = vunpack.c.h.b16 %v650
    %v2169 = vunpack.c.l.b16 %v651
    %v2170 = vunpack.c.h.b16 %v651
    %v2171 = vunpack.c.l.b16 %v652
    %v2172 = vunpack.c.h.b16 %v652
    %v2173 = vunpack.c.l.b16 %v653
    %v2174 = vunpack.c.h.b16 %v653
    %v2175 = vunpack.c.l.b16 %v654
    %v2176 = vunpack.c.h.b16 %v654
    %v2177 = vunpack.c.l.b16 %v655
    %v2178 = vunpack.c.h.b16 %v655
    %v2179 = vunpack.c.l.b16 %v656
    %v2180 = vunpack.c.h.b16 %v656
    %v2181 = vunpack.c.l.b16 %v657
    %v2182 = vunpack.c.h.b16 %v657
    %v2183 = vunpack.c.l.b16 %v658
    %v2184 = vunpack.c.h.b16 %v658
    %v2185 = vunpack.c.l.b16 %v659
    %v2186 = vunpack.c.h.b16 %v659
    %v2187 = vunpack.c.l.b16 %v660
    %v2188 = vunpack.c.h.b16 %v660
    %v2189 = vunpack.c.l.b16 %v661
    %v2190 = vunpack.c.h.b16 %v661
    %v2191 = vunpack.c.l.b16 %v662
    %v2192 = vunpack.c.h.b16 %v662
    %v2193 = vunpack.c.l.b16 %v663
    %v2194 = vunpack.c.h.b16 %v663
    %v2195 = vunpack.c.l.b16 %v664
    %v2196 = vunpack.c.h.b16 %v664
    %v2197 = vunpack.c.l.b16 %v665
    %v2198 = vunpack.c.h.b16 %v665
    %v2199 = vunpack.c.l.b16 %v666
    %v2200 = vunpack.c.h.b16 %v666
    %v2201 = vunpack.c.l.b16 %v667
    %v2202 = vunpack.c.h.b16 %v667
    %v2203 = vunpack.c.l.b16 %v668
    %v2204 = vunpack.c.h.b16 %v668
    %v2205 = vpack.c.b16 %v1189, %v1181
    %v2206 = vpack.c.b16 %v1190, %v1182
    %v2207 = vpack.c.b16 %v1191, %v1183
    %v2208 = vpack.c.b16 %v1192, %v1184
    %v2209 = vpack.c.b16 %v1193, %v1185
    %v2210 = vpack.c.b16 %v1194, %v1186
    %v2211 = vpack.c.b16 %v1195, %v1187
    %v2212 = vpack.c.b16 %v1196, %v1188
    %v2213 = vpack.c.b16 %v1205, %v1197
    %v2214 = vpack.c.b16 %v1206, %v1198
    %v2215 = vpack.c.b16 %v1207, %v1199
    %v2216 = vpack.c.b16 %v1208, %v1200
    %v2217 = vpack.c.b16 %v1209, %v1201
    %v2218 = vpack.c.b16 %v1210, %v1202
    %v2219 = vpack.c.b16 %v1211, %v1203
    %v2220 = vpack.c.b16 %v1212, %v1204
    %v2221 = vpack.c.b16 %v1221, %v1213
    %v2222 = vpack.c.b16 %v1222, %v1214
    %v2223 = vpack.c.b16 %v1223, %v1215
    %v2224 = vpack.c.b16 %v1224, %v1216
    %v2225 = vpack.c.b16 %v1225, %v1217
    %v2226 = vpack.c.b16 %v1226, %v1218
    %v2227 = vpack.c.b16 %v1227, %v1219
    %v2228 = vpack.c.b16 %v1228, %v1220
    %v2229 = vpack.c.b16 %v1237, %v1229
    %v2230 = vpack.c.b16 %v1238, %v1230
    %v2231 = vpack.c.b16 %v1239, %v1231
    %v2232 = vpack.c.b16 %v1240, %v1232
    %v2233 = vpack.c.b16 %v1241, %v1233
    %v2234 = vpack.c.b16 %v1242, %v1234
    %v2235 = vpack.c.b16 %v1243, %v1235
    %v2236 = vpack.c.b16 %v1244, %v1236
    %v2237 = vpack.c.b16 %v1253, %v1245
    %v2238 = vpack.c.b16 %v1254, %v1246
    %v2239 = vpack.c.b16 %v1255, %v1247
    %v2240 = vpack.c.b16 %v1256, %v1248
    %v2241 = vpack.c.b16 %v1257, %v1249
    %v2242 = vpack.c.b16 %v1258, %v1250
    %v2243 = vpack.c.b16 %v1259, %v1251
    %v2244 = vpack.c.b16 %v1260, %v1252
    %v2245 = vpack.c.b16 %v1269, %v1261
    %v2246 = vpack.c.b16 %v1270, %v1262
    %v2247 = vpack.c.b16 %v1271, %v1263
    %v2248 = vpack.c.b16 %v1272, %v1264
    %v2249 = vpack.c.b16 %v1273, %v1265
    %v2250 = vpack.c.b16 %v1274, %v1266
    %v2251 = vpack.c.b16 %v1275, %v1267
    %v2252 = vpack.c.b16 %v1276, %v1268
    %v2253 = vpack.c.b16 %v1285, %v1277
    %v2254 = vpack.c.b16 %v1286, %v1278
    %v2255 = vpack.c.b16 %v1287, %v1279
    %v2256 = vpack.c.b16 %v1288, %v1280
    %v2257 = vpack.c.b16 %v1289, %v1281
    %v2258 = vpack.c.b16 %v1290, %v1282
    %v2259 = vpack.c.b16 %v1291, %v1283
    %v2260 = vpack.c.b16 %v1292, %v1284
    %v2261 = vpack.c.b16 %v1301, %v1293
    %v2262 = vpack.c.b16 %v1302, %v1294
    %v2263 = vpack.c.b16 %v1303, %v1295
    %v2264 = vpack.c.b16 %v1304, %v1296
    %v2265 = vpack.c.b16 %v1305, %v1297
    %v2266 = vpack.c.b16 %v1306, %v1298
    %v2267 = vpack.c.b16 %v1307, %v1299
    %v2268 = vpack.c.b16 %v1308, %v1300
    %v2269 = vpack.c.b16 %v1317, %v1309
    %v2270 = vpack.c.b16 %v1318, %v1310
    %v2271 = vpack.c.b16 %v1319, %v1311
    %v2272 = vpack.c.b16 %v1320, %v1312
    %v2273 = vpack.c.b16 %v1321, %v1313
    %v2274 = vpack.c.b16 %v1322, %v1314
    %v2275 = vpack.c.b16 %v1323, %v1315
    %v2276 = vpack.c.b16 %v1324, %v1316
    %v2277 = vpack.c.b16 %v1333, %v1325
    %v2278 = vpack.c.b16 %v1334, %v1326
    %v2279 = vpack.c.b16 %v1335, %v1327
    %v2280 = vpack.c.b16 %v1336, %v1328
    %v2281 = vpack.c.b16 %v1337, %v1329
    %v2282 = vpack.c.b16 %v1338, %v1330
    %v2283 = vpack.c.b16 %v1339, %v1331
    %v2284 = vpack.c.b16 %v1340, %v1332
    %v2285 = vpack.c.b16 %v1349, %v1341
    %v2286 = vpack.c.b16 %v1350, %v1342
    %v2287 = vpack.c.b16 %v1351, %v1343
    %v2288 = vpack.c.b16 %v1352, %v1344
    %v2289 = vpack.c.b16 %v1353, %v1345
    %v2290 = vpack.c.b16 %v1354, %v1346
    %v2291 = vpack.c.b16 %v1355, %v1347
    %v2292 = vpack.c.b16 %v1356, %v1348
    %v2293 = vpack.c.b16 %v1365, %v1357
    %v2294 = vpack.c.b16 %v1366, %v1358
    %v2295 = vpack.c.b16 %v1367, %v1359
    %v2296 = vpack.c.b16 %v1368, %v1360
    %v2297 = vpack.c.b16 %v1369, %v1361
    %v2298 = vpack.c.b16 %v1370, %v1362
    %v2299 = vpack.c.b16 %v1371, %v1363
    %v2300 = vpack.c.b16 %v1372, %v1364
    %v2301 = vpack.c.b16 %v1381, %v1373
    %v2302 = vpack.c.b16 %v1382, %v1374
    %v2303 = vpack.c.b16 %v1383, %v1375
    %v2304 = vpack.c.b16 %v1384, %v1376
    %v2305 = vpack.c.b16 %v1385, %v1377
    %v2306 = vpack.c.b16 %v1386, %v1378
    %v2307 = vpack.c.b16 %v1387, %v1379
    %v2308 = vpack.c.b16 %v1388, %v1380
    %v2309 = vpack.c.b16 %v1397, %v1389
    %v2310 = vpack.c.b16 %v1398, %v1390
    %v2311 = vpack.c.b16 %v1399, %v1391
    %v2312 = vpack.c.b16 %v1400, %v1392
    %v2313 = vpack.c.b16 %v1401, %v1393
    %v2314 = vpack.c.b16 %v1402, %v1394
    %v2315 = vpack.c.b16 %v1403, %v1395
    %v2316 = vpack.c.b16 %v1404, %v1396
    %v2317 = vpack.c.b16 %v1413, %v1405
    %v2318 = vpack.c.b16 %v1414, %v1406
    %v2319 = vpack.c.b16 %v1415, %v1407
    %v2320 = vpack.c.b16 %v1416, %v1408
    %v2321 = vpack.c.b16 %v1417, %v1409
    %v2322 = vpack.c.b16 %v1418, %v1410
    %v2323 = vpack.c.b16 %v1419, %v1411
    %v2324 = vpack.c.b16 %v1420, %v1412
    %v2325 = vpack.c.b16 %v1429, %v1421
    %v2326 = vpack.c.b16 %v1430, %v1422
    %v2327 = vpack.c.b16 %v1431, %v1423
    %v2328 = vpack.c.b16 %v1432, %v1424
    %v2329 = vpack.c.b16 %v1433, %v1425
    %v2330 = vpack.c.b16 %v1434, %v1426
    %v2331 = vpack.c.b16 %v1435, %v1427
    %v2332 = vpack.c.b16 %v1436, %v1428
    %v2333 = vpack.c.b16 %v1445, %v1437
    %v2334 = vpack.c.b16 %v1446, %v1438
    %v2335 = vpack.c.b16 %v1447, %v1439
    %v2336 = vpack.c.b16 %v1448, %v1440
    %v2337 = vpack.c.b16 %v1449, %v1441
    %v2338 = vpack.c.b16 %v1450, %v1442
    %v2339 = vpack.c.b16 %v1451, %v1443
    %v2340 = vpack.c.b16 %v1452, %v1444
    %v2341 = vpack.c.b16 %v1461, %v1453
    %v2342 = vpack.c.b16 %v1462, %v1454
    %v2343 = vpack.c.b16 %v1463, %v1455
    %v2344 = vpack.c.b16 %v1464, %v1456
    %v2345 = vpack.c.b16 %v1465, %v1457
    %v2346 = vpack.c.b16 %v1466, %v1458
    %v2347 = vpack.c.b16 %v1467, %v1459
    %v2348 = vpack.c.b16 %v1468, %v1460
    %v2349 = vpack.c.b16 %v1477, %v1469
    %v2350 = vpack.c.b16 %v1478, %v1470
    %v2351 = vpack.c.b16 %v1479, %v1471
    %v2352 = vpack.c.b16 %v1480, %v1472
    %v2353 = vpack.c.b16 %v1481, %v1473
    %v2354 = vpack.c.b16 %v1482, %v1474
    %v2355 = vpack.c.b16 %v1483, %v1475
    %v2356 = vpack.c.b16 %v1484, %v1476
    %v2357 = vpack.c.b16 %v1493, %v1485
    %v2358 = vpack.c.b16 %v1494, %v1486
    %v2359 = vpack.c.b16 %v1495, %v1487
    %v2360 = vpack.c.b16 %v1496, %v1488
    %v2361 = vpack.c.b16 %v1497, %v1489
    %v2362 = vpack.c.b16 %v1498, %v1490
    %v2363 = vpack.c.b16 %v1499, %v1491
    %v2364 = vpack.c.b16 %v1500, %v1492
    %v2365 = vpack.c.b16 %v1509, %v1501
    %v2366 = vpack.c.b16 %v1510, %v1502
    %v2367 = vpack.c.b16 %v1511, %v1503
    %v2368 = vpack.c.b16 %v1512, %v1504
    %v2369 = vpack.c.b16 %v1513, %v1505
    %v2370 = vpack.c.b16 %v1514, %v1506
    %v2371 = vpack.c.b16 %v1515, %v1507
    %v2372 = vpack.c.b16 %v1516, %v1508
    %v2373 = vpack.c.b16 %v1525, %v1517
    %v2374 = vpack.c.b16 %v1526, %v1518
    %v2375 = vpack.c.b16 %v1527, %v1519
    %v2376 = vpack.c.b16 %v1528, %v1520
    %v2377 = vpack.c.b16 %v1529, %v1521
    %v2378 = vpack.c.b16 %v1530, %v1522
    %v2379 = vpack.c.b16 %v1531, %v1523
    %v2380 = vpack.c.b16 %v1532, %v1524
    %v2381 = vpack.c.b16 %v1541, %v1533
    %v2382 = vpack.c.b16 %v1542, %v1534
    %v2383 = vpack.c.b16 %v1543, %v1535
    %v2384 = vpack.c.b16 %v1544, %v1536
    %v2385 = vpack.c.b16 %v1545, %v1537
    %v2386 = vpack.c.b16 %v1546, %v1538
    %v2387 = vpack.c.b16 %v1547, %v1539
    %v2388 = vpack.c.b16 %v1548, %v1540
    %v2389 = vpack.c.b16 %v1557, %v1549
    %v2390 = vpack.c.b16 %v1558, %v1550
    %v2391 = vpack.c.b16 %v1559, %v1551
    %v2392 = vpack.c.b16 %v1560, %v1552
    %v2393 = vpack.c.b16 %v1561, %v1553
    %v2394 = vpack.c.b16 %v1562, %v1554
    %v2395 = vpack.c.b16 %v1563, %v1555
    %v2396 = vpack.c.b16 %v1564, %v1556
    %v2397 = vpack.c.b16 %v1573, %v1565
    %v2398 = vpack.c.b16 %v1574, %v1566
    %v2399 = vpack.c.b16 %v1575, %v1567
    %v2400 = vpack.c.b16 %v1576, %v1568
    %v2401 = vpack.c.b16 %v1577, %v1569
    %v2402 = vpack.c.b16 %v1578, %v1570
    %v2403 = vpack.c.b16 %v1579, %v1571
    %v2404 = vpack.c.b16 %v1580, %v1572
    %v2405 = vpack.c.b16 %v1589, %v1581
    %v2406 = vpack.c.b16 %v1590, %v1582
    %v2407 = vpack.c.b16 %v1591, %v1583
    %v2408 = vpack.c.b16 %v1592, %v1584
    %v2409 = vpack.c.b16 %v1593, %v1585
    %v2410 = vpack.c.b16 %v1594, %v1586
    %v2411 = vpack.c.b16 %v1595, %v1587
    %v2412 = vpack.c.b16 %v1596, %v1588
    %v2413 = vpack.c.b16 %v1605, %v1597
    %v2414 = vpack.c.b16 %v1606, %v1598
    %v2415 = vpack.c.b16 %v1607, %v1599
    %v2416 = vpack.c.b16 %v1608, %v1600
    %v2417 = vpack.c.b16 %v1609, %v1601
    %v2418 = vpack.c.b16 %v1610, %v1602
    %v2419 = vpack.c.b16 %v1611, %v1603
    %v2420 = vpack.c.b16 %v1612, %v1604
    %v2421 = vpack.c.b16 %v1621, %v1613
    %v2422 = vpack.c.b16 %v1622, %v1614
    %v2423 = vpack.c.b16 %v1623, %v1615
    %v2424 = vpack.c.b16 %v1624, %v1616
    %v2425 = vpack.c.b16 %v1625, %v1617
    %v2426 = vpack.c.b16 %v1626, %v1618
    %v2427 = vpack.c.b16 %v1627, %v1619
    %v2428 = vpack.c.b16 %v1628, %v1620
    %v2429 = vpack.c.b16 %v1637, %v1629
    %v2430 = vpack.c.b16 %v1638, %v1630
    %v2431 = vpack.c.b16 %v1639, %v1631
    %v2432 = vpack.c.b16 %v1640, %v1632
    %v2433 = vpack.c.b16 %v1641, %v1633
    %v2434 = vpack.c.b16 %v1642, %v1634
    %v2435 = vpack.c.b16 %v1643, %v1635
    %v2436 = vpack.c.b16 %v1644, %v1636
    %v2437 = vpack.c.b16 %v1653, %v1645
    %v2438 = vpack.c.b16 %v1654, %v1646
    %v2439 = vpack.c.b16 %v1655, %v1647
    %v2440 = vpack.c.b16 %v1656, %v1648
    %v2441 = vpack.c.b16 %v1657, %v1649
    %v2442 = vpack.c.b16 %v1658, %v1650
    %v2443 = vpack.c.b16 %v1659, %v1651
    %v2444 = vpack.c.b16 %v1660, %v1652
    %v2445 = vpack.c.b16 %v1669, %v1661
    %v2446 = vpack.c.b16 %v1670, %v1662
    %v2447 = vpack.c.b16 %v1671, %v1663
    %v2448 = vpack.c.b16 %v1672, %v1664
    %v2449 = vpack.c.b16 %v1673, %v1665
    %v2450 = vpack.c.b16 %v1674, %v1666
    %v2451 = vpack.c.b16 %v1675, %v1667
    %v2452 = vpack.c.b16 %v1676, %v1668
    %v2453 = vpack.c.b16 %v1685, %v1677
    %v2454 = vpack.c.b16 %v1686, %v1678
    %v2455 = vpack.c.b16 %v1687, %v1679
    %v2456 = vpack.c.b16 %v1688, %v1680
    %v2457 = vpack.c.b16 %v1689, %v1681
    %v2458 = vpack.c.b16 %v1690, %v1682
    %v2459 = vpack.c.b16 %v1691, %v1683
    %v2460 = vpack.c.b16 %v1692, %v1684
    %v2461 = vpack.c.b16 %v1701, %v1693
    %v2462 = vpack.c.b16 %v1702, %v1694
    %v2463 = vpack.c.b16 %v1703, %v1695
    %v2464 = vpack.c.b16 %v1704, %v1696
    %v2465 = vpack.c.b16 %v1705, %v1697
    %v2466 = vpack.c.b16 %v1706, %v1698
    %v2467 = vpack.c.b16 %v1707, %v1699
    %v2468 = vpack.c.b16 %v1708, %v1700
    %v2469 = vpack.c.b16 %v1717, %v1709
    %v2470 = vpack.c.b16 %v1718, %v1710
    %v2471 = vpack.c.b16 %v1719, %v1711
    %v2472 = vpack.c.b16 %v1720, %v1712
    %v2473 = vpack.c.b16 %v1721, %v1713
    %v2474 = vpack.c.b16 %v1722, %v1714
    %v2475 = vpack.c.b16 %v1723, %v1715
    %v2476 = vpack.c.b16 %v1724, %v1716
    %v2477 = vpack.c.b16 %v1733, %v1725
    %v2478 = vpack.c.b16 %v1734, %v1726
    %v2479 = vpack.c.b16 %v1735, %v1727
    %v2480 = vpack.c.b16 %v1736, %v1728
    %v2481 = vpack.c.b16 %v1737, %v1729
    %v2482 = vpack.c.b16 %v1738, %v1730
    %v2483 = vpack.c.b16 %v1739, %v1731
    %v2484 = vpack.c.b16 %v1740, %v1732
    %v2485 = vpack.c.b16 %v1749, %v1741
    %v2486 = vpack.c.b16 %v1750, %v1742
    %v2487 = vpack.c.b16 %v1751, %v1743
    %v2488 = vpack.c.b16 %v1752, %v1744
    %v2489 = vpack.c.b16 %v1753, %v1745
    %v2490 = vpack.c.b16 %v1754, %v1746
    %v2491 = vpack.c.b16 %v1755, %v1747
    %v2492 = vpack.c.b16 %v1756, %v1748
    %v2493 = vpack.c.b16 %v1765, %v1757
    %v2494 = vpack.c.b16 %v1766, %v1758
    %v2495 = vpack.c.b16 %v1767, %v1759
    %v2496 = vpack.c.b16 %v1768, %v1760
    %v2497 = vpack.c.b16 %v1769, %v1761
    %v2498 = vpack.c.b16 %v1770, %v1762
    %v2499 = vpack.c.b16 %v1771, %v1763
    %v2500 = vpack.c.b16 %v1772, %v1764
    %v2501 = vpack.c.b16 %v1781, %v1773
    %v2502 = vpack.c.b16 %v1782, %v1774
    %v2503 = vpack.c.b16 %v1783, %v1775
    %v2504 = vpack.c.b16 %v1784, %v1776
    %v2505 = vpack.c.b16 %v1785, %v1777
    %v2506 = vpack.c.b16 %v1786, %v1778
    %v2507 = vpack.c.b16 %v1787, %v1779
    %v2508 = vpack.c.b16 %v1788, %v1780
    %v2509 = vpack.c.b16 %v1797, %v1789
    %v2510 = vpack.c.b16 %v1798, %v1790
    %v2511 = vpack.c.b16 %v1799, %v1791
    %v2512 = vpack.c.b16 %v1800, %v1792
    %v2513 = vpack.c.b16 %v1801, %v1793
    %v2514 = vpack.c.b16 %v1802, %v1794
    %v2515 = vpack.c.b16 %v1803, %v1795
    %v2516 = vpack.c.b16 %v1804, %v1796
    %v2517 = vpack.c.b16 %v1813, %v1805
    %v2518 = vpack.c.b16 %v1814, %v1806
    %v2519 = vpack.c.b16 %v1815, %v1807
    %v2520 = vpack.c.b16 %v1816, %v1808
    %v2521 = vpack.c.b16 %v1817, %v1809
    %v2522 = vpack.c.b16 %v1818, %v1810
    %v2523 = vpack.c.b16 %v1819, %v1811
    %v2524 = vpack.c.b16 %v1820, %v1812
    %v2525 = vpack.c.b16 %v1829, %v1821
    %v2526 = vpack.c.b16 %v1830, %v1822
    %v2527 = vpack.c.b16 %v1831, %v1823
    %v2528 = vpack.c.b16 %v1832, %v1824
    %v2529 = vpack.c.b16 %v1833, %v1825
    %v2530 = vpack.c.b16 %v1834, %v1826
    %v2531 = vpack.c.b16 %v1835, %v1827
    %v2532 = vpack.c.b16 %v1836, %v1828
    %v2533 = vpack.c.b16 %v1845, %v1837
    %v2534 = vpack.c.b16 %v1846, %v1838
    %v2535 = vpack.c.b16 %v1847, %v1839
    %v2536 = vpack.c.b16 %v1848, %v1840
    %v2537 = vpack.c.b16 %v1849, %v1841
    %v2538 = vpack.c.b16 %v1850, %v1842
    %v2539 = vpack.c.b16 %v1851, %v1843
    %v2540 = vpack.c.b16 %v1852, %v1844
    %v2541 = vpack.c.b16 %v1861, %v1853
    %v2542 = vpack.c.b16 %v1862, %v1854
    %v2543 = vpack.c.b16 %v1863, %v1855
    %v2544 = vpack.c.b16 %v1864, %v1856
    %v2545 = vpack.c.b16 %v1865, %v1857
    %v2546 = vpack.c.b16 %v1866, %v1858
    %v2547 = vpack.c.b16 %v1867, %v1859
    %v2548 = vpack.c.b16 %v1868, %v1860
    %v2549 = vpack.c.b16 %v1877, %v1869
    %v2550 = vpack.c.b16 %v1878, %v1870
    %v2551 = vpack.c.b16 %v1879, %v1871
    %v2552 = vpack.c.b16 %v1880, %v1872
    %v2553 = vpack.c.b16 %v1881, %v1873
    %v2554 = vpack.c.b16 %v1882, %v1874
    %v2555 = vpack.c.b16 %v1883, %v1875
    %v2556 = vpack.c.b16 %v1884, %v1876
    %v2557 = vpack.c.b16 %v1893, %v1885
    %v2558 = vpack.c.b16 %v1894, %v1886
    %v2559 = vpack.c.b16 %v1895, %v1887
    %v2560 = vpack.c.b16 %v1896, %v1888
    %v2561 = vpack.c.b16 %v1897, %v1889
    %v2562 = vpack.c.b16 %v1898, %v1890
    %v2563 = vpack.c.b16 %v1899, %v1891
    %v2564 = vpack.c.b16 %v1900, %v1892
    %v2565 = vpack.c.b16 %v1909, %v1901
    %v2566 = vpack.c.b16 %v1910, %v1902
    %v2567 = vpack.c.b16 %v1911, %v1903
    %v2568 = vpack.c.b16 %v1912, %v1904
    %v2569 = vpack.c.b16 %v1913, %v1905
    %v2570 = vpack.c.b16 %v1914, %v1906
    %v2571 = vpack.c.b16 %v1915, %v1907
    %v2572 = vpack.c.b16 %v1916, %v1908
    %v2573 = vpack.c.b16 %v1925, %v1917
    %v2574 = vpack.c.b16 %v1926, %v1918
    %v2575 = vpack.c.b16 %v1927, %v1919
    %v2576 = vpack.c.b16 %v1928, %v1920
    %v2577 = vpack.c.b16 %v1929, %v1921
    %v2578 = vpack.c.b16 %v1930, %v1922
    %v2579 = vpack.c.b16 %v1931, %v1923
    %v2580 = vpack.c.b16 %v1932, %v1924
    %v2581 = vpack.c.b16 %v1941, %v1933
    %v2582 = vpack.c.b16 %v1942, %v1934
    %v2583 = vpack.c.b16 %v1943, %v1935
    %v2584 = vpack.c.b16 %v1944, %v1936
    %v2585 = vpack.c.b16 %v1945, %v1937
    %v2586 = vpack.c.b16 %v1946, %v1938
    %v2587 = vpack.c.b16 %v1947, %v1939
    %v2588 = vpack.c.b16 %v1948, %v1940
    %v2589 = vpack.c.b16 %v1957, %v1949
    %v2590 = vpack.c.b16 %v1958, %v1950
    %v2591 = vpack.c.b16 %v1959, %v1951
    %v2592 = vpack.c.b16 %v1960, %v1952
    %v2593 = vpack.c.b16 %v1961, %v1953
    %v2594 = vpack.c.b16 %v1962, %v1954
    %v2595 = vpack.c.b16 %v1963, %v1955
    %v2596 = vpack.c.b16 %v1964, %v1956
    %v2597 = vpack.c.b16 %v1973, %v1965
    %v2598 = vpack.c.b16 %v1974, %v1966
    %v2599 = vpack.c.b16 %v1975, %v1967
    %v2600 = vpack.c.b16 %v1976, %v1968
    %v2601 = vpack.c.b16 %v1977, %v1969
    %v2602 = vpack.c.b16 %v1978, %v1970
    %v2603 = vpack.c.b16 %v1979, %v1971
    %v2604 = vpack.c.b16 %v1980, %v1972
    %v2605 = vpack.c.b16 %v1989, %v1981
    %v2606 = vpack.c.b16 %v1990, %v1982
    %v2607 = vpack.c.b16 %v1991, %v1983
    %v2608 = vpack.c.b16 %v1992, %v1984
    %v2609 = vpack.c.b16 %v1993, %v1985
    %v2610 = vpack.c.b16 %v1994, %v1986
    %v2611 = vpack.c.b16 %v1995, %v1987
    %v2612 = vpack.c.b16 %v1996, %v1988
    %v2613 = vpack.c.b16 %v2005, %v1997
    %v2614 = vpack.c.b16 %v2006, %v1998
    %v2615 = vpack.c.b16 %v2007, %v1999
    %v2616 = vpack.c.b16 %v2008, %v2000
    %v2617 = vpack.c.b16 %v2009, %v2001
    %v2618 = vpack.c.b16 %v2010, %v2002
    %v2619 = vpack.c.b16 %v2011, %v2003
    %v2620 = vpack.c.b16 %v2012, %v2004
    %v2621 = vpack.c.b16 %v2021, %v2013
    %v2622 = vpack.c.b16 %v2022, %v2014
    %v2623 = vpack.c.b16 %v2023, %v2015
    %v2624 = vpack.c.b16 %v2024, %v2016
    %v2625 = vpack.c.b16 %v2025, %v2017
    %v2626 = vpack.c.b16 %v2026, %v2018
    %v2627 = vpack.c.b16 %v2027, %v2019
    %v2628 = vpack.c.b16 %v2028, %v2020
    %v2629 = vpack.c.b16 %v2037, %v2029
    %v2630 = vpack.c.b16 %v2038, %v2030
    %v2631 = vpack.c.b16 %v2039, %v2031
    %v2632 = vpack.c.b16 %v2040, %v2032
    %v2633 = vpack.c.b16 %v2041, %v2033
    %v2634 = vpack.c.b16 %v2042, %v2034
    %v2635 = vpack.c.b16 %v2043, %v2035
    %v2636 = vpack.c.b16 %v2044, %v2036
    %v2637 = vpack.c.b16 %v2053, %v2045
    %v2638 = vpack.c.b16 %v2054, %v2046
    %v2639 = vpack.c.b16 %v2055, %v2047
    %v2640 = vpack.c.b16 %v2056, %v2048
    %v2641 = vpack.c.b16 %v2057, %v2049
    %v2642 = vpack.c.b16 %v2058, %v2050
    %v2643 = vpack.c.b16 %v2059, %v2051
    %v2644 = vpack.c.b16 %v2060, %v2052
    %v2645 = vpack.c.b16 %v2069, %v2061
    %v2646 = vpack.c.b16 %v2070, %v2062
    %v2647 = vpack.c.b16 %v2071, %v2063
    %v2648 = vpack.c.b16 %v2072, %v2064
    %v2649 = vpack.c.b16 %v2073, %v2065
    %v2650 = vpack.c.b16 %v2074, %v2066
    %v2651 = vpack.c.b16 %v2075, %v2067
    %v2652 = vpack.c.b16 %v2076, %v2068
    %v2653 = vpack.c.b16 %v2085, %v2077
    %v2654 = vpack.c.b16 %v2086, %v2078
    %v2655 = vpack.c.b16 %v2087, %v2079
    %v2656 = vpack.c.b16 %v2088, %v2080
    %v2657 = vpack.c.b16 %v2089, %v2081
    %v2658 = vpack.c.b16 %v2090, %v2082
    %v2659 = vpack.c.b16 %v2091, %v2083
    %v2660 = vpack.c.b16 %v2092, %v2084
    %v2661 = vpack.c.b16 %v2101, %v2093
    %v2662 = vpack.c.b16 %v2102, %v2094
    %v2663 = vpack.c.b16 %v2103, %v2095
    %v2664 = vpack.c.b16 %v2104, %v2096
    %v2665 = vpack.c.b16 %v2105, %v2097
    %v2666 = vpack.c.b16 %v2106, %v2098
    %v2667 = vpack.c.b16 %v2107, %v2099
    %v2668 = vpack.c.b16 %v2108, %v2100
    %v2669 = vpack.c.b16 %v2117, %v2109
    %v2670 = vpack.c.b16 %v2118, %v2110
    %v2671 = vpack.c.b16 %v2119, %v2111
    %v2672 = vpack.c.b16 %v2120, %v2112
    %v2673 = vpack.c.b16 %v2121, %v2113
    %v2674 = vpack.c.b16 %v2122, %v2114
    %v2675 = vpack.c.b16 %v2123, %v2115
    %v2676 = vpack.c.b16 %v2124, %v2116
    %v2677 = vpack.c.b16 %v2133, %v2125
    %v2678 = vpack.c.b16 %v2134, %v2126
    %v2679 = vpack.c.b16 %v2135, %v2127
    %v2680 = vpack.c.b16 %v2136, %v2128
    %v2681 = vpack.c.b16 %v2137, %v2129
    %v2682 = vpack.c.b16 %v2138, %v2130
    %v2683 = vpack.c.b16 %v2139, %v2131
    %v2684 = vpack.c.b16 %v2140, %v2132
    %v2685 = vpack.c.b16 %v2149, %v2141
    %v2686 = vpack.c.b16 %v2150, %v2142
    %v2687 = vpack.c.b16 %v2151, %v2143
    %v2688 = vpack.c.b16 %v2152, %v2144
    %v2689 = vpack.c.b16 %v2153, %v2145
    %v2690 = vpack.c.b16 %v2154, %v2146
    %v2691 = vpack.c.b16 %v2155, %v2147
    %v2692 = vpack.c.b16 %v2156, %v2148
    %v2693 = vpack.c.b16 %v2165, %v2157
    %v2694 = vpack.c.b16 %v2166, %v2158
    %v2695 = vpack.c.b16 %v2167, %v2159
    %v2696 = vpack.c.b16 %v2168, %v2160
    %v2697 = vpack.c.b16 %v2169, %v2161
    %v2698 = vpack.c.b16 %v2170, %v2162
    %v2699 = vpack.c.b16 %v2171, %v2163
    %v2700 = vpack.c.b16 %v2172, %v2164
    %v2701 = vpack.c.b16 %v2181, %v2173
    %v2702 = vpack.c.b16 %v2182, %v2174
    %v2703 = vpack.c.b16 %v2183, %v2175
    %v2704 = vpack.c.b16 %v2184, %v2176
    %v2705 = vpack.c.b16 %v2185, %v2177
    %v2706 = vpack.c.b16 %v2186, %v2178
    %v2707 = vpack.c.b16 %v2187, %v2179
    %v2708 = vpack.c.b16 %v2188, %v2180
    %v2709 = vpack.c.b16 %v2197, %v2189
    %v2710 = vpack.c.b16 %v2198, %v2190
    %v2711 = vpack.c.b16 %v2199, %v2191
    %v2712 = vpack.c.b16 %v2200, %v2192
    %v2713 = vpack.c.b16 %v2201, %v2193
    %v2714 = vpack.c.b16 %v2202, %v2194
    %v2715 = vpack.c.b16 %v2203, %v2195
    %v2716 = vpack.c.b16 %v2204, %v2196
    %3229 = vmatprep.subr.bf16.mxu0 %v2206
    %3230 = vmatpush1.bf16.msra.mxu0 %v2205
    %3231 = vmatprep.subr.bf16.mxu0 %v2214
    %3232 = vmatpush1.bf16.msra.mxu0 %v2213
    %3233 = vmatprep.subr.bf16.mxu0 %v2222
    %3234 = vmatpush1.bf16.msra.mxu0 %v2221
    %3235 = vmatprep.subr.bf16.mxu0 %v2230
    %3236 = vmatpush1.bf16.msra.mxu0 %v2229
    %3237 = vmatprep.subr.bf16.mxu0 %v2238
    %3238 = vmatpush1.bf16.msra.mxu0 %v2237
    %3239 = vmatprep.subr.bf16.mxu0 %v2246
    %3240 = vmatpush1.bf16.msra.mxu0 %v2245
    %3241 = vmatprep.subr.bf16.mxu0 %v2254
    %3242 = vmatpush1.bf16.msra.mxu0 %v2253
    %3243 = vmatprep.subr.bf16.mxu0 %v2262
    %3244 = vmatpush1.bf16.msra.mxu0 %v2261
    %3245 = vmatprep.subr.bf16.mxu0 %v2270
    %3246 = vmatpush1.bf16.msra.mxu0 %v2269
    %3247 = vmatprep.subr.bf16.mxu0 %v2278
    %3248 = vmatpush1.bf16.msra.mxu0 %v2277
    %3249 = vmatprep.subr.bf16.mxu0 %v2286
    %3250 = vmatpush1.bf16.msra.mxu0 %v2285
    %3251 = vmatprep.subr.bf16.mxu0 %v2294
    %3252 = vmatpush1.bf16.msra.mxu0 %v2293
    %3253 = vmatprep.subr.bf16.mxu0 %v2302
    %3254 = vmatpush1.bf16.msra.mxu0 %v2301
    %3255 = vmatprep.subr.bf16.mxu0 %v2310
    %3256 = vmatpush1.bf16.msra.mxu0 %v2309
    %3257 = vmatprep.subr.bf16.mxu0 %v2318
    %3258 = vmatpush1.bf16.msra.mxu0 %v2317
    %3259 = vmatprep.subr.bf16.mxu0 %v2326
    %3260 = vmatpush1.bf16.msra.mxu0 %v2325
    %3261 = vmatprep.mubr.bf16.mxu0 %v150
    %3262 = vmatmul.mubr.bf16.gmra.mrb[0].mxu0 %v149
    %v3263 = vpop.f32.mrb[0].mxu0
    %v3264 = vadd.f32 0.0, %v3263
    %v3265 = vpop.f32.mrb[0].mxu0
    %v3266 = vadd.f32 0.0, %v3265
    %v3267 = vpop.f32.mrb[0].mxu0
    %v3268 = vadd.f32 0.0, %v3267
    %v3269 = vpop.f32.mrb[0].mxu0
    %v3270 = vadd.f32 0.0, %v3269
    %3271 = vdwg.mxu0
    %3272 = vmatprep.subr.bf16.mxu0 %v2334
    %3273 = vmatpush1.bf16.msra.mxu0 %v2333
    %3274 = vmatprep.subr.bf16.mxu0 %v2342
    %3275 = vmatpush1.bf16.msra.mxu0 %v2341
    %3276 = vmatprep.subr.bf16.mxu0 %v2350
    %3277 = vmatpush1.bf16.msra.mxu0 %v2349
    %3278 = vmatprep.subr.bf16.mxu0 %v2358
    %3279 = vmatpush1.bf16.msra.mxu0 %v2357
    %3280 = vmatprep.subr.bf16.mxu0 %v2366
    %3281 = vmatpush1.bf16.msra.mxu0 %v2365
    %3282 = vmatprep.subr.bf16.mxu0 %v2374
    %3283 = vmatpush1.bf16.msra.mxu0 %v2373
    %3284 = vmatprep.subr.bf16.mxu0 %v2382
    %3285 = vmatpush1.bf16.msra.mxu0 %v2381
    %3286 = vmatprep.subr.bf16.mxu0 %v2390
    %3287 = vmatpush1.bf16.msra.mxu0 %v2389
    %3288 = vmatprep.subr.bf16.mxu0 %v2398
    %3289 = vmatpush1.bf16.msra.mxu0 %v2397
    %3290 = vmatprep.subr.bf16.mxu0 %v2406
    %3291 = vmatpush1.bf16.msra.mxu0 %v2405
    %3292 = vmatprep.subr.bf16.mxu0 %v2414
    %3293 = vmatpush1.bf16.msra.mxu0 %v2413
    %3294 = vmatprep.subr.bf16.mxu0 %v2422
    %3295 = vmatpush1.bf16.msra.mxu0 %v2421
    %3296 = vmatprep.subr.bf16.mxu0 %v2430
    %3297 = vmatpush1.bf16.msra.mxu0 %v2429
    %3298 = vmatprep.subr.bf16.mxu0 %v2438
    %3299 = vmatpush1.bf16.msra.mxu0 %v2437
    %3300 = vmatprep.subr.bf16.mxu0 %v2446
    %3301 = vmatpush1.bf16.msra.mxu0 %v2445
    %3302 = vmatprep.subr.bf16.mxu0 %v2454
    %3303 = vmatpush1.bf16.msra.mxu0 %v2453
    %3304 = vmatprep.mubr.bf16.mxu0 %v152
    %3305 = vmatmul.mubr.bf16.gmra.mrb[0].mxu0 %v151
    %v3306 = vpop.f32.mrb[0].mxu0
    %v3307 = vadd.f32 %v3264, %v3306
    %v3308 = vpop.f32.mrb[0].mxu0
    %v3309 = vadd.f32 %v3266, %v3308
    %v3310 = vpop.f32.mrb[0].mxu0
    %v3311 = vadd.f32 %v3268, %v3310
    %v3312 = vpop.f32.mrb[0].mxu0
    %v3313 = vadd.f32 %v3270, %v3312
    %3314 = vdwg.mxu0
    %3315 = vmatprep.subr.bf16.mxu0 %v2462
    %3316 = vmatpush1.bf16.msra.mxu0 %v2461
    %3317 = vmatprep.subr.bf16.mxu0 %v2470
    %3318 = vmatpush1.bf16.msra.mxu0 %v2469
    %3319 = vmatprep.subr.bf16.mxu0 %v2478
    %3320 = vmatpush1.bf16.msra.mxu0 %v2477
    %3321 = vmatprep.subr.bf16.mxu0 %v2486
    %3322 = vmatpush1.bf16.msra.mxu0 %v2485
    %3323 = vmatprep.subr.bf16.mxu0 %v2494
    %3324 = vmatpush1.bf16.msra.mxu0 %v2493
    %3325 = vmatprep.subr.bf16.mxu0 %v2502
    %3326 = vmatpush1.bf16.msra.mxu0 %v2501
    %3327 = vmatprep.subr.bf16.mxu0 %v2510
    %3328 = vmatpush1.bf16.msra.mxu0 %v2509
    %3329 = vmatprep.subr.bf16.mxu0 %v2518
    %3330 = vmatpush1.bf16.msra.mxu0 %v2517
    %3331 = vmatprep.subr.bf16.mxu0 %v2526
    %3332 = vmatpush1.bf16.msra.mxu0 %v2525
    %3333 = vmatprep.subr.bf16.mxu0 %v2534
    %3334 = vmatpush1.bf16.msra.mxu0 %v2533
    %3335 = vmatprep.subr.bf16.mxu0 %v2542
    %3336 = vmatpush1.bf16.msra.mxu0 %v2541
    %3337 = vmatprep.subr.bf16.mxu0 %v2550
    %3338 = vmatpush1.bf16.msra.mxu0 %v2549
    %3339 = vmatprep.subr.bf16.mxu0 %v2558
    %3340 = vmatpush1.bf16.msra.mxu0 %v2557
    %3341 = vmatprep.subr.bf16.mxu0 %v2566
    %3342 = vmatpush1.bf16.msra.mxu0 %v2565
    %3343 = vmatprep.subr.bf16.mxu0 %v2574
    %3344 = vmatpush1.bf16.msra.mxu0 %v2573
    %3345 = vmatprep.subr.bf16.mxu0 %v2582
    %3346 = vmatpush1.bf16.msra.mxu0 %v2581
    %3347 = vmatprep.mubr.bf16.mxu0 %v154
    %3348 = vmatmul.mubr.bf16.gmra.mrb[0].mxu0 %v153
    %v3349 = vpop.f32.mrb[0].mxu0
    %v3350 = vadd.f32 %v3307, %v3349
    %v3351 = vpop.f32.mrb[0].mxu0
    %v3352 = vadd.f32 %v3309, %v3351
    %v3353 = vpop.f32.mrb[0].mxu0
    %v3354 = vadd.f32 %v3311, %v3353
    %v3355 = vpop.f32.mrb[0].mxu0
    %v3356 = vadd.f32 %v3313, %v3355
    %3357 = vdwg.mxu0
    %3358 = vmatprep.subr.bf16.mxu0 %v2590
    %3359 = vmatpush1.bf16.msra.mxu0 %v2589
    %3360 = vmatprep.subr.bf16.mxu0 %v2598
    %3361 = vmatpush1.bf16.msra.mxu0 %v2597
    %3362 = vmatprep.subr.bf16.mxu0 %v2606
    %3363 = vmatpush1.bf16.msra.mxu0 %v2605
    %3364 = vmatprep.subr.bf16.mxu0 %v2614
    %3365 = vmatpush1.bf16.msra.mxu0 %v2613
    %3366 = vmatprep.subr.bf16.mxu0 %v2622
    %3367 = vmatpush1.bf16.msra.mxu0 %v2621
    %3368 = vmatprep.subr.bf16.mxu0 %v2630
    %3369 = vmatpush1.bf16.msra.mxu0 %v2629
    %3370 = vmatprep.subr.bf16.mxu0 %v2638
    %3371 = vmatpush1.bf16.msra.mxu0 %v2637
    %3372 = vmatprep.subr.bf16.mxu0 %v2646
    %3373 = vmatpush1.bf16.msra.mxu0 %v2645
    %3374 = vmatprep.subr.bf16.mxu0 %v2654
    %3375 = vmatpush1.bf16.msra.mxu0 %v2653
    %3376 = vmatprep.subr.bf16.mxu0 %v2662
    %3377 = vmatpush1.bf16.msra.mxu0 %v2661
    %3378 = vmatprep.subr.bf16.mxu0 %v2670
    %3379 = vmatpush1.bf16.msra.mxu0 %v2669
    %3380 = vmatprep.subr.bf16.mxu0 %v2678
    %3381 = vmatpush1.bf16.msra.mxu0 %v2677
    %3382 = vmatprep.subr.bf16.mxu0 %v2686
    %3383 = vmatpush1.bf16.msra.mxu0 %v2685
    %3384 = vmatprep.subr.bf16.mxu0 %v2694
    %3385 = vmatpush1.bf16.msra.mxu0 %v2693
    %3386 = vmatprep.subr.bf16.mxu0 %v2702
    %3387 = vmatpush1.bf16.msra.mxu0 %v2701
    %3388 = vmatprep.subr.bf16.mxu0 %v2710
    %3389 = vmatpush1.bf16.msra.mxu0 %v2709
    %3390 = vmatprep.mubr.bf16.mxu0 %v156
    %3391 = vmatmul.mubr.bf16.gmra.mrb[0].mxu0 %v155
    %v3392 = vpop.f32.mrb[0].mxu0
    %v3393 = vadd.f32 %v3350, %v3392
    %v3394 = vpop.f32.mrb[0].mxu0
    %v3395 = vadd.f32 %v3352, %v3394
    %v3396 = vpop.f32.mrb[0].mxu0
    %v3397 = vadd.f32 %v3354, %v3396
    %v3398 = vpop.f32.mrb[0].mxu0
    %v3399 = vadd.f32 %v3356, %v3398
    %3400 = vdwg.mxu0
    %3401 = vmatprep.subr.bf16.mxu0 %v2208
    %3402 = vmatpush1.bf16.msra.mxu0 %v2207
    %3403 = vmatprep.subr.bf16.mxu0 %v2216
    %3404 = vmatpush1.bf16.msra.mxu0 %v2215
    %3405 = vmatprep.subr.bf16.mxu0 %v2224
    %3406 = vmatpush1.bf16.msra.mxu0 %v2223
    %3407 = vmatprep.subr.bf16.mxu0 %v2232
    %3408 = vmatpush1.bf16.msra.mxu0 %v2231
    %3409 = vmatprep.subr.bf16.mxu0 %v2240
    %3410 = vmatpush1.bf16.msra.mxu0 %v2239
    %3411 = vmatprep.subr.bf16.mxu0 %v2248
    %3412 = vmatpush1.bf16.msra.mxu0 %v2247
    %3413 = vmatprep.subr.bf16.mxu0 %v2256
    %3414 = vmatpush1.bf16.msra.mxu0 %v2255
    %3415 = vmatprep.subr.bf16.mxu0 %v2264
    %3416 = vmatpush1.bf16.msra.mxu0 %v2263
    %3417 = vmatprep.subr.bf16.mxu0 %v2272
    %3418 = vmatpush1.bf16.msra.mxu0 %v2271
    %3419 = vmatprep.subr.bf16.mxu0 %v2280
    %3420 = vmatpush1.bf16.msra.mxu0 %v2279
    %3421 = vmatprep.subr.bf16.mxu0 %v2288
    %3422 = vmatpush1.bf16.msra.mxu0 %v2287
    %3423 = vmatprep.subr.bf16.mxu0 %v2296
    %3424 = vmatpush1.bf16.msra.mxu0 %v2295
    %3425 = vmatprep.subr.bf16.mxu0 %v2304
    %3426 = vmatpush1.bf16.msra.mxu0 %v2303
    %3427 = vmatprep.subr.bf16.mxu0 %v2312
    %3428 = vmatpush1.bf16.msra.mxu0 %v2311
    %3429 = vmatprep.subr.bf16.mxu0 %v2320
    %3430 = vmatpush1.bf16.msra.mxu0 %v2319
    %3431 = vmatprep.subr.bf16.mxu0 %v2328
    %3432 = vmatpush1.bf16.msra.mxu0 %v2327
    %3433 = vmatprep.mubr.bf16.mxu0 %v150
    %3434 = vmatmul.mubr.bf16.gmra.mrb[0].mxu0 %v149
    %v3435 = vpop.f32.mrb[0].mxu0
    %v3436 = vadd.f32 0.0, %v3435
    %v3437 = vpop.f32.mrb[0].mxu0
    %v3438 = vadd.f32 0.0, %v3437
    %v3439 = vpop.f32.mrb[0].mxu0
    %v3440 = vadd.f32 0.0, %v3439
    %v3441 = vpop.f32.mrb[0].mxu0
    %v3442 = vadd.f32 0.0, %v3441
    %3443 = vdwg.mxu0
    %3444 = vmatprep.subr.bf16.mxu0 %v2336
    %3445 = vmatpush1.bf16.msra.mxu0 %v2335
    %3446 = vmatprep.subr.bf16.mxu0 %v2344
    %3447 = vmatpush1.bf16.msra.mxu0 %v2343
    %3448 = vmatprep.subr.bf16.mxu0 %v2352
    %3449 = vmatpush1.bf16.msra.mxu0 %v2351
    %3450 = vmatprep.subr.bf16.mxu0 %v2360
    %3451 = vmatpush1.bf16.msra.mxu0 %v2359
    %3452 = vmatprep.subr.bf16.mxu0 %v2368
    %3453 = vmatpush1.bf16.msra.mxu0 %v2367
    %3454 = vmatprep.subr.bf16.mxu0 %v2376
    %3455 = vmatpush1.bf16.msra.mxu0 %v2375
    %3456 = vmatprep.subr.bf16.mxu0 %v2384
    %3457 = vmatpush1.bf16.msra.mxu0 %v2383
    %3458 = vmatprep.subr.bf16.mxu0 %v2392
    %3459 = vmatpush1.bf16.msra.mxu0 %v2391
    %3460 = vmatprep.subr.bf16.mxu0 %v2400
    %3461 = vmatpush1.bf16.msra.mxu0 %v2399
    %3462 = vmatprep.subr.bf16.mxu0 %v2408
    %3463 = vmatpush1.bf16.msra.mxu0 %v2407
    %3464 = vmatprep.subr.bf16.mxu0 %v2416
    %3465 = vmatpush1.bf16.msra.mxu0 %v2415
    %3466 = vmatprep.subr.bf16.mxu0 %v2424
    %3467 = vmatpush1.bf16.msra.mxu0 %v2423
    %3468 = vmatprep.subr.bf16.mxu0 %v2432
    %3469 = vmatpush1.bf16.msra.mxu0 %v2431
    %3470 = vmatprep.subr.bf16.mxu0 %v2440
    %3471 = vmatpush1.bf16.msra.mxu0 %v2439
    %3472 = vmatprep.subr.bf16.mxu0 %v2448
    %3473 = vmatpush1.bf16.msra.mxu0 %v2447
    %3474 = vmatprep.subr.bf16.mxu0 %v2456
    %3475 = vmatpush1.bf16.msra.mxu0 %v2455
    %3476 = vmatprep.mubr.bf16.mxu0 %v152
    %3477 = vmatmul.mubr.bf16.gmra.mrb[0].mxu0 %v151
    %v3478 = vpop.f32.mrb[0].mxu0
    %v3479 = vadd.f32 %v3436, %v3478
    %v3480 = vpop.f32.mrb[0].mxu0
    %v3481 = vadd.f32 %v3438, %v3480
    %v3482 = vpop.f32.mrb[0].mxu0
    %v3483 = vadd.f32 %v3440, %v3482
    %v3484 = vpop.f32.mrb[0].mxu0
    %v3485 = vadd.f32 %v3442, %v3484
    %3486 = vdwg.mxu0
    %3487 = vmatprep.subr.bf16.mxu0 %v2464
    %3488 = vmatpush1.bf16.msra.mxu0 %v2463
    %3489 = vmatprep.subr.bf16.mxu0 %v2472
    %3490 = vmatpush1.bf16.msra.mxu0 %v2471
    %3491 = vmatprep.subr.bf16.mxu0 %v2480
    %3492 = vmatpush1.bf16.msra.mxu0 %v2479
    %3493 = vmatprep.subr.bf16.mxu0 %v2488
    %3494 = vmatpush1.bf16.msra.mxu0 %v2487
    %3495 = vmatprep.subr.bf16.mxu0 %v2496
    %3496 = vmatpush1.bf16.msra.mxu0 %v2495
    %3497 = vmatprep.subr.bf16.mxu0 %v2504
    %3498 = vmatpush1.bf16.msra.mxu0 %v2503
    %3499 = vmatprep.subr.bf16.mxu0 %v2512
    %3500 = vmatpush1.bf16.msra.mxu0 %v2511
    %3501 = vmatprep.subr.bf16.mxu0 %v2520
    %3502 = vmatpush1.bf16.msra.mxu0 %v2519
    %3503 = vmatprep.subr.bf16.mxu0 %v2528
    %3504 = vmatpush1.bf16.msra.mxu0 %v2527
    %3505 = vmatprep.subr.bf16.mxu0 %v2536
    %3506 = vmatpush1.bf16.msra.mxu0 %v2535
    %3507 = vmatprep.subr.bf16.mxu0 %v2544
    %3508 = vmatpush1.bf16.msra.mxu0 %v2543
    %3509 = vmatprep.subr.bf16.mxu0 %v2552
    %3510 = vmatpush1.bf16.msra.mxu0 %v2551
    %3511 = vmatprep.subr.bf16.mxu0 %v2560
    %3512 = vmatpush1.bf16.msra.mxu0 %v2559
    %3513 = vmatprep.subr.bf16.mxu0 %v2568
    %3514 = vmatpush1.bf16.msra.mxu0 %v2567
    %3515 = vmatprep.subr.bf16.mxu0 %v2576
    %3516 = vmatpush1.bf16.msra.mxu0 %v2575
    %3517 = vmatprep.subr.bf16.mxu0 %v2584
    %3518 = vmatpush1.bf16.msra.mxu0 %v2583
    %3519 = vmatprep.mubr.bf16.mxu0 %v154
    %3520 = vmatmul.mubr.bf16.gmra.mrb[0].mxu0 %v153
    %v3521 = vpop.f32.mrb[0].mxu0
    %v3522 = vadd.f32 %v3479, %v3521
    %v3523 = vpop.f32.mrb[0].mxu0
    %v3524 = vadd.f32 %v3481, %v3523
    %v3525 = vpop.f32.mrb[0].mxu0
    %v3526 = vadd.f32 %v3483, %v3525
    %v3527 = vpop.f32.mrb[0].mxu0
    %v3528 = vadd.f32 %v3485, %v3527
    %3529 = vdwg.mxu0
    %3530 = vmatprep.subr.bf16.mxu0 %v2592
    %3531 = vmatpush1.bf16.msra.mxu0 %v2591
    %3532 = vmatprep.subr.bf16.mxu0 %v2600
    %3533 = vmatpush1.bf16.msra.mxu0 %v2599
    %3534 = vmatprep.subr.bf16.mxu0 %v2608
    %3535 = vmatpush1.bf16.msra.mxu0 %v2607
    %3536 = vmatprep.subr.bf16.mxu0 %v2616
    %3537 = vmatpush1.bf16.msra.mxu0 %v2615
    %3538 = vmatprep.subr.bf16.mxu0 %v2624
    %3539 = vmatpush1.bf16.msra.mxu0 %v2623
    %3540 = vmatprep.subr.bf16.mxu0 %v2632
    %3541 = vmatpush1.bf16.msra.mxu0 %v2631
    %3542 = vmatprep.subr.bf16.mxu0 %v2640
    %3543 = vmatpush1.bf16.msra.mxu0 %v2639
    %3544 = vmatprep.subr.bf16.mxu0 %v2648
    %3545 = vmatpush1.bf16.msra.mxu0 %v2647
    %3546 = vmatprep.subr.bf16.mxu0 %v2656
    %3547 = vmatpush1.bf16.msra.mxu0 %v2655
    %3548 = vmatprep.subr.bf16.mxu0 %v2664
    %3549 = vmatpush1.bf16.msra.mxu0 %v2663
    %3550 = vmatprep.subr.bf16.mxu0 %v2672
    %3551 = vmatpush1.bf16.msra.mxu0 %v2671
    %3552 = vmatprep.subr.bf16.mxu0 %v2680
    %3553 = vmatpush1.bf16.msra.mxu0 %v2679
    %3554 = vmatprep.subr.bf16.mxu0 %v2688
    %3555 = vmatpush1.bf16.msra.mxu0 %v2687
    %3556 = vmatprep.subr.bf16.mxu0 %v2696
    %3557 = vmatpush1.bf16.msra.mxu0 %v2695
    %3558 = vmatprep.subr.bf16.mxu0 %v2704
    %3559 = vmatpush1.bf16.msra.mxu0 %v2703
    %3560 = vmatprep.subr.bf16.mxu0 %v2712
    %3561 = vmatpush1.bf16.msra.mxu0 %v2711
    %3562 = vmatprep.mubr.bf16.mxu0 %v156
    %3563 = vmatmul.mubr.bf16.gmra.mrb[0].mxu0 %v155
    %v3564 = vpop.f32.mrb[0].mxu0
    %v3565 = vadd.f32 %v3522, %v3564
    %v3566 = vpop.f32.mrb[0].mxu0
    %v3567 = vadd.f32 %v3524, %v3566
    %v3568 = vpop.f32.mrb[0].mxu0
    %v3569 = vadd.f32 %v3526, %v3568
    %v3570 = vpop.f32.mrb[0].mxu0
    %v3571 = vadd.f32 %v3528, %v3570
    %3572 = vdwg.mxu0
    %3573 = vmatprep.subr.bf16.mxu0 %v2210
    %3574 = vmatpush1.bf16.msra.mxu0 %v2209
    %3575 = vmatprep.subr.bf16.mxu0 %v2218
    %3576 = vmatpush1.bf16.msra.mxu0 %v2217
    %3577 = vmatprep.subr.bf16.mxu0 %v2226
    %3578 = vmatpush1.bf16.msra.mxu0 %v2225
    %3579 = vmatprep.subr.bf16.mxu0 %v2234
    %3580 = vmatpush1.bf16.msra.mxu0 %v2233
    %3581 = vmatprep.subr.bf16.mxu0 %v2242
    %3582 = vmatpush1.bf16.msra.mxu0 %v2241
    %3583 = vmatprep.subr.bf16.mxu0 %v2250
    %3584 = vmatpush1.bf16.msra.mxu0 %v2249
    %3585 = vmatprep.subr.bf16.mxu0 %v2258
    %3586 = vmatpush1.bf16.msra.mxu0 %v2257
    %3587 = vmatprep.subr.bf16.mxu0 %v2266
    %3588 = vmatpush1.bf16.msra.mxu0 %v2265
    %3589 = vmatprep.subr.bf16.mxu0 %v2274
    %3590 = vmatpush1.bf16.msra.mxu0 %v2273
    %3591 = vmatprep.subr.bf16.mxu0 %v2282
    %3592 = vmatpush1.bf16.msra.mxu0 %v2281
    %3593 = vmatprep.subr.bf16.mxu0 %v2290
    %3594 = vmatpush1.bf16.msra.mxu0 %v2289
    %3595 = vmatprep.subr.bf16.mxu0 %v2298
    %3596 = vmatpush1.bf16.msra.mxu0 %v2297
    %3597 = vmatprep.subr.bf16.mxu0 %v2306
    %3598 = vmatpush1.bf16.msra.mxu0 %v2305
    %3599 = vmatprep.subr.bf16.mxu0 %v2314
    %3600 = vmatpush1.bf16.msra.mxu0 %v2313
    %3601 = vmatprep.subr.bf16.mxu0 %v2322
    %3602 = vmatpush1.bf16.msra.mxu0 %v2321
    %3603 = vmatprep.subr.bf16.mxu0 %v2330
    %3604 = vmatpush1.bf16.msra.mxu0 %v2329
    %3605 = vmatprep.mubr.bf16.mxu0 %v150
    %3606 = vmatmul.mubr.bf16.gmra.mrb[0].mxu0 %v149
    %v3607 = vpop.f32.mrb[0].mxu0
    %v3608 = vadd.f32 0.0, %v3607
    %v3609 = vpop.f32.mrb[0].mxu0
    %v3610 = vadd.f32 0.0, %v3609
    %v3611 = vpop.f32.mrb[0].mxu0
    %v3612 = vadd.f32 0.0, %v3611
    %v3613 = vpop.f32.mrb[0].mxu0
    %v3614 = vadd.f32 0.0, %v3613
    %3615 = vdwg.mxu0
    %3616 = vmatprep.subr.bf16.mxu0 %v2338
    %3617 = vmatpush1.bf16.msra.mxu0 %v2337
    %3618 = vmatprep.subr.bf16.mxu0 %v2346
    %3619 = vmatpush1.bf16.msra.mxu0 %v2345
    %3620 = vmatprep.subr.bf16.mxu0 %v2354
    %3621 = vmatpush1.bf16.msra.mxu0 %v2353
    %3622 = vmatprep.subr.bf16.mxu0 %v2362
    %3623 = vmatpush1.bf16.msra.mxu0 %v2361
    %3624 = vmatprep.subr.bf16.mxu0 %v2370
    %3625 = vmatpush1.bf16.msra.mxu0 %v2369
    %3626 = vmatprep.subr.bf16.mxu0 %v2378
    %3627 = vmatpush1.bf16.msra.mxu0 %v2377
    %3628 = vmatprep.subr.bf16.mxu0 %v2386
    %3629 = vmatpush1.bf16.msra.mxu0 %v2385
    %3630 = vmatprep.subr.bf16.mxu0 %v2394
    %3631 = vmatpush1.bf16.msra.mxu0 %v2393
    %3632 = vmatprep.subr.bf16.mxu0 %v2402
    %3633 = vmatpush1.bf16.msra.mxu0 %v2401
    %3634 = vmatprep.subr.bf16.mxu0 %v2410
    %3635 = vmatpush1.bf16.msra.mxu0 %v2409
    %3636 = vmatprep.subr.bf16.mxu0 %v2418
    %3637 = vmatpush1.bf16.msra.mxu0 %v2417
    %3638 = vmatprep.subr.bf16.mxu0 %v2426
    %3639 = vmatpush1.bf16.msra.mxu0 %v2425
    %3640 = vmatprep.subr.bf16.mxu0 %v2434
    %3641 = vmatpush1.bf16.msra.mxu0 %v2433
    %3642 = vmatprep.subr.bf16.mxu0 %v2442
    %3643 = vmatpush1.bf16.msra.mxu0 %v2441
    %3644 = vmatprep.subr.bf16.mxu0 %v2450
    %3645 = vmatpush1.bf16.msra.mxu0 %v2449
    %3646 = vmatprep.subr.bf16.mxu0 %v2458
    %3647 = vmatpush1.bf16.msra.mxu0 %v2457
    %3648 = vmatprep.mubr.bf16.mxu0 %v152
    %3649 = vmatmul.mubr.bf16.gmra.mrb[0].mxu0 %v151
    %v3650 = vpop.f32.mrb[0].mxu0
    %v3651 = vadd.f32 %v3608, %v3650
    %v3652 = vpop.f32.mrb[0].mxu0
    %v3653 = vadd.f32 %v3610, %v3652
    %v3654 = vpop.f32.mrb[0].mxu0
    %v3655 = vadd.f32 %v3612, %v3654
    %v3656 = vpop.f32.mrb[0].mxu0
    %v3657 = vadd.f32 %v3614, %v3656
    %3658 = vdwg.mxu0
    %3659 = vmatprep.subr.bf16.mxu0 %v2466
    %3660 = vmatpush1.bf16.msra.mxu0 %v2465
    %3661 = vmatprep.subr.bf16.mxu0 %v2474
    %3662 = vmatpush1.bf16.msra.mxu0 %v2473
    %3663 = vmatprep.subr.bf16.mxu0 %v2482
    %3664 = vmatpush1.bf16.msra.mxu0 %v2481
    %3665 = vmatprep.subr.bf16.mxu0 %v2490
    %3666 = vmatpush1.bf16.msra.mxu0 %v2489
    %3667 = vmatprep.subr.bf16.mxu0 %v2498
    %3668 = vmatpush1.bf16.msra.mxu0 %v2497
    %3669 = vmatprep.subr.bf16.mxu0 %v2506
    %3670 = vmatpush1.bf16.msra.mxu0 %v2505
    %3671 = vmatprep.subr.bf16.mxu0 %v2514
    %3672 = vmatpush1.bf16.msra.mxu0 %v2513
    %3673 = vmatprep.subr.bf16.mxu0 %v2522
    %3674 = vmatpush1.bf16.msra.mxu0 %v2521
    %3675 = vmatprep.subr.bf16.mxu0 %v2530
    %3676 = vmatpush1.bf16.msra.mxu0 %v2529
    %3677 = vmatprep.subr.bf16.mxu0 %v2538
    %3678 = vmatpush1.bf16.msra.mxu0 %v2537
    %3679 = vmatprep.subr.bf16.mxu0 %v2546
    %3680 = vmatpush1.bf16.msra.mxu0 %v2545
    %3681 = vmatprep.subr.bf16.mxu0 %v2554
    %3682 = vmatpush1.bf16.msra.mxu0 %v2553
    %3683 = vmatprep.subr.bf16.mxu0 %v2562
    %3684 = vmatpush1.bf16.msra.mxu0 %v2561
    %3685 = vmatprep.subr.bf16.mxu0 %v2570
    %3686 = vmatpush1.bf16.msra.mxu0 %v2569
    %3687 = vmatprep.subr.bf16.mxu0 %v2578
    %3688 = vmatpush1.bf16.msra.mxu0 %v2577
    %3689 = vmatprep.subr.bf16.mxu0 %v2586
    %3690 = vmatpush1.bf16.msra.mxu0 %v2585
    %3691 = vmatprep.mubr.bf16.mxu0 %v154
    %3692 = vmatmul.mubr.bf16.gmra.mrb[0].mxu0 %v153
    %v3693 = vpop.f32.mrb[0].mxu0
    %v3694 = vadd.f32 %v3651, %v3693
    %v3695 = vpop.f32.mrb[0].mxu0
    %v3696 = vadd.f32 %v3653, %v3695
    %v3697 = vpop.f32.mrb[0].mxu0
    %v3698 = vadd.f32 %v3655, %v3697
    %v3699 = vpop.f32.mrb[0].mxu0
    %v3700 = vadd.f32 %v3657, %v3699
    %3701 = vdwg.mxu0
    %3702 = vmatprep.subr.bf16.mxu0 %v2594
    %3703 = vmatpush1.bf16.msra.mxu0 %v2593
    %3704 = vmatprep.subr.bf16.mxu0 %v2602
    %3705 = vmatpush1.bf16.msra.mxu0 %v2601
    %3706 = vmatprep.subr.bf16.mxu0 %v2610
    %3707 = vmatpush1.bf16.msra.mxu0 %v2609
    %3708 = vmatprep.subr.bf16.mxu0 %v2618
    %3709 = vmatpush1.bf16.msra.mxu0 %v2617
    %3710 = vmatprep.subr.bf16.mxu0 %v2626
    %3711 = vmatpush1.bf16.msra.mxu0 %v2625
    %3712 = vmatprep.subr.bf16.mxu0 %v2634
    %3713 = vmatpush1.bf16.msra.mxu0 %v2633
    %3714 = vmatprep.subr.bf16.mxu0 %v2642
    %3715 = vmatpush1.bf16.msra.mxu0 %v2641
    %3716 = vmatprep.subr.bf16.mxu0 %v2650
    %3717 = vmatpush1.bf16.msra.mxu0 %v2649
    %3718 = vmatprep.subr.bf16.mxu0 %v2658
    %3719 = vmatpush1.bf16.msra.mxu0 %v2657
    %3720 = vmatprep.subr.bf16.mxu0 %v2666
    %3721 = vmatpush1.bf16.msra.mxu0 %v2665
    %3722 = vmatprep.subr.bf16.mxu0 %v2674
    %3723 = vmatpush1.bf16.msra.mxu0 %v2673
    %3724 = vmatprep.subr.bf16.mxu0 %v2682
    %3725 = vmatpush1.bf16.msra.mxu0 %v2681
    %3726 = vmatprep.subr.bf16.mxu0 %v2690
    %3727 = vmatpush1.bf16.msra.mxu0 %v2689
    %3728 = vmatprep.subr.bf16.mxu0 %v2698
    %3729 = vmatpush1.bf16.msra.mxu0 %v2697
    %3730 = vmatprep.subr.bf16.mxu0 %v2706
    %3731 = vmatpush1.bf16.msra.mxu0 %v2705
    %3732 = vmatprep.subr.bf16.mxu0 %v2714
    %3733 = vmatpush1.bf16.msra.mxu0 %v2713
    %3734 = vmatprep.mubr.bf16.mxu0 %v156
    %3735 = vmatmul.mubr.bf16.gmra.mrb[0].mxu0 %v155
    %v3736 = vpop.f32.mrb[0].mxu0
    %v3737 = vadd.f32 %v3694, %v3736
    %v3738 = vpop.f32.mrb[0].mxu0
    %v3739 = vadd.f32 %v3696, %v3738
    %v3740 = vpop.f32.mrb[0].mxu0
    %v3741 = vadd.f32 %v3698, %v3740
    %v3742 = vpop.f32.mrb[0].mxu0
    %v3743 = vadd.f32 %v3700, %v3742
    %3744 = vdwg.mxu0
    %3745 = vmatprep.subr.bf16.mxu0 %v2212
    %3746 = vmatpush1.bf16.msra.mxu0 %v2211
    %3747 = vmatprep.subr.bf16.mxu0 %v2220
    %3748 = vmatpush1.bf16.msra.mxu0 %v2219
    %3749 = vmatprep.subr.bf16.mxu0 %v2228
    %3750 = vmatpush1.bf16.msra.mxu0 %v2227
    %3751 = vmatprep.subr.bf16.mxu0 %v2236
    %3752 = vmatpush1.bf16.msra.mxu0 %v2235
    %3753 = vmatprep.subr.bf16.mxu0 %v2244
    %3754 = vmatpush1.bf16.msra.mxu0 %v2243
    %3755 = vmatprep.subr.bf16.mxu0 %v2252
    %3756 = vmatpush1.bf16.msra.mxu0 %v2251
    %3757 = vmatprep.subr.bf16.mxu0 %v2260
    %3758 = vmatpush1.bf16.msra.mxu0 %v2259
    %3759 = vmatprep.subr.bf16.mxu0 %v2268
    %3760 = vmatpush1.bf16.msra.mxu0 %v2267
    %3761 = vmatprep.subr.bf16.mxu0 %v2276
    %3762 = vmatpush1.bf16.msra.mxu0 %v2275
    %3763 = vmatprep.subr.bf16.mxu0 %v2284
    %3764 = vmatpush1.bf16.msra.mxu0 %v2283
    %3765 = vmatprep.subr.bf16.mxu0 %v2292
    %3766 = vmatpush1.bf16.msra.mxu0 %v2291
    %3767 = vmatprep.subr.bf16.mxu0 %v2300
    %3768 = vmatpush1.bf16.msra.mxu0 %v2299
    %3769 = vmatprep.subr.bf16.mxu0 %v2308
    %3770 = vmatpush1.bf16.msra.mxu0 %v2307
    %3771 = vmatprep.subr.bf16.mxu0 %v2316
    %3772 = vmatpush1.bf16.msra.mxu0 %v2315
    %3773 = vmatprep.subr.bf16.mxu0 %v2324
    %3774 = vmatpush1.bf16.msra.mxu0 %v2323
    %3775 = vmatprep.subr.bf16.mxu0 %v2332
    %3776 = vmatpush1.bf16.msra.mxu0 %v2331
    %3777 = vmatprep.mubr.bf16.mxu0 %v150
    %3778 = vmatmul.mubr.bf16.gmra.mrb[0].mxu0 %v149
    %v3779 = vpop.f32.mrb[0].mxu0
    %v3780 = vadd.f32 0.0, %v3779
    %v3781 = vpop.f32.mrb[0].mxu0
    %v3782 = vadd.f32 0.0, %v3781
    %v3783 = vpop.f32.mrb[0].mxu0
    %v3784 = vadd.f32 0.0, %v3783
    %v3785 = vpop.f32.mrb[0].mxu0
    %v3786 = vadd.f32 0.0, %v3785
    %3787 = vdwg.mxu0
    %3788 = vmatprep.subr.bf16.mxu0 %v2340
    %3789 = vmatpush1.bf16.msra.mxu0 %v2339
    %3790 = vmatprep.subr.bf16.mxu0 %v2348
    %3791 = vmatpush1.bf16.msra.mxu0 %v2347
    %3792 = vmatprep.subr.bf16.mxu0 %v2356
    %3793 = vmatpush1.bf16.msra.mxu0 %v2355
    %3794 = vmatprep.subr.bf16.mxu0 %v2364
    %3795 = vmatpush1.bf16.msra.mxu0 %v2363
    %3796 = vmatprep.subr.bf16.mxu0 %v2372
    %3797 = vmatpush1.bf16.msra.mxu0 %v2371
    %3798 = vmatprep.subr.bf16.mxu0 %v2380
    %3799 = vmatpush1.bf16.msra.mxu0 %v2379
    %3800 = vmatprep.subr.bf16.mxu0 %v2388
    %3801 = vmatpush1.bf16.msra.mxu0 %v2387
    %3802 = vmatprep.subr.bf16.mxu0 %v2396
    %3803 = vmatpush1.bf16.msra.mxu0 %v2395
    %3804 = vmatprep.subr.bf16.mxu0 %v2404
    %3805 = vmatpush1.bf16.msra.mxu0 %v2403
    %3806 = vmatprep.subr.bf16.mxu0 %v2412
    %3807 = vmatpush1.bf16.msra.mxu0 %v2411
    %3808 = vmatprep.subr.bf16.mxu0 %v2420
    %3809 = vmatpush1.bf16.msra.mxu0 %v2419
    %3810 = vmatprep.subr.bf16.mxu0 %v2428
    %3811 = vmatpush1.bf16.msra.mxu0 %v2427
    %3812 = vmatprep.subr.bf16.mxu0 %v2436
    %3813 = vmatpush1.bf16.msra.mxu0 %v2435
    %3814 = vmatprep.subr.bf16.mxu0 %v2444
    %3815 = vmatpush1.bf16.msra.mxu0 %v2443
    %3816 = vmatprep.subr.bf16.mxu0 %v2452
    %3817 = vmatpush1.bf16.msra.mxu0 %v2451
    %3818 = vmatprep.subr.bf16.mxu0 %v2460
    %3819 = vmatpush1.bf16.msra.mxu0 %v2459
    %3820 = vmatprep.mubr.bf16.mxu0 %v152
    %3821 = vmatmul.mubr.bf16.gmra.mrb[0].mxu0 %v151
    %v3822 = vpop.f32.mrb[0].mxu0
    %v3823 = vadd.f32 %v3780, %v3822
    %v3824 = vpop.f32.mrb[0].mxu0
    %v3825 = vadd.f32 %v3782, %v3824
    %v3826 = vpop.f32.mrb[0].mxu0
    %v3827 = vadd.f32 %v3784, %v3826
    %v3828 = vpop.f32.mrb[0].mxu0
    %v3829 = vadd.f32 %v3786, %v3828
    %3830 = vdwg.mxu0
    %3831 = vmatprep.subr.bf16.mxu0 %v2468
    %3832 = vmatpush1.bf16.msra.mxu0 %v2467
    %3833 = vmatprep.subr.bf16.mxu0 %v2476
    %3834 = vmatpush1.bf16.msra.mxu0 %v2475
    %3835 = vmatprep.subr.bf16.mxu0 %v2484
    %3836 = vmatpush1.bf16.msra.mxu0 %v2483
    %3837 = vmatprep.subr.bf16.mxu0 %v2492
    %3838 = vmatpush1.bf16.msra.mxu0 %v2491
    %3839 = vmatprep.subr.bf16.mxu0 %v2500
    %3840 = vmatpush1.bf16.msra.mxu0 %v2499
    %3841 = vmatprep.subr.bf16.mxu0 %v2508
    %3842 = vmatpush1.bf16.msra.mxu0 %v2507
    %3843 = vmatprep.subr.bf16.mxu0 %v2516
    %3844 = vmatpush1.bf16.msra.mxu0 %v2515
    %3845 = vmatprep.subr.bf16.mxu0 %v2524
    %3846 = vmatpush1.bf16.msra.mxu0 %v2523
    %3847 = vmatprep.subr.bf16.mxu0 %v2532
    %3848 = vmatpush1.bf16.msra.mxu0 %v2531
    %3849 = vmatprep.subr.bf16.mxu0 %v2540
    %3850 = vmatpush1.bf16.msra.mxu0 %v2539
    %3851 = vmatprep.subr.bf16.mxu0 %v2548
    %3852 = vmatpush1.bf16.msra.mxu0 %v2547
    %3853 = vmatprep.subr.bf16.mxu0 %v2556
    %3854 = vmatpush1.bf16.msra.mxu0 %v2555
    %3855 = vmatprep.subr.bf16.mxu0 %v2564
    %3856 = vmatpush1.bf16.msra.mxu0 %v2563
    %3857 = vmatprep.subr.bf16.mxu0 %v2572
    %3858 = vmatpush1.bf16.msra.mxu0 %v2571
    %3859 = vmatprep.subr.bf16.mxu0 %v2580
    %3860 = vmatpush1.bf16.msra.mxu0 %v2579
    %3861 = vmatprep.subr.bf16.mxu0 %v2588
    %3862 = vmatpush1.bf16.msra.mxu0 %v2587
    %3863 = vmatprep.mubr.bf16.mxu0 %v154
    %3864 = vmatmul.mubr.bf16.gmra.mrb[0].mxu0 %v153
    %v3865 = vpop.f32.mrb[0].mxu0
    %v3866 = vadd.f32 %v3823, %v3865
    %v3867 = vpop.f32.mrb[0].mxu0
    %v3868 = vadd.f32 %v3825, %v3867
    %v3869 = vpop.f32.mrb[0].mxu0
    %v3870 = vadd.f32 %v3827, %v3869
    %v3871 = vpop.f32.mrb[0].mxu0
    %v3872 = vadd.f32 %v3829, %v3871
    %3873 = vdwg.mxu0
    %3874 = vmatprep.subr.bf16.mxu0 %v2596
    %3875 = vmatpush1.bf16.msra.mxu0 %v2595
    %3876 = vmatprep.subr.bf16.mxu0 %v2604
    %3877 = vmatpush1.bf16.msra.mxu0 %v2603
    %3878 = vmatprep.subr.bf16.mxu0 %v2612
    %3879 = vmatpush1.bf16.msra.mxu0 %v2611
    %3880 = vmatprep.subr.bf16.mxu0 %v2620
    %3881 = vmatpush1.bf16.msra.mxu0 %v2619
    %3882 = vmatprep.subr.bf16.mxu0 %v2628
    %3883 = vmatpush1.bf16.msra.mxu0 %v2627
    %3884 = vmatprep.subr.bf16.mxu0 %v2636
    %3885 = vmatpush1.bf16.msra.mxu0 %v2635
    %3886 = vmatprep.subr.bf16.mxu0 %v2644
    %3887 = vmatpush1.bf16.msra.mxu0 %v2643
    %3888 = vmatprep.subr.bf16.mxu0 %v2652
    %3889 = vmatpush1.bf16.msra.mxu0 %v2651
    %3890 = vmatprep.subr.bf16.mxu0 %v2660
    %3891 = vmatpush1.bf16.msra.mxu0 %v2659
    %3892 = vmatprep.subr.bf16.mxu0 %v2668
    %3893 = vmatpush1.bf16.msra.mxu0 %v2667
    %3894 = vmatprep.subr.bf16.mxu0 %v2676
    %3895 = vmatpush1.bf16.msra.mxu0 %v2675
    %3896 = vmatprep.subr.bf16.mxu0 %v2684
    %3897 = vmatpush1.bf16.msra.mxu0 %v2683
    %3898 = vmatprep.subr.bf16.mxu0 %v2692
    %3899 = vmatpush1.bf16.msra.mxu0 %v2691
    %3900 = vmatprep.subr.bf16.mxu0 %v2700
    %3901 = vmatpush1.bf16.msra.mxu0 %v2699
    %3902 = vmatprep.subr.bf16.mxu0 %v2708
    %3903 = vmatpush1.bf16.msra.mxu0 %v2707
    %3904 = vmatprep.subr.bf16.mxu0 %v2716
    %3905 = vmatpush1.bf16.msra.mxu0 %v2715
    %3906 = vmatprep.mubr.bf16.mxu0 %v156
    %3907 = vmatmul.mubr.bf16.gmra.mrb[0].mxu0 %v155
    %v3908 = vpop.f32.mrb[0].mxu0
    %v3909 = vadd.f32 %v3866, %v3908
    %v3910 = vpop.f32.mrb[0].mxu0
    %v3911 = vadd.f32 %v3868, %v3910
    %v3912 = vpop.f32.mrb[0].mxu0
    %v3913 = vadd.f32 %v3870, %v3912
    %v3914 = vpop.f32.mrb[0].mxu0
    %v3915 = vadd.f32 %v3872, %v3914
    %3916 = vdwg.mxu0
    %p3917 = scmp.eq.s32.totalorder 0, 0
    // Predicated region
    $region70: #{light_angles_head.1} parent=1 // pred_check
      %p3918 = pneg %p3917
    $region71: #{light_angles_head.1} parent=1 // pred_check_branch
      %3920 = sbr.rel (%p3918) target = $region73
    $region72: #{light_angles_head.1} parent=1 // pred_region
      %s3921 = smul.u32 0, 16
      %s3922 = smul.addr %s3921, 8
      %s3923 = scalar_lea.vmem [#allocation2], %s3922
      %3924 = vst [vmem:[%s3923] sm:$0xff] %v3393
      %3925 = vst [vmem:[%s3923 + $0x8] sm:$0xff] %v3395
      %3926 = vst [vmem:[%s3923 + $0x10] sm:$0xff] %v3565
      %3927 = vst [vmem:[%s3923 + $0x18] sm:$0xff] %v3567
      %3928 = vst [vmem:[%s3923 + $0x20] sm:$0xff] %v3737
      %3929 = vst [vmem:[%s3923 + $0x28] sm:$0xff] %v3739
      %3930 = vst [vmem:[%s3923 + $0x30] sm:$0xff] %v3909
      %3931 = vst [vmem:[%s3923 + $0x38] sm:$0xff] %v3911
      %3932 = vst [vmem:[%s3923 + $0x40] sm:$0xff] %v3397
      %3933 = vst [vmem:[%s3923 + $0x48] sm:$0xff] %v3399
      %3934 = vst [vmem:[%s3923 + $0x50] sm:$0xff] %v3569
      %3935 = vst [vmem:[%s3923 + $0x58] sm:$0xff] %v3571
      %3936 = vst [vmem:[%s3923 + $0x60] sm:$0xff] %v3741
      %3937 = vst [vmem:[%s3923 + $0x68] sm:$0xff] %v3743
      %3938 = vst [vmem:[%s3923 + $0x70] sm:$0xff] %v3913
      %3939 = vst [vmem:[%s3923 + $0x78] sm:$0xff] %v3915
    $region73: #{light_angles_head.1} parent=1 // pred_fallthru
      _
    %p3940 = scmp.gt.s32.totalorder 0, 0
    // Predicated region
    $region74: #{light_angles_head.1} parent=1 // pred_check
      %p3941 = pneg %p3940
    $region75: #{light_angles_head.1} parent=1 // pred_check_branch
      %3943 = sbr.rel (%p3941) target = $region77
    $region76: #{light_angles_head.1} parent=1 // pred_region
      %s3944 = smul.u32 0, 16
      %s3945 = smul.addr %s3944, 8
      %s3946 = scalar_lea.vmem [#allocation2], %s3945
      %v3947 = vld [vmem:[%s3946] sm:$0xff]
      %v3948 = vld [vmem:[%s3946 + $0x8] sm:$0xff]
      %v3949 = vld [vmem:[%s3946 + $0x10] sm:$0xff]
      %v3950 = vld [vmem:[%s3946 + $0x18] sm:$0xff]
      %v3951 = vld [vmem:[%s3946 + $0x20] sm:$0xff]
      %v3952 = vld [vmem:[%s3946 + $0x28] sm:$0xff]
      %v3953 = vld [vmem:[%s3946 + $0x30] sm:$0xff]
      %v3954 = vld [vmem:[%s3946 + $0x38] sm:$0xff]
      %v3955 = vld [vmem:[%s3946 + $0x40] sm:$0xff]
      %v3956 = vld [vmem:[%s3946 + $0x48] sm:$0xff]
      %v3957 = vld [vmem:[%s3946 + $0x50] sm:$0xff]
      %v3958 = vld [vmem:[%s3946 + $0x58] sm:$0xff]
      %v3959 = vld [vmem:[%s3946 + $0x60] sm:$0xff]
      %v3960 = vld [vmem:[%s3946 + $0x68] sm:$0xff]
      %v3961 = vld [vmem:[%s3946 + $0x70] sm:$0xff]
      %v3962 = vld [vmem:[%s3946 + $0x78] sm:$0xff]
      %v3963 = vadd.f32 %v3947, %v3393
      %v3964 = vadd.f32 %v3948, %v3395
      %v3965 = vadd.f32 %v3949, %v3565
      %v3966 = vadd.f32 %v3950, %v3567
      %v3967 = vadd.f32 %v3951, %v3737
      %v3968 = vadd.f32 %v3952, %v3739
      %v3969 = vadd.f32 %v3953, %v3909
      %v3970 = vadd.f32 %v3954, %v3911
      %v3971 = vadd.f32 %v3955, %v3397
      %v3972 = vadd.f32 %v3956, %v3399
      %v3973 = vadd.f32 %v3957, %v3569
      %v3974 = vadd.f32 %v3958, %v3571
      %v3975 = vadd.f32 %v3959, %v3741
      %v3976 = vadd.f32 %v3960, %v3743
      %v3977 = vadd.f32 %v3961, %v3913
      %v3978 = vadd.f32 %v3962, %v3915
      %3979 = vst [vmem:[%s3946] sm:$0xff] %v3963
      %3980 = vst [vmem:[%s3946 + $0x8] sm:$0xff] %v3964
      %3981 = vst [vmem:[%s3946 + $0x10] sm:$0xff] %v3965
      %3982 = vst [vmem:[%s3946 + $0x18] sm:$0xff] %v3966
      %3983 = vst [vmem:[%s3946 + $0x20] sm:$0xff] %v3967
      %3984 = vst [vmem:[%s3946 + $0x28] sm:$0xff] %v3968
      %3985 = vst [vmem:[%s3946 + $0x30] sm:$0xff] %v3969
      %3986 = vst [vmem:[%s3946 + $0x38] sm:$0xff] %v3970
      %3987 = vst [vmem:[%s3946 + $0x40] sm:$0xff] %v3971
      %3988 = vst [vmem:[%s3946 + $0x48] sm:$0xff] %v3972
      %3989 = vst [vmem:[%s3946 + $0x50] sm:$0xff] %v3973
      %3990 = vst [vmem:[%s3946 + $0x58] sm:$0xff] %v3974
      %3991 = vst [vmem:[%s3946 + $0x60] sm:$0xff] %v3975
      %3992 = vst [vmem:[%s3946 + $0x68] sm:$0xff] %v3976
      %3993 = vst [vmem:[%s3946 + $0x70] sm:$0xff] %v3977
      %3994 = vst [vmem:[%s3946 + $0x78] sm:$0xff] %v3978
    $region77: #{light_angles_head.1} parent=1 // pred_fallthru
      _
    // Predicated region
    $region78: #{light_angles_head.1} parent=1 // pred_check
      %p3995 = pneg %p3917
    $region79: #{light_angles_head.1} parent=1 // pred_check_branch
      %3997 = sbr.rel (%p3995) target = $region81
    $region80: #{light_angles_head.1} parent=1 // pred_region
      %s3998 = smul.u32 0, 16
      %s3999 = smul.addr %s3998, 8
      %s4000 = scalar_lea.vmem [#allocation2], %s3999
      %v4001 = vld [vmem:[%s4000] sm:$0xff]
      %v4002 = vld [vmem:[%s4000 + $0x8] sm:$0xff]
      %v4003 = vld [vmem:[%s4000 + $0x10] sm:$0xff]
      %v4004 = vld [vmem:[%s4000 + $0x18] sm:$0xff]
      %v4005 = vld [vmem:[%s4000 + $0x20] sm:$0xff]
      %v4006 = vld [vmem:[%s4000 + $0x28] sm:$0xff]
      %v4007 = vld [vmem:[%s4000 + $0x30] sm:$0xff]
      %v4008 = vld [vmem:[%s4000 + $0x38] sm:$0xff]
      %v4009 = vld [vmem:[%s4000 + $0x40] sm:$0xff]
      %v4010 = vld [vmem:[%s4000 + $0x48] sm:$0xff]
      %v4011 = vld [vmem:[%s4000 + $0x50] sm:$0xff]
      %v4012 = vld [vmem:[%s4000 + $0x58] sm:$0xff]
      %v4013 = vld [vmem:[%s4000 + $0x60] sm:$0xff]
      %v4014 = vld [vmem:[%s4000 + $0x68] sm:$0xff]
      %v4015 = vld [vmem:[%s4000 + $0x70] sm:$0xff]
      %v4016 = vld [vmem:[%s4000 + $0x78] sm:$0xff]
      %v4017 = vld [vmem:[#allocation5] sm:$0xff]
      %v4019 = vlaneseq
      %v4020 = vshrl.u32 %v4019, 7
      %v4021 = vsub.s32 0, %v4020
      %v4022 = vrot.slane %v4017, %v4021
      %v4023 = vlaneseq
      %v4024 = vshrl.u32 %v4023, 7
      %v4025 = vsub.s32 1, %v4024
      %v4026 = vrot.slane %v4017, %v4025
      %v4027 = vlaneseq
      %v4028 = vshrl.u32 %v4027, 7
      %v4029 = vsub.s32 2, %v4028
      %v4030 = vrot.slane %v4017, %v4029
      %v4031 = vlaneseq
      %v4032 = vshrl.u32 %v4031, 7
      %v4033 = vsub.s32 3, %v4032
      %v4034 = vrot.slane %v4017, %v4033
      %v4035 = vlaneseq
      %v4036 = vshrl.u32 %v4035, 7
      %v4037 = vsub.s32 4, %v4036
      %v4038 = vrot.slane %v4017, %v4037
      %v4039 = vlaneseq
      %v4040 = vshrl.u32 %v4039, 7
      %v4041 = vsub.s32 5, %v4040
      %v4042 = vrot.slane %v4017, %v4041
      %v4043 = vlaneseq
      %v4044 = vshrl.u32 %v4043, 7
      %v4045 = vsub.s32 6, %v4044
      %v4046 = vrot.slane %v4017, %v4045
      %v4047 = vlaneseq
      %v4048 = vshrl.u32 %v4047, 7
      %v4049 = vsub.s32 7, %v4048
      %v4050 = vrot.slane %v4017, %v4049
      %v4059 = vadd.f32 %v4001, %v4022
      %v4060 = vadd.f32 %v4002, %v4026
      %v4061 = vadd.f32 %v4003, %v4030
      %v4062 = vadd.f32 %v4004, %v4034
      %v4063 = vadd.f32 %v4005, %v4038
      %v4064 = vadd.f32 %v4006, %v4042
      %v4065 = vadd.f32 %v4007, %v4046
      %v4066 = vadd.f32 %v4008, %v4050
      %v4067 = vadd.f32 %v4009, %v4022
      %v4068 = vadd.f32 %v4010, %v4026
      %v4069 = vadd.f32 %v4011, %v4030
      %v4070 = vadd.f32 %v4012, %v4034
      %v4071 = vadd.f32 %v4013, %v4038
      %v4072 = vadd.f32 %v4014, %v4042
      %v4073 = vadd.f32 %v4015, %v4046
      %v4074 = vadd.f32 %v4016, %v4050
      %v4075 = vmax.f32 %v4059, 0.0
      %v4076 = vmax.f32 %v4060, 0.0
      %v4077 = vmax.f32 %v4061, 0.0
      %v4078 = vmax.f32 %v4062, 0.0
      %v4079 = vmax.f32 %v4063, 0.0
      %v4080 = vmax.f32 %v4064, 0.0
      %v4081 = vmax.f32 %v4065, 0.0
      %v4082 = vmax.f32 %v4066, 0.0
      %v4083 = vmax.f32 %v4067, 0.0
      %v4084 = vmax.f32 %v4068, 0.0
      %v4085 = vmax.f32 %v4069, 0.0
      %v4086 = vmax.f32 %v4070, 0.0
      %v4087 = vmax.f32 %v4071, 0.0
      %v4088 = vmax.f32 %v4072, 0.0
      %v4089 = vmax.f32 %v4073, 0.0
      %v4090 = vmax.f32 %v4074, 0.0
      %v4091 = vld [vmem:[#allocation7] sm:$0xff]
      %v4092 = vld [vmem:[#allocation7 + $0x8] sm:$0xff]
      %v4093 = vld [vmem:[#allocation7 + $0x10] sm:$0xff]
      %v4094 = vld [vmem:[#allocation7 + $0x18] sm:$0xff]
      %v4095 = vld [vmem:[#allocation7 + $0x20] sm:$0xff]
      %v4096 = vld [vmem:[#allocation7 + $0x28] sm:$0xff]
      %v4097 = vld [vmem:[#allocation7 + $0x30] sm:$0xff]
      %v4098 = vld [vmem:[#allocation7 + $0x38] sm:$0xff]
      %v4099 = vld [vmem:[#allocation7 + $0x40] sm:$0xff]
      %v4100 = vld [vmem:[#allocation7 + $0x48] sm:$0xff]
      %v4101 = vld [vmem:[#allocation7 + $0x50] sm:$0xff]
      %v4102 = vld [vmem:[#allocation7 + $0x58] sm:$0xff]
      %v4103 = vld [vmem:[#allocation7 + $0x60] sm:$0xff]
      %v4104 = vld [vmem:[#allocation7 + $0x68] sm:$0xff]
      %v4105 = vld [vmem:[#allocation7 + $0x70] sm:$0xff]
      %v4106 = vld [vmem:[#allocation7 + $0x78] sm:$0xff]
      %v4107 = vld [vmem:[#allocation7 + $0x80] sm:$0xff]
      %v4108 = vld [vmem:[#allocation7 + $0x88] sm:$0xff]
      %v4109 = vld [vmem:[#allocation7 + $0x90] sm:$0xff]
      %v4110 = vld [vmem:[#allocation7 + $0x98] sm:$0xff]
      %v4111 = vld [vmem:[#allocation7 + $0xa0] sm:$0xff]
      %v4112 = vld [vmem:[#allocation7 + $0xa8] sm:$0xff]
      %v4113 = vld [vmem:[#allocation7 + $0xb0] sm:$0xff]
      %v4114 = vld [vmem:[#allocation7 + $0xb8] sm:$0xff]
      %v4115 = vld [vmem:[#allocation7 + $0xc0] sm:$0xff]
      %v4116 = vld [vmem:[#allocation7 + $0xc8] sm:$0xff]
      %v4117 = vld [vmem:[#allocation7 + $0xd0] sm:$0xff]
      %v4118 = vld [vmem:[#allocation7 + $0xd8] sm:$0xff]
      %v4119 = vld [vmem:[#allocation7 + $0xe0] sm:$0xff]
      %v4120 = vld [vmem:[#allocation7 + $0xe8] sm:$0xff]
      %v4121 = vld [vmem:[#allocation7 + $0xf0] sm:$0xff]
      %v4122 = vld [vmem:[#allocation7 + $0xf8] sm:$0xff]
      %v4123 = vld [vmem:[#allocation7 + $0x100] sm:$0xff]
      %v4124 = vld [vmem:[#allocation7 + $0x108] sm:$0xff]
      %v4125 = vld [vmem:[#allocation7 + $0x110] sm:$0xff]
      %v4126 = vld [vmem:[#allocation7 + $0x118] sm:$0xff]
      %v4127 = vld [vmem:[#allocation7 + $0x120] sm:$0xff]
      %v4128 = vld [vmem:[#allocation7 + $0x128] sm:$0xff]
      %v4129 = vld [vmem:[#allocation7 + $0x130] sm:$0xff]
      %v4130 = vld [vmem:[#allocation7 + $0x138] sm:$0xff]
      %v4131 = vld [vmem:[#allocation7 + $0x140] sm:$0xff]
      %v4132 = vld [vmem:[#allocation7 + $0x148] sm:$0xff]
      %v4133 = vld [vmem:[#allocation7 + $0x150] sm:$0xff]
      %v4134 = vld [vmem:[#allocation7 + $0x158] sm:$0xff]
      %v4135 = vld [vmem:[#allocation7 + $0x160] sm:$0xff]
      %v4136 = vld [vmem:[#allocation7 + $0x168] sm:$0xff]
      %v4137 = vld [vmem:[#allocation7 + $0x170] sm:$0xff]
      %v4138 = vld [vmem:[#allocation7 + $0x178] sm:$0xff]
      %v4139 = vld [vmem:[#allocation7 + $0x180] sm:$0xff]
      %v4140 = vld [vmem:[#allocation7 + $0x188] sm:$0xff]
      %v4141 = vld [vmem:[#allocation7 + $0x190] sm:$0xff]
      %v4142 = vld [vmem:[#allocation7 + $0x198] sm:$0xff]
      %v4143 = vld [vmem:[#allocation7 + $0x1a0] sm:$0xff]
      %v4144 = vld [vmem:[#allocation7 + $0x1a8] sm:$0xff]
      %v4145 = vld [vmem:[#allocation7 + $0x1b0] sm:$0xff]
      %v4146 = vld [vmem:[#allocation7 + $0x1b8] sm:$0xff]
      %v4147 = vld [vmem:[#allocation7 + $0x1c0] sm:$0xff]
      %v4148 = vld [vmem:[#allocation7 + $0x1c8] sm:$0xff]
      %v4149 = vld [vmem:[#allocation7 + $0x1d0] sm:$0xff]
      %v4150 = vld [vmem:[#allocation7 + $0x1d8] sm:$0xff]
      %v4151 = vld [vmem:[#allocation7 + $0x1e0] sm:$0xff]
      %v4152 = vld [vmem:[#allocation7 + $0x1e8] sm:$0xff]
      %v4153 = vld [vmem:[#allocation7 + $0x1f0] sm:$0xff]
      %v4154 = vld [vmem:[#allocation7 + $0x1f8] sm:$0xff]
      %v4155 = vld [vmem:[#allocation7 + $0x200] sm:$0xff]
      %v4156 = vld [vmem:[#allocation7 + $0x208] sm:$0xff]
      %v4157 = vld [vmem:[#allocation7 + $0x210] sm:$0xff]
      %v4158 = vld [vmem:[#allocation7 + $0x218] sm:$0xff]
      %v4159 = vld [vmem:[#allocation7 + $0x220] sm:$0xff]
      %v4160 = vld [vmem:[#allocation7 + $0x228] sm:$0xff]
      %v4161 = vld [vmem:[#allocation7 + $0x230] sm:$0xff]
      %v4162 = vld [vmem:[#allocation7 + $0x238] sm:$0xff]
      %v4163 = vld [vmem:[#allocation7 + $0x240] sm:$0xff]
      %v4164 = vld [vmem:[#allocation7 + $0x248] sm:$0xff]
      %v4165 = vld [vmem:[#allocation7 + $0x250] sm:$0xff]
      %v4166 = vld [vmem:[#allocation7 + $0x258] sm:$0xff]
      %v4167 = vld [vmem:[#allocation7 + $0x260] sm:$0xff]
      %v4168 = vld [vmem:[#allocation7 + $0x268] sm:$0xff]
      %v4169 = vld [vmem:[#allocation7 + $0x270] sm:$0xff]
      %v4170 = vld [vmem:[#allocation7 + $0x278] sm:$0xff]
      %v4171 = vld [vmem:[#allocation7 + $0x280] sm:$0xff]
      %v4172 = vld [vmem:[#allocation7 + $0x288] sm:$0xff]
      %v4173 = vld [vmem:[#allocation7 + $0x290] sm:$0xff]
      %v4174 = vld [vmem:[#allocation7 + $0x298] sm:$0xff]
      %v4175 = vld [vmem:[#allocation7 + $0x2a0] sm:$0xff]
      %v4176 = vld [vmem:[#allocation7 + $0x2a8] sm:$0xff]
      %v4177 = vld [vmem:[#allocation7 + $0x2b0] sm:$0xff]
      %v4178 = vld [vmem:[#allocation7 + $0x2b8] sm:$0xff]
      %v4179 = vld [vmem:[#allocation7 + $0x2c0] sm:$0xff]
      %v4180 = vld [vmem:[#allocation7 + $0x2c8] sm:$0xff]
      %v4181 = vld [vmem:[#allocation7 + $0x2d0] sm:$0xff]
      %v4182 = vld [vmem:[#allocation7 + $0x2d8] sm:$0xff]
      %v4183 = vld [vmem:[#allocation7 + $0x2e0] sm:$0xff]
      %v4184 = vld [vmem:[#allocation7 + $0x2e8] sm:$0xff]
      %v4185 = vld [vmem:[#allocation7 + $0x2f0] sm:$0xff]
      %v4186 = vld [vmem:[#allocation7 + $0x2f8] sm:$0xff]
      %v4187 = vld [vmem:[#allocation7 + $0x300] sm:$0xff]
      %v4188 = vld [vmem:[#allocation7 + $0x308] sm:$0xff]
      %v4189 = vld [vmem:[#allocation7 + $0x310] sm:$0xff]
      %v4190 = vld [vmem:[#allocation7 + $0x318] sm:$0xff]
      %v4191 = vld [vmem:[#allocation7 + $0x320] sm:$0xff]
      %v4192 = vld [vmem:[#allocation7 + $0x328] sm:$0xff]
      %v4193 = vld [vmem:[#allocation7 + $0x330] sm:$0xff]
      %v4194 = vld [vmem:[#allocation7 + $0x338] sm:$0xff]
      %v4195 = vld [vmem:[#allocation7 + $0x340] sm:$0xff]
      %v4196 = vld [vmem:[#allocation7 + $0x348] sm:$0xff]
      %v4197 = vld [vmem:[#allocation7 + $0x350] sm:$0xff]
      %v4198 = vld [vmem:[#allocation7 + $0x358] sm:$0xff]
      %v4199 = vld [vmem:[#allocation7 + $0x360] sm:$0xff]
      %v4200 = vld [vmem:[#allocation7 + $0x368] sm:$0xff]
      %v4201 = vld [vmem:[#allocation7 + $0x370] sm:$0xff]
      %v4202 = vld [vmem:[#allocation7 + $0x378] sm:$0xff]
      %v4203 = vld [vmem:[#allocation7 + $0x380] sm:$0xff]
      %v4204 = vld [vmem:[#allocation7 + $0x388] sm:$0xff]
      %v4205 = vld [vmem:[#allocation7 + $0x390] sm:$0xff]
      %v4206 = vld [vmem:[#allocation7 + $0x398] sm:$0xff]
      %v4207 = vld [vmem:[#allocation7 + $0x3a0] sm:$0xff]
      %v4208 = vld [vmem:[#allocation7 + $0x3a8] sm:$0xff]
      %v4209 = vld [vmem:[#allocation7 + $0x3b0] sm:$0xff]
      %v4210 = vld [vmem:[#allocation7 + $0x3b8] sm:$0xff]
      %v4211 = vld [vmem:[#allocation7 + $0x3c0] sm:$0xff]
      %v4212 = vld [vmem:[#allocation7 + $0x3c8] sm:$0xff]
      %v4213 = vld [vmem:[#allocation7 + $0x3d0] sm:$0xff]
      %v4214 = vld [vmem:[#allocation7 + $0x3d8] sm:$0xff]
      %v4215 = vld [vmem:[#allocation7 + $0x3e0] sm:$0xff]
      %v4216 = vld [vmem:[#allocation7 + $0x3e8] sm:$0xff]
      %v4217 = vld [vmem:[#allocation7 + $0x3f0] sm:$0xff]
      %v4218 = vld [vmem:[#allocation7 + $0x3f8] sm:$0xff]
      %v4219 = vld [vmem:[#allocation7 + $0x400] sm:$0xff]
      %v4220 = vld [vmem:[#allocation7 + $0x408] sm:$0xff]
      %v4221 = vld [vmem:[#allocation7 + $0x410] sm:$0xff]
      %v4222 = vld [vmem:[#allocation7 + $0x418] sm:$0xff]
      %v4223 = vld [vmem:[#allocation7 + $0x420] sm:$0xff]
      %v4224 = vld [vmem:[#allocation7 + $0x428] sm:$0xff]
      %v4225 = vld [vmem:[#allocation7 + $0x430] sm:$0xff]
      %v4226 = vld [vmem:[#allocation7 + $0x438] sm:$0xff]
      %v4227 = vld [vmem:[#allocation7 + $0x440] sm:$0xff]
      %v4228 = vld [vmem:[#allocation7 + $0x448] sm:$0xff]
      %v4229 = vld [vmem:[#allocation7 + $0x450] sm:$0xff]
      %v4230 = vld [vmem:[#allocation7 + $0x458] sm:$0xff]
      %v4231 = vld [vmem:[#allocation7 + $0x460] sm:$0xff]
      %v4232 = vld [vmem:[#allocation7 + $0x468] sm:$0xff]
      %v4233 = vld [vmem:[#allocation7 + $0x470] sm:$0xff]
      %v4234 = vld [vmem:[#allocation7 + $0x478] sm:$0xff]
      %v4235 = vld [vmem:[#allocation7 + $0x480] sm:$0xff]
      %v4236 = vld [vmem:[#allocation7 + $0x488] sm:$0xff]
      %v4237 = vld [vmem:[#allocation7 + $0x490] sm:$0xff]
      %v4238 = vld [vmem:[#allocation7 + $0x498] sm:$0xff]
      %v4239 = vld [vmem:[#allocation7 + $0x4a0] sm:$0xff]
      %v4240 = vld [vmem:[#allocation7 + $0x4a8] sm:$0xff]
      %v4241 = vld [vmem:[#allocation7 + $0x4b0] sm:$0xff]
      %v4242 = vld [vmem:[#allocation7 + $0x4b8] sm:$0xff]
      %v4243 = vld [vmem:[#allocation7 + $0x4c0] sm:$0xff]
      %v4244 = vld [vmem:[#allocation7 + $0x4c8] sm:$0xff]
      %v4245 = vld [vmem:[#allocation7 + $0x4d0] sm:$0xff]
      %v4246 = vld [vmem:[#allocation7 + $0x4d8] sm:$0xff]
      %v4247 = vld [vmem:[#allocation7 + $0x4e0] sm:$0xff]
      %v4248 = vld [vmem:[#allocation7 + $0x4e8] sm:$0xff]
      %v4249 = vld [vmem:[#allocation7 + $0x4f0] sm:$0xff]
      %v4250 = vld [vmem:[#allocation7 + $0x4f8] sm:$0xff]
      %v4251 = vld [vmem:[#allocation7 + $0x500] sm:$0xff]
      %v4252 = vld [vmem:[#allocation7 + $0x508] sm:$0xff]
      %v4253 = vld [vmem:[#allocation7 + $0x510] sm:$0xff]
      %v4254 = vld [vmem:[#allocation7 + $0x518] sm:$0xff]
      %v4255 = vld [vmem:[#allocation7 + $0x520] sm:$0xff]
      %v4256 = vld [vmem:[#allocation7 + $0x528] sm:$0xff]
      %v4257 = vld [vmem:[#allocation7 + $0x530] sm:$0xff]
      %v4258 = vld [vmem:[#allocation7 + $0x538] sm:$0xff]
      %v4259 = vld [vmem:[#allocation7 + $0x540] sm:$0xff]
      %v4260 = vld [vmem:[#allocation7 + $0x548] sm:$0xff]
      %v4261 = vld [vmem:[#allocation7 + $0x550] sm:$0xff]
      %v4262 = vld [vmem:[#allocation7 + $0x558] sm:$0xff]
      %v4263 = vld [vmem:[#allocation7 + $0x560] sm:$0xff]
      %v4264 = vld [vmem:[#allocation7 + $0x568] sm:$0xff]
      %v4265 = vld [vmem:[#allocation7 + $0x570] sm:$0xff]
      %v4266 = vld [vmem:[#allocation7 + $0x578] sm:$0xff]
      %v4267 = vld [vmem:[#allocation7 + $0x580] sm:$0xff]
      %v4268 = vld [vmem:[#allocation7 + $0x588] sm:$0xff]
      %v4269 = vld [vmem:[#allocation7 + $0x590] sm:$0xff]
      %v4270 = vld [vmem:[#allocation7 + $0x598] sm:$0xff]
      %v4271 = vld [vmem:[#allocation7 + $0x5a0] sm:$0xff]
      %v4272 = vld [vmem:[#allocation7 + $0x5a8] sm:$0xff]
      %v4273 = vld [vmem:[#allocation7 + $0x5b0] sm:$0xff]
      %v4274 = vld [vmem:[#allocation7 + $0x5b8] sm:$0xff]
      %v4275 = vld [vmem:[#allocation7 + $0x5c0] sm:$0xff]
      %v4276 = vld [vmem:[#allocation7 + $0x5c8] sm:$0xff]
      %v4277 = vld [vmem:[#allocation7 + $0x5d0] sm:$0xff]
      %v4278 = vld [vmem:[#allocation7 + $0x5d8] sm:$0xff]
      %v4279 = vld [vmem:[#allocation7 + $0x5e0] sm:$0xff]
      %v4280 = vld [vmem:[#allocation7 + $0x5e8] sm:$0xff]
      %v4281 = vld [vmem:[#allocation7 + $0x5f0] sm:$0xff]
      %v4282 = vld [vmem:[#allocation7 + $0x5f8] sm:$0xff]
      %v4283 = vld [vmem:[#allocation7 + $0x600] sm:$0xff]
      %v4284 = vld [vmem:[#allocation7 + $0x608] sm:$0xff]
      %v4285 = vld [vmem:[#allocation7 + $0x610] sm:$0xff]
      %v4286 = vld [vmem:[#allocation7 + $0x618] sm:$0xff]
      %v4287 = vld [vmem:[#allocation7 + $0x620] sm:$0xff]
      %v4288 = vld [vmem:[#allocation7 + $0x628] sm:$0xff]
      %v4289 = vld [vmem:[#allocation7 + $0x630] sm:$0xff]
      %v4290 = vld [vmem:[#allocation7 + $0x638] sm:$0xff]
      %v4291 = vld [vmem:[#allocation7 + $0x640] sm:$0xff]
      %v4292 = vld [vmem:[#allocation7 + $0x648] sm:$0xff]
      %v4293 = vld [vmem:[#allocation7 + $0x650] sm:$0xff]
      %v4294 = vld [vmem:[#allocation7 + $0x658] sm:$0xff]
      %v4295 = vld [vmem:[#allocation7 + $0x660] sm:$0xff]
      %v4296 = vld [vmem:[#allocation7 + $0x668] sm:$0xff]
      %v4297 = vld [vmem:[#allocation7 + $0x670] sm:$0xff]
      %v4298 = vld [vmem:[#allocation7 + $0x678] sm:$0xff]
      %v4299 = vld [vmem:[#allocation7 + $0x680] sm:$0xff]
      %v4300 = vld [vmem:[#allocation7 + $0x688] sm:$0xff]
      %v4301 = vld [vmem:[#allocation7 + $0x690] sm:$0xff]
      %v4302 = vld [vmem:[#allocation7 + $0x698] sm:$0xff]
      %v4303 = vld [vmem:[#allocation7 + $0x6a0] sm:$0xff]
      %v4304 = vld [vmem:[#allocation7 + $0x6a8] sm:$0xff]
      %v4305 = vld [vmem:[#allocation7 + $0x6b0] sm:$0xff]
      %v4306 = vld [vmem:[#allocation7 + $0x6b8] sm:$0xff]
      %v4307 = vld [vmem:[#allocation7 + $0x6c0] sm:$0xff]
      %v4308 = vld [vmem:[#allocation7 + $0x6c8] sm:$0xff]
      %v4309 = vld [vmem:[#allocation7 + $0x6d0] sm:$0xff]
      %v4310 = vld [vmem:[#allocation7 + $0x6d8] sm:$0xff]
      %v4311 = vld [vmem:[#allocation7 + $0x6e0] sm:$0xff]
      %v4312 = vld [vmem:[#allocation7 + $0x6e8] sm:$0xff]
      %v4313 = vld [vmem:[#allocation7 + $0x6f0] sm:$0xff]
      %v4314 = vld [vmem:[#allocation7 + $0x6f8] sm:$0xff]
      %v4315 = vld [vmem:[#allocation7 + $0x700] sm:$0xff]
      %v4316 = vld [vmem:[#allocation7 + $0x708] sm:$0xff]
      %v4317 = vld [vmem:[#allocation7 + $0x710] sm:$0xff]
      %v4318 = vld [vmem:[#allocation7 + $0x718] sm:$0xff]
      %v4319 = vld [vmem:[#allocation7 + $0x720] sm:$0xff]
      %v4320 = vld [vmem:[#allocation7 + $0x728] sm:$0xff]
      %v4321 = vld [vmem:[#allocation7 + $0x730] sm:$0xff]
      %v4322 = vld [vmem:[#allocation7 + $0x738] sm:$0xff]
      %v4323 = vld [vmem:[#allocation7 + $0x740] sm:$0xff]
      %v4324 = vld [vmem:[#allocation7 + $0x748] sm:$0xff]
      %v4325 = vld [vmem:[#allocation7 + $0x750] sm:$0xff]
      %v4326 = vld [vmem:[#allocation7 + $0x758] sm:$0xff]
      %v4327 = vld [vmem:[#allocation7 + $0x760] sm:$0xff]
      %v4328 = vld [vmem:[#allocation7 + $0x768] sm:$0xff]
      %v4329 = vld [vmem:[#allocation7 + $0x770] sm:$0xff]
      %v4330 = vld [vmem:[#allocation7 + $0x778] sm:$0xff]
      %v4331 = vld [vmem:[#allocation7 + $0x780] sm:$0xff]
      %v4332 = vld [vmem:[#allocation7 + $0x788] sm:$0xff]
      %v4333 = vld [vmem:[#allocation7 + $0x790] sm:$0xff]
      %v4334 = vld [vmem:[#allocation7 + $0x798] sm:$0xff]
      %v4335 = vld [vmem:[#allocation7 + $0x7a0] sm:$0xff]
      %v4336 = vld [vmem:[#allocation7 + $0x7a8] sm:$0xff]
      %v4337 = vld [vmem:[#allocation7 + $0x7b0] sm:$0xff]
      %v4338 = vld [vmem:[#allocation7 + $0x7b8] sm:$0xff]
      %v4339 = vld [vmem:[#allocation7 + $0x7c0] sm:$0xff]
      %v4340 = vld [vmem:[#allocation7 + $0x7c8] sm:$0xff]
      %v4341 = vld [vmem:[#allocation7 + $0x7d0] sm:$0xff]
      %v4342 = vld [vmem:[#allocation7 + $0x7d8] sm:$0xff]
      %v4343 = vld [vmem:[#allocation7 + $0x7e0] sm:$0xff]
      %v4344 = vld [vmem:[#allocation7 + $0x7e8] sm:$0xff]
      %v4345 = vld [vmem:[#allocation7 + $0x7f0] sm:$0xff]
      %v4346 = vld [vmem:[#allocation7 + $0x7f8] sm:$0xff]
      %v4347 = vld [vmem:[#allocation8] sm:$0x3]
      %v4349 = vlaneseq
      %v4350 = vshrl.u32 %v4349, 7
      %v4351 = vsub.s32 0, %v4350
      %v4352 = vrot.slane %v4347, %v4351
      %v4353 = vlaneseq
      %v4354 = vshrl.u32 %v4353, 7
      %v4355 = vsub.s32 1, %v4354
      %v4356 = vrot.slane %v4347, %v4355
      %4359 = vmatprep.subr.mxu0 %v4092
      %4360 = vmatpush1.msra.mxu0 %v4091
      %4361 = vmatprep.subr.mxu0 %v4094
      %4362 = vmatpush1.msra.mxu0 %v4093
      %4363 = vmatprep.subr.mxu0 %v4096
      %4364 = vmatpush1.msra.mxu0 %v4095
      %4365 = vmatprep.subr.mxu0 %v4098
      %4366 = vmatpush1.msra.mxu0 %v4097
      %4367 = vmatprep.subr.mxu0 %v4100
      %4368 = vmatpush1.msra.mxu0 %v4099
      %4369 = vmatprep.subr.mxu0 %v4102
      %4370 = vmatpush1.msra.mxu0 %v4101
      %4371 = vmatprep.subr.mxu0 %v4104
      %4372 = vmatpush1.msra.mxu0 %v4103
      %4373 = vmatprep.subr.mxu0 %v4106
      %4374 = vmatpush1.msra.mxu0 %v4105
      %4375 = vmatprep.subr.mxu0 %v4108
      %4376 = vmatpush1.msra.mxu0 %v4107
      %4377 = vmatprep.subr.mxu0 %v4110
      %4378 = vmatpush1.msra.mxu0 %v4109
      %4379 = vmatprep.subr.mxu0 %v4112
      %4380 = vmatpush1.msra.mxu0 %v4111
      %4381 = vmatprep.subr.mxu0 %v4114
      %4382 = vmatpush1.msra.mxu0 %v4113
      %4383 = vmatprep.subr.mxu0 %v4116
      %4384 = vmatpush1.msra.mxu0 %v4115
      %4385 = vmatprep.subr.mxu0 %v4118
      %4386 = vmatpush1.msra.mxu0 %v4117
      %4387 = vmatprep.subr.mxu0 %v4120
      %4388 = vmatpush1.msra.mxu0 %v4119
      %4389 = vmatprep.subr.mxu0 %v4122
      %4390 = vmatpush1.msra.mxu0 %v4121
      %4391 = vmatprep.subr.mxu0 %v4124
      %4392 = vmatpush1.msra.mxu0 %v4123
      %4393 = vmatprep.subr.mxu0 %v4126
      %4394 = vmatpush1.msra.mxu0 %v4125
      %4395 = vmatprep.subr.mxu0 %v4128
      %4396 = vmatpush1.msra.mxu0 %v4127
      %4397 = vmatprep.subr.mxu0 %v4130
      %4398 = vmatpush1.msra.mxu0 %v4129
      %4399 = vmatprep.subr.mxu0 %v4132
      %4400 = vmatpush1.msra.mxu0 %v4131
      %4401 = vmatprep.subr.mxu0 %v4134
      %4402 = vmatpush1.msra.mxu0 %v4133
      %4403 = vmatprep.subr.mxu0 %v4136
      %4404 = vmatpush1.msra.mxu0 %v4135
      %4405 = vmatprep.subr.mxu0 %v4138
      %4406 = vmatpush1.msra.mxu0 %v4137
      %4407 = vmatprep.subr.mxu0 %v4140
      %4408 = vmatpush1.msra.mxu0 %v4139
      %4409 = vmatprep.subr.mxu0 %v4142
      %4410 = vmatpush1.msra.mxu0 %v4141
      %4411 = vmatprep.subr.mxu0 %v4144
      %4412 = vmatpush1.msra.mxu0 %v4143
      %4413 = vmatprep.subr.mxu0 %v4146
      %4414 = vmatpush1.msra.mxu0 %v4145
      %4415 = vmatprep.subr.mxu0 %v4148
      %4416 = vmatpush1.msra.mxu0 %v4147
      %4417 = vmatprep.subr.mxu0 %v4150
      %4418 = vmatpush1.msra.mxu0 %v4149
      %4419 = vmatprep.subr.mxu0 %v4152
      %4420 = vmatpush1.msra.mxu0 %v4151
      %4421 = vmatprep.subr.mxu0 %v4154
      %4422 = vmatpush1.msra.mxu0 %v4153
      %4423 = vmatprep.mubr.f32.mxu0 %v4076
      %4424 = vmatmul.mubr.f32.gmra.mrb[0].mxu0 %v4075
      %v4425 = vpop.f32.mrb[0].mxu0
      %v4426 = vadd.f32 %v4352, %v4425
      %v4427 = vpop.f32.mrb[0].mxu0
      %v4428 = vadd.f32 %v4356, %v4427
      %4429 = vmatprep.mubr.f32.mxu0 %v4084
      %4430 = vmatmul.mubr.f32.gmra.mrb[0].mxu0 %v4083
      %v4431 = vpop.f32.mrb[0].mxu0
      %v4432 = vadd.f32 %v4352, %v4431
      %v4433 = vpop.f32.mrb[0].mxu0
      %v4434 = vadd.f32 %v4356, %v4433
      %4435 = vdwg.mxu0
      %4436 = vmatprep.subr.mxu0 %v4156
      %4437 = vmatpush1.msra.mxu0 %v4155
      %4438 = vmatprep.subr.mxu0 %v4158
      %4439 = vmatpush1.msra.mxu0 %v4157
      %4440 = vmatprep.subr.mxu0 %v4160
      %4441 = vmatpush1.msra.mxu0 %v4159
      %4442 = vmatprep.subr.mxu0 %v4162
      %4443 = vmatpush1.msra.mxu0 %v4161
      %4444 = vmatprep.subr.mxu0 %v4164
      %4445 = vmatpush1.msra.mxu0 %v4163
      %4446 = vmatprep.subr.mxu0 %v4166
      %4447 = vmatpush1.msra.mxu0 %v4165
      %4448 = vmatprep.subr.mxu0 %v4168
      %4449 = vmatpush1.msra.mxu0 %v4167
      %4450 = vmatprep.subr.mxu0 %v4170
      %4451 = vmatpush1.msra.mxu0 %v4169
      %4452 = vmatprep.subr.mxu0 %v4172
      %4453 = vmatpush1.msra.mxu0 %v4171
      %4454 = vmatprep.subr.mxu0 %v4174
      %4455 = vmatpush1.msra.mxu0 %v4173
      %4456 = vmatprep.subr.mxu0 %v4176
      %4457 = vmatpush1.msra.mxu0 %v4175
      %4458 = vmatprep.subr.mxu0 %v4178
      %4459 = vmatpush1.msra.mxu0 %v4177
      %4460 = vmatprep.subr.mxu0 %v4180
      %4461 = vmatpush1.msra.mxu0 %v4179
      %4462 = vmatprep.subr.mxu0 %v4182
      %4463 = vmatpush1.msra.mxu0 %v4181
      %4464 = vmatprep.subr.mxu0 %v4184
      %4465 = vmatpush1.msra.mxu0 %v4183
      %4466 = vmatprep.subr.mxu0 %v4186
      %4467 = vmatpush1.msra.mxu0 %v4185
      %4468 = vmatprep.subr.mxu0 %v4188
      %4469 = vmatpush1.msra.mxu0 %v4187
      %4470 = vmatprep.subr.mxu0 %v4190
      %4471 = vmatpush1.msra.mxu0 %v4189
      %4472 = vmatprep.subr.mxu0 %v4192
      %4473 = vmatpush1.msra.mxu0 %v4191
      %4474 = vmatprep.subr.mxu0 %v4194
      %4475 = vmatpush1.msra.mxu0 %v4193
      %4476 = vmatprep.subr.mxu0 %v4196
      %4477 = vmatpush1.msra.mxu0 %v4195
      %4478 = vmatprep.subr.mxu0 %v4198
      %4479 = vmatpush1.msra.mxu0 %v4197
      %4480 = vmatprep.subr.mxu0 %v4200
      %4481 = vmatpush1.msra.mxu0 %v4199
      %4482 = vmatprep.subr.mxu0 %v4202
      %4483 = vmatpush1.msra.mxu0 %v4201
      %4484 = vmatprep.subr.mxu0 %v4204
      %4485 = vmatpush1.msra.mxu0 %v4203
      %4486 = vmatprep.subr.mxu0 %v4206
      %4487 = vmatpush1.msra.mxu0 %v4205
      %4488 = vmatprep.subr.mxu0 %v4208
      %4489 = vmatpush1.msra.mxu0 %v4207
      %4490 = vmatprep.subr.mxu0 %v4210
      %4491 = vmatpush1.msra.mxu0 %v4209
      %4492 = vmatprep.subr.mxu0 %v4212
      %4493 = vmatpush1.msra.mxu0 %v4211
      %4494 = vmatprep.subr.mxu0 %v4214
      %4495 = vmatpush1.msra.mxu0 %v4213
      %4496 = vmatprep.subr.mxu0 %v4216
      %4497 = vmatpush1.msra.mxu0 %v4215
      %4498 = vmatprep.subr.mxu0 %v4218
      %4499 = vmatpush1.msra.mxu0 %v4217
      %4500 = vmatprep.mubr.f32.mxu0 %v4078
      %4501 = vmatmul.mubr.f32.gmra.mrb[0].mxu0 %v4077
      %v4502 = vpop.f32.mrb[0].mxu0
      %v4503 = vadd.f32 %v4426, %v4502
      %v4504 = vpop.f32.mrb[0].mxu0
      %v4505 = vadd.f32 %v4428, %v4504
      %4506 = vmatprep.mubr.f32.mxu0 %v4086
      %4507 = vmatmul.mubr.f32.gmra.mrb[0].mxu0 %v4085
      %v4508 = vpop.f32.mrb[0].mxu0
      %v4509 = vadd.f32 %v4432, %v4508
      %v4510 = vpop.f32.mrb[0].mxu0
      %v4511 = vadd.f32 %v4434, %v4510
      %4512 = vdwg.mxu0
      %4513 = vmatprep.subr.mxu0 %v4220
      %4514 = vmatpush1.msra.mxu0 %v4219
      %4515 = vmatprep.subr.mxu0 %v4222
      %4516 = vmatpush1.msra.mxu0 %v4221
      %4517 = vmatprep.subr.mxu0 %v4224
      %4518 = vmatpush1.msra.mxu0 %v4223
      %4519 = vmatprep.subr.mxu0 %v4226
      %4520 = vmatpush1.msra.mxu0 %v4225
      %4521 = vmatprep.subr.mxu0 %v4228
      %4522 = vmatpush1.msra.mxu0 %v4227
      %4523 = vmatprep.subr.mxu0 %v4230
      %4524 = vmatpush1.msra.mxu0 %v4229
      %4525 = vmatprep.subr.mxu0 %v4232
      %4526 = vmatpush1.msra.mxu0 %v4231
      %4527 = vmatprep.subr.mxu0 %v4234
      %4528 = vmatpush1.msra.mxu0 %v4233
      %4529 = vmatprep.subr.mxu0 %v4236
      %4530 = vmatpush1.msra.mxu0 %v4235
      %4531 = vmatprep.subr.mxu0 %v4238
      %4532 = vmatpush1.msra.mxu0 %v4237
      %4533 = vmatprep.subr.mxu0 %v4240
      %4534 = vmatpush1.msra.mxu0 %v4239
      %4535 = vmatprep.subr.mxu0 %v4242
      %4536 = vmatpush1.msra.mxu0 %v4241
      %4537 = vmatprep.subr.mxu0 %v4244
      %4538 = vmatpush1.msra.mxu0 %v4243
      %4539 = vmatprep.subr.mxu0 %v4246
      %4540 = vmatpush1.msra.mxu0 %v4245
      %4541 = vmatprep.subr.mxu0 %v4248
      %4542 = vmatpush1.msra.mxu0 %v4247
      %4543 = vmatprep.subr.mxu0 %v4250
      %4544 = vmatpush1.msra.mxu0 %v4249
      %4545 = vmatprep.subr.mxu0 %v4252
      %4546 = vmatpush1.msra.mxu0 %v4251
      %4547 = vmatprep.subr.mxu0 %v4254
      %4548 = vmatpush1.msra.mxu0 %v4253
      %4549 = vmatprep.subr.mxu0 %v4256
      %4550 = vmatpush1.msra.mxu0 %v4255
      %4551 = vmatprep.subr.mxu0 %v4258
      %4552 = vmatpush1.msra.mxu0 %v4257
      %4553 = vmatprep.subr.mxu0 %v4260
      %4554 = vmatpush1.msra.mxu0 %v4259
      %4555 = vmatprep.subr.mxu0 %v4262
      %4556 = vmatpush1.msra.mxu0 %v4261
      %4557 = vmatprep.subr.mxu0 %v4264
      %4558 = vmatpush1.msra.mxu0 %v4263
      %4559 = vmatprep.subr.mxu0 %v4266
      %4560 = vmatpush1.msra.mxu0 %v4265
      %4561 = vmatprep.subr.mxu0 %v4268
      %4562 = vmatpush1.msra.mxu0 %v4267
      %4563 = vmatprep.subr.mxu0 %v4270
      %4564 = vmatpush1.msra.mxu0 %v4269
      %4565 = vmatprep.subr.mxu0 %v4272
      %4566 = vmatpush1.msra.mxu0 %v4271
      %4567 = vmatprep.subr.mxu0 %v4274
      %4568 = vmatpush1.msra.mxu0 %v4273
      %4569 = vmatprep.subr.mxu0 %v4276
      %4570 = vmatpush1.msra.mxu0 %v4275
      %4571 = vmatprep.subr.mxu0 %v4278
      %4572 = vmatpush1.msra.mxu0 %v4277
      %4573 = vmatprep.subr.mxu0 %v4280
      %4574 = vmatpush1.msra.mxu0 %v4279
      %4575 = vmatprep.subr.mxu0 %v4282
      %4576 = vmatpush1.msra.mxu0 %v4281
      %4577 = vmatprep.mubr.f32.mxu0 %v4080
      %4578 = vmatmul.mubr.f32.gmra.mrb[0].mxu0 %v4079
      %v4579 = vpop.f32.mrb[0].mxu0
      %v4580 = vadd.f32 %v4503, %v4579
      %v4581 = vpop.f32.mrb[0].mxu0
      %v4582 = vadd.f32 %v4505, %v4581
      %4583 = vmatprep.mubr.f32.mxu0 %v4088
      %4584 = vmatmul.mubr.f32.gmra.mrb[0].mxu0 %v4087
      %v4585 = vpop.f32.mrb[0].mxu0
      %v4586 = vadd.f32 %v4509, %v4585
      %v4587 = vpop.f32.mrb[0].mxu0
      %v4588 = vadd.f32 %v4511, %v4587
      %4589 = vdwg.mxu0
      %4590 = vmatprep.subr.mxu0 %v4284
      %4591 = vmatpush1.msra.mxu0 %v4283
      %4592 = vmatprep.subr.mxu0 %v4286
      %4593 = vmatpush1.msra.mxu0 %v4285
      %4594 = vmatprep.subr.mxu0 %v4288
      %4595 = vmatpush1.msra.mxu0 %v4287
      %4596 = vmatprep.subr.mxu0 %v4290
      %4597 = vmatpush1.msra.mxu0 %v4289
      %4598 = vmatprep.subr.mxu0 %v4292
      %4599 = vmatpush1.msra.mxu0 %v4291
      %4600 = vmatprep.subr.mxu0 %v4294
      %4601 = vmatpush1.msra.mxu0 %v4293
      %4602 = vmatprep.subr.mxu0 %v4296
      %4603 = vmatpush1.msra.mxu0 %v4295
      %4604 = vmatprep.subr.mxu0 %v4298
      %4605 = vmatpush1.msra.mxu0 %v4297
      %4606 = vmatprep.subr.mxu0 %v4300
      %4607 = vmatpush1.msra.mxu0 %v4299
      %4608 = vmatprep.subr.mxu0 %v4302
      %4609 = vmatpush1.msra.mxu0 %v4301
      %4610 = vmatprep.subr.mxu0 %v4304
      %4611 = vmatpush1.msra.mxu0 %v4303
      %4612 = vmatprep.subr.mxu0 %v4306
      %4613 = vmatpush1.msra.mxu0 %v4305
      %4614 = vmatprep.subr.mxu0 %v4308
      %4615 = vmatpush1.msra.mxu0 %v4307
      %4616 = vmatprep.subr.mxu0 %v4310
      %4617 = vmatpush1.msra.mxu0 %v4309
      %4618 = vmatprep.subr.mxu0 %v4312
      %4619 = vmatpush1.msra.mxu0 %v4311
      %4620 = vmatprep.subr.mxu0 %v4314
      %4621 = vmatpush1.msra.mxu0 %v4313
      %4622 = vmatprep.subr.mxu0 %v4316
      %4623 = vmatpush1.msra.mxu0 %v4315
      %4624 = vmatprep.subr.mxu0 %v4318
      %4625 = vmatpush1.msra.mxu0 %v4317
      %4626 = vmatprep.subr.mxu0 %v4320
      %4627 = vmatpush1.msra.mxu0 %v4319
      %4628 = vmatprep.subr.mxu0 %v4322
      %4629 = vmatpush1.msra.mxu0 %v4321
      %4630 = vmatprep.subr.mxu0 %v4324
      %4631 = vmatpush1.msra.mxu0 %v4323
      %4632 = vmatprep.subr.mxu0 %v4326
      %4633 = vmatpush1.msra.mxu0 %v4325
      %4634 = vmatprep.subr.mxu0 %v4328
      %4635 = vmatpush1.msra.mxu0 %v4327
      %4636 = vmatprep.subr.mxu0 %v4330
      %4637 = vmatpush1.msra.mxu0 %v4329
      %4638 = vmatprep.subr.mxu0 %v4332
      %4639 = vmatpush1.msra.mxu0 %v4331
      %4640 = vmatprep.subr.mxu0 %v4334
      %4641 = vmatpush1.msra.mxu0 %v4333
      %4642 = vmatprep.subr.mxu0 %v4336
      %4643 = vmatpush1.msra.mxu0 %v4335
      %4644 = vmatprep.subr.mxu0 %v4338
      %4645 = vmatpush1.msra.mxu0 %v4337
      %4646 = vmatprep.subr.mxu0 %v4340
      %4647 = vmatpush1.msra.mxu0 %v4339
      %4648 = vmatprep.subr.mxu0 %v4342
      %4649 = vmatpush1.msra.mxu0 %v4341
      %4650 = vmatprep.subr.mxu0 %v4344
      %4651 = vmatpush1.msra.mxu0 %v4343
      %4652 = vmatprep.subr.mxu0 %v4346
      %4653 = vmatpush1.msra.mxu0 %v4345
      %4654 = vmatprep.mubr.f32.mxu0 %v4082
      %4655 = vmatmul.mubr.f32.gmra.mrb[0].mxu0 %v4081
      %v4656 = vpop.f32.mrb[0].mxu0
      %v4657 = vadd.f32 %v4580, %v4656
      %v4658 = vpop.f32.mrb[0].mxu0
      %v4659 = vadd.f32 %v4582, %v4658
      %4660 = vmatprep.mubr.f32.mxu0 %v4090
      %4661 = vmatmul.mubr.f32.gmra.mrb[0].mxu0 %v4089
      %v4662 = vpop.f32.mrb[0].mxu0
      %v4663 = vadd.f32 %v4586, %v4662
      %v4664 = vpop.f32.mrb[0].mxu0
      %v4665 = vadd.f32 %v4588, %v4664
      %4666 = vdwg.mxu0
      %v4667 = vmax.f32 %v4657, 0.0
      %v4668 = vmax.f32 %v4659, 0.0
      %v4669 = vmax.f32 %v4663, 0.0
      %v4670 = vmax.f32 %v4665, 0.0
      %v4671 = vld [vmem:[#allocation10] sm:$0xff]
      %v4672 = vld [vmem:[#allocation10 + $0x8] sm:$0xff]
      %v4673 = vld [vmem:[#allocation10 + $0x10] sm:$0xff]
      %v4674 = vld [vmem:[#allocation10 + $0x18] sm:$0xff]
      %v4675 = vld [vmem:[#allocation10 + $0x20] sm:$0xff]
      %v4676 = vld [vmem:[#allocation10 + $0x28] sm:$0xff]
      %v4677 = vld [vmem:[#allocation10 + $0x30] sm:$0xff]
      %v4678 = vld [vmem:[#allocation10 + $0x38] sm:$0xff]
      %v4679 = vld [vmem:[#allocation10 + $0x40] sm:$0xff]
      %v4680 = vld [vmem:[#allocation10 + $0x48] sm:$0xff]
      %v4681 = vld [vmem:[#allocation10 + $0x50] sm:$0xff]
      %v4682 = vld [vmem:[#allocation10 + $0x58] sm:$0xff]
      %v4683 = vld [vmem:[#allocation10 + $0x60] sm:$0xff]
      %v4684 = vld [vmem:[#allocation10 + $0x68] sm:$0xff]
      %v4685 = vld [vmem:[#allocation10 + $0x70] sm:$0xff]
      %v4686 = vld [vmem:[#allocation10 + $0x78] sm:$0xff]
      %v4687 = vld [vmem:[#allocation10 + $0x80] sm:$0xff]
      %v4688 = vld [vmem:[#allocation10 + $0x88] sm:$0xff]
      %v4689 = vld [vmem:[#allocation10 + $0x90] sm:$0xff]
      %v4690 = vld [vmem:[#allocation10 + $0x98] sm:$0xff]
      %v4691 = vld [vmem:[#allocation10 + $0xa0] sm:$0xff]
      %v4692 = vld [vmem:[#allocation10 + $0xa8] sm:$0xff]
      %v4693 = vld [vmem:[#allocation10 + $0xb0] sm:$0xff]
      %v4694 = vld [vmem:[#allocation10 + $0xb8] sm:$0xff]
      %v4695 = vld [vmem:[#allocation10 + $0xc0] sm:$0xff]
      %v4696 = vld [vmem:[#allocation10 + $0xc8] sm:$0xff]
      %v4697 = vld [vmem:[#allocation10 + $0xd0] sm:$0xff]
      %v4698 = vld [vmem:[#allocation10 + $0xd8] sm:$0xff]
      %v4699 = vld [vmem:[#allocation10 + $0xe0] sm:$0xff]
      %v4700 = vld [vmem:[#allocation10 + $0xe8] sm:$0xff]
      %v4701 = vld [vmem:[#allocation10 + $0xf0] sm:$0xff]
      %v4702 = vld [vmem:[#allocation10 + $0xf8] sm:$0xff]
      %v4703 = vld [vmem:[#allocation11] sm:$0x1]
      %v4705 = vlaneseq
      %v4706 = vshrl.u32 %v4705, 7
      %v4707 = vsub.s32 0, %v4706
      %v4708 = vrot.slane %v4703, %v4707
      %4710 = vmatprep.subr.mxu0 0.0
      %4711 = vmatpush1.msra.mxu0 %v4671
      %4712 = vmatprep.subr.mxu0 0.0
      %4713 = vmatpush1.msra.mxu0 %v4672
      %4714 = vmatprep.subr.mxu0 0.0
      %4715 = vmatpush1.msra.mxu0 %v4673
      %4716 = vmatprep.subr.mxu0 0.0
      %4717 = vmatpush1.msra.mxu0 %v4674
      %4718 = vmatprep.subr.mxu0 0.0
      %4719 = vmatpush1.msra.mxu0 %v4675
      %4720 = vmatprep.subr.mxu0 0.0
      %4721 = vmatpush1.msra.mxu0 %v4676
      %4722 = vmatprep.subr.mxu0 0.0
      %4723 = vmatpush1.msra.mxu0 %v4677
      %4724 = vmatprep.subr.mxu0 0.0
      %4725 = vmatpush1.msra.mxu0 %v4678
      %4726 = vmatprep.subr.mxu0 0.0
      %4727 = vmatpush1.msra.mxu0 %v4679
      %4728 = vmatprep.subr.mxu0 0.0
      %4729 = vmatpush1.msra.mxu0 %v4680
      %4730 = vmatprep.subr.mxu0 0.0
      %4731 = vmatpush1.msra.mxu0 %v4681
      %4732 = vmatprep.subr.mxu0 0.0
      %4733 = vmatpush1.msra.mxu0 %v4682
      %4734 = vmatprep.subr.mxu0 0.0
      %4735 = vmatpush1.msra.mxu0 %v4683
      %4736 = vmatprep.subr.mxu0 0.0
      %4737 = vmatpush1.msra.mxu0 %v4684
      %4738 = vmatprep.subr.mxu0 0.0
      %4739 = vmatpush1.msra.mxu0 %v4685
      %4740 = vmatprep.subr.mxu0 0.0
      %4741 = vmatpush1.msra.mxu0 %v4686
      %4742 = vmatprep.subr.mxu0 0.0
      %4743 = vmatpush1.msra.mxu0 %v4687
      %4744 = vmatprep.subr.mxu0 0.0
      %4745 = vmatpush1.msra.mxu0 %v4688
      %4746 = vmatprep.subr.mxu0 0.0
      %4747 = vmatpush1.msra.mxu0 %v4689
      %4748 = vmatprep.subr.mxu0 0.0
      %4749 = vmatpush1.msra.mxu0 %v4690
      %4750 = vmatprep.subr.mxu0 0.0
      %4751 = vmatpush1.msra.mxu0 %v4691
      %4752 = vmatprep.subr.mxu0 0.0
      %4753 = vmatpush1.msra.mxu0 %v4692
      %4754 = vmatprep.subr.mxu0 0.0
      %4755 = vmatpush1.msra.mxu0 %v4693
      %4756 = vmatprep.subr.mxu0 0.0
      %4757 = vmatpush1.msra.mxu0 %v4694
      %4758 = vmatprep.subr.mxu0 0.0
      %4759 = vmatpush1.msra.mxu0 %v4695
      %4760 = vmatprep.subr.mxu0 0.0
      %4761 = vmatpush1.msra.mxu0 %v4696
      %4762 = vmatprep.subr.mxu0 0.0
      %4763 = vmatpush1.msra.mxu0 %v4697
      %4764 = vmatprep.subr.mxu0 0.0
      %4765 = vmatpush1.msra.mxu0 %v4698
      %4766 = vmatprep.subr.mxu0 0.0
      %4767 = vmatpush1.msra.mxu0 %v4699
      %4768 = vmatprep.subr.mxu0 0.0
      %4769 = vmatpush1.msra.mxu0 %v4700
      %4770 = vmatprep.subr.mxu0 0.0
      %4771 = vmatpush1.msra.mxu0 %v4701
      %4772 = vmatprep.subr.mxu0 0.0
      %4773 = vmatpush1.msra.mxu0 %v4702
      %4774 = vmatprep.mubr.f32.mxu0 %v4668
      %4775 = vmatmul.mubr.f32.gmra.mrb[0].mxu0 %v4667
      %v4776 = vpop.f32.mrb[0].mxu0
      %v4777 = vadd.f32 %v4708, %v4776
      %v4778 = vpop.f32.mrb[0].mxu0
      %4779 = vmatprep.mubr.f32.mxu0 %v4670
      %4780 = vmatmul.mubr.f32.gmra.mrb[0].mxu0 %v4669
      %v4781 = vpop.f32.mrb[0].mxu0
      %v4782 = vadd.f32 %v4708, %v4781
      %v4783 = vpop.f32.mrb[0].mxu0
      %4784 = vdwg.mxu0
      %v4785 = vmax.f32 %v4777, 0.0
      %v4786 = vmax.f32 %v4782, 0.0
      %v4787 = vld [vmem:[#allocation13] sm:$0xff]
      %v4788 = vld [vmem:[#allocation13 + $0x8] sm:$0xff]
      %v4789 = vld [vmem:[#allocation13 + $0x10] sm:$0xff]
      %v4790 = vld [vmem:[#allocation13 + $0x18] sm:$0xff]
      %v4791 = vld [vmem:[#allocation13 + $0x20] sm:$0xff]
      %v4792 = vld [vmem:[#allocation13 + $0x28] sm:$0xff]
      %v4793 = vld [vmem:[#allocation13 + $0x30] sm:$0xff]
      %v4794 = vld [vmem:[#allocation13 + $0x38] sm:$0xff]
      %v4795 = vld [vmem:[#allocation13 + $0x40] sm:$0xff]
      %v4796 = vld [vmem:[#allocation13 + $0x48] sm:$0xff]
      %v4797 = vld [vmem:[#allocation13 + $0x50] sm:$0xff]
      %v4798 = vld [vmem:[#allocation13 + $0x58] sm:$0xff]
      %v4799 = vld [vmem:[#allocation13 + $0x60] sm:$0xff]
      %v4800 = vld [vmem:[#allocation13 + $0x68] sm:$0xff]
      %v4801 = vld [vmem:[#allocation13 + $0x70] sm:$0xff]
      %v4802 = vld [vmem:[#allocation13 + $0x78] sm:$0xff]
      %v4803 = vld [vmem:[#allocation14] sm:$0x1]
      %v4805 = vlaneseq
      %v4806 = vshrl.u32 %v4805, 7
      %v4807 = vsub.s32 0, %v4806
      %v4808 = vrot.slane %v4803, %v4807
      %4810 = vmatprep.subr.mxu0 0.0
      %4811 = vmatpush1.msra.mxu0 %v4787
      %4812 = vmatprep.subr.mxu0 0.0
      %4813 = vmatpush1.msra.mxu0 %v4788
      %4814 = vmatprep.subr.mxu0 0.0
      %4815 = vmatpush1.msra.mxu0 %v4789
      %4816 = vmatprep.subr.mxu0 0.0
      %4817 = vmatpush1.msra.mxu0 %v4790
      %4818 = vmatprep.subr.mxu0 0.0
      %4819 = vmatpush1.msra.mxu0 %v4791
      %4820 = vmatprep.subr.mxu0 0.0
      %4821 = vmatpush1.msra.mxu0 %v4792
      %4822 = vmatprep.subr.mxu0 0.0
      %4823 = vmatpush1.msra.mxu0 %v4793
      %4824 = vmatprep.subr.mxu0 0.0
      %4825 = vmatpush1.msra.mxu0 %v4794
      %4826 = vmatprep.subr.mxu0 0.0
      %4827 = vmatpush1.msra.mxu0 %v4795
      %4828 = vmatprep.subr.mxu0 0.0
      %4829 = vmatpush1.msra.mxu0 %v4796
      %4830 = vmatprep.subr.mxu0 0.0
      %4831 = vmatpush1.msra.mxu0 %v4797
      %4832 = vmatprep.subr.mxu0 0.0
      %4833 = vmatpush1.msra.mxu0 %v4798
      %4834 = vmatprep.subr.mxu0 0.0
      %4835 = vmatpush1.msra.mxu0 %v4799
      %4836 = vmatprep.subr.mxu0 0.0
      %4837 = vmatpush1.msra.mxu0 %v4800
      %4838 = vmatprep.subr.mxu0 0.0
      %4839 = vmatpush1.msra.mxu0 %v4801
      %4840 = vmatprep.subr.mxu0 0.0
      %4841 = vmatpush1.msra.mxu0 %v4802
      %4842 = vmatprep.subr.mxu0 0.0
      %4843 = vmatpush1.msra.mxu0 0.0
      %4844 = vmatprep.subr.mxu0 0.0
      %4845 = vmatpush1.msra.mxu0 0.0
      %4846 = vmatprep.subr.mxu0 0.0
      %4847 = vmatpush1.msra.mxu0 0.0
      %4848 = vmatprep.subr.mxu0 0.0
      %4849 = vmatpush1.msra.mxu0 0.0
      %4850 = vmatprep.subr.mxu0 0.0
      %4851 = vmatpush1.msra.mxu0 0.0
      %4852 = vmatprep.subr.mxu0 0.0
      %4853 = vmatpush1.msra.mxu0 0.0
      %4854 = vmatprep.subr.mxu0 0.0
      %4855 = vmatpush1.msra.mxu0 0.0
      %4856 = vmatprep.subr.mxu0 0.0
      %4857 = vmatpush1.msra.mxu0 0.0
      %4858 = vmatprep.subr.mxu0 0.0
      %4859 = vmatpush1.msra.mxu0 0.0
      %4860 = vmatprep.subr.mxu0 0.0
      %4861 = vmatpush1.msra.mxu0 0.0
      %4862 = vmatprep.subr.mxu0 0.0
      %4863 = vmatpush1.msra.mxu0 0.0
      %4864 = vmatprep.subr.mxu0 0.0
      %4865 = vmatpush1.msra.mxu0 0.0
      %4866 = vmatprep.subr.mxu0 0.0
      %4867 = vmatpush1.msra.mxu0 0.0
      %4868 = vmatprep.subr.mxu0 0.0
      %4869 = vmatpush1.msra.mxu0 0.0
      %4870 = vmatprep.subr.mxu0 0.0
      %4871 = vmatpush1.msra.mxu0 0.0
      %4872 = vmatprep.subr.mxu0 0.0
      %4873 = vmatpush1.msra.mxu0 0.0
      %4874 = vmatprep.mubr.f32.mxu0 0.0
      %4875 = vmatmul.mubr.f32.gmra.mrb[0].mxu0 %v4785
      %v4876 = vpop.f32.mrb[0].mxu0
      %v4877 = vadd.f32 %v4808, %v4876
      %v4878 = vpop.f32.mrb[0].mxu0
      %4879 = vmatprep.mubr.f32.mxu0 0.0
      %4880 = vmatmul.mubr.f32.gmra.mrb[0].mxu0 %v4786
      %v4881 = vpop.f32.mrb[0].mxu0
      %v4882 = vadd.f32 %v4808, %v4881
      %v4883 = vpop.f32.mrb[0].mxu0
      %4884 = vdwg.mxu0
      %4885 = vst [vmem:[%s9] sm:$0xff] %v4877
      %4886 = vst [vmem:[%s9 + $0x8] sm:$0xff] %v4882
    $region81: #{light_angles_head.1} parent=1 // pred_fallthru
      _
    // Predicated region
    $region82: #{light_angles_head.1} parent=1 // pred_check
      _
    $region83: #{light_angles_head.1} parent=1 // pred_check_branch
      %4888 = sbr.rel (0) target = $region85
    $region84: #{light_angles_head.1} parent=1 // pred_region
      _
    $region85: #{light_angles_head.1} parent=1 // pred_fallthru
      _
    // Predicated region
    $region86: #{light_angles_head.1} parent=1 // pred_check
      _
    $region87: #{light_angles_head.1} parent=1 // pred_check_branch
      %4890 = sbr.rel (0) target = $region89
    $region88: #{light_angles_head.1} parent=1 // pred_region
      _
    $region89: #{light_angles_head.1} parent=1 // pred_fallthru
      _
    %4891 = vsyncpa [#allocation4], 1
    %4892 = vsyncpa [#allocation6], 1
    %4893 = vsyncpa [#allocation9], 1
    %4894 = vsyncpa [#allocation12], 1
    %4895 = vsyncpa [#allocation15], 1

</llo_original>
